<compile_context>
chip_gen: v7x
topology: tpu7x:2x2x1
jax: 0.10.0
libtpu: 0.0.40
codegen_flags: <defaults>
</compile_context>

<pallas_src>
import functools

import jax
import jax.numpy as jnp
from jax import lax
from jax.experimental import pallas as pl
from jax.experimental.pallas import tpu as pltpu


def _round_up(a, m):
    return ((a + m - 1) // m) * m


def _mlp_kernel(x_ref, w1_ref, b1_ref, w2_ref, b2_ref, o_ref, *,
                batch, tile_b, need_mask):
    # fc1 on the MXU: x[TB, E] . w1[H, E] contracted over E -> [TB, H], f32 accumulation.
    h = lax.dot_general(
        x_ref[...], w1_ref[...],
        dimension_numbers=(((1,), (1,)), ((), ())),
        preferred_element_type=jnp.float32,
        precision=lax.Precision.HIGHEST,
    )
    h = jnp.maximum(h + b1_ref[...], 0.0)             # bias + ReLU on the VPU

    # fc2 (output width 1): VPU multiply + XLU lane reduction (no degenerate MXU matmul).
    y = jnp.sum(h * w2_ref[...], axis=-1)             # [TB]
    y = jax.nn.sigmoid(y + b2_ref[0])                 # scalar bias from SMEM; exp on EUP
    y = y[None, :]                                    # lane-dense (1, TB)

    if need_mask:
        # Last block over-reads past B: zero the discarded tail lanes so no
        # garbage-driven NaN/inf is ever stored.
        base = pl.program_id(0) * tile_b
        lane = lax.broadcasted_iota(jnp.int32, (1, tile_b), 1)
        y = jnp.where(base + lane < batch, y, 0.0)

    o_ref[...] = y.astype(o_ref.dtype)                # unmasked, lane-dense vst


def mlp_class_forward(x, w1, b1, w2, b2, *, max_tile_b=4096):
    """MLPClass forward.

    x : [B, E] float32
    w1: [H, E] (PyTorch fc1.weight layout, H = E // 2), b1: [H]
    w2: [1, H] (PyTorch fc2.weight layout),             b2: [1]
    returns [B, 1] float32 = sigmoid(relu(x @ w1.T + b1) @ w2.T + b2)
    """
    B, E = x.shape
    H = w1.shape[0]

    # Big tile to amortize per-step pipeline overhead; keep >= 2 steps when possible
    # so the "parallel" grid axis can use both v7x TensorCores.
    tile_b = min(max_tile_b, _round_up(max(pl.cdiv(B, 2), 1), 256))
    n_tiles = pl.cdiv(B, tile_b)
    need_mask = (B % tile_b) != 0

    b1_k = b1[None, :]   # [1, H] bias row (no-copy reshape)

    kernel = functools.partial(_mlp_kernel, batch=B, tile_b=tile_b,
                               need_mask=need_mask)

    out = pl.pallas_call(
        kernel,
        out_shape=jax.ShapeDtypeStruct((1, n_tiles * tile_b), x.dtype),
        grid_spec=pl.GridSpec(
            grid=(n_tiles,),
            in_specs=[
                pl.BlockSpec((tile_b, E), lambda i: (i, 0)),        # x: streamed/pipelined
                pl.BlockSpec((H, E), lambda i: (0, 0)),             # w1: VMEM-resident
                pl.BlockSpec((1, H), lambda i: (0, 0)),             # b1: VMEM-resident
                pl.BlockSpec((1, H), lambda i: (0, 0)),             # w2 row: VMEM-resident
                pl.BlockSpec(memory_space=pltpu.MemorySpace.SMEM),  # b2: scalar in SMEM
            ],
            out_specs=pl.BlockSpec((1, tile_b), lambda i: (0, i)),  # lane-dense slab
        ),
        compiler_params=pltpu.CompilerParams(
            dimension_semantics=("parallel",),
        ),
    )(x, w1, b1_k, w2, b2)

    return out[0, :B][:, None]


def init_linear_params(key, in_features, out_features, dtype=jnp.float32):
    """PyTorch nn.Linear default init: U(-1/sqrt(in), 1/sqrt(in)); weight is [out, in]."""
    kw, kb = jax.random.split(key)
    bound = 1.0 / (in_features ** 0.5)
    w = jax.random.uniform(kw, (out_features, in_features), dtype,
                           minval=-bound, maxval=bound)
    b = jax.random.uniform(kb, (out_features,), dtype,
                           minval=-bound, maxval=bound)
    return w, b


def mlp_ref(x, w1, b1, w2, b2):
    """Plain-JAX reference (PyTorch-layout params)."""
    h = jnp.maximum(jnp.dot(x, w1.T, precision=lax.Precision.HIGHEST) + b1, 0.0)
    y = jnp.dot(h, w2.T, precision=lax.Precision.HIGHEST) + b2
    return jax.nn.sigmoid(y)


if __name__ == "__main__":
    key = jax.random.PRNGKey(0)
    k_x, k_x2, k_x3, k_fc1, k_fc2 = jax.random.split(key, 5)

    emb_dim = 64
    hidden = emb_dim // 2

    w1, b1 = init_linear_params(k_fc1, emb_dim, hidden)   # [32, 64], [32]
    w2, b2 = init_linear_params(k_fc2, hidden, 1)         # [1, 32], [1]

    # Case 1: batch divisible by the derived tile -> 2-step parallel grid, no mask.
    batch = 512
    x = jax.random.normal(k_x, (batch, emb_dim), jnp.float32)
    out = mlp_class_forward(x, w1, b1, w2, b2)
    jax.block_until_ready(out)
    ref = mlp_ref(x, w1, b1, w2, b2)
    assert out.shape == (batch, 1)
    assert jnp.allclose(out, ref, atol=2e-5, rtol=2e-5)
    assert bool(jnp.all(jnp.isfinite(out)))

    # Case 2: ragged batch -> single partial block, in-kernel tail masking.
    batch2 = 200
    x2 = jax.random.normal(k_x2, (batch2, emb_dim), jnp.float32)
    out2 = mlp_class_forward(x2, w1, b1, w2, b2)
    jax.block_until_ready(out2)
    ref2 = mlp_ref(x2, w1, b1, w2, b2)
    assert out2.shape == (batch2, 1)
    assert jnp.allclose(out2, ref2, atol=2e-5, rtol=2e-5)
    assert bool(jnp.all(jnp.isfinite(out2)))

    # Case 3: larger ragged batch -> tile_b capped at 4096, multi-step grid + mask.
    batch3 = 8300
    x3 = jax.random.normal(k_x3, (batch3, emb_dim), jnp.float32)
    out3 = mlp_class_forward(x3, w1, b1, w2, b2)
    jax.block_until_ready(out3)
    ref3 = mlp_ref(x3, w1, b1, w2, b2)
    assert out3.shape == (batch3, 1)
    assert jnp.allclose(out3, ref3, atol=2e-5, rtol=2e-5)
    assert bool(jnp.all(jnp.isfinite(out3)))

    print("KERNEL_OK")
</pallas_src>

<mosaic_0001>
module attributes {stable_mosaic.version = 11 : i64} {
  func.func @_mlp_kernel(%arg0: i32, %arg1: memref<256x64xf32, #tpu.memory_space<vmem>>, %arg2: memref<32x64xf32, #tpu.memory_space<vmem>>, %arg3: memref<1x32xf32, #tpu.memory_space<vmem>>, %arg4: memref<1x32xf32, #tpu.memory_space<vmem>>, %arg5: memref<1xf32, #tpu.memory_space<smem>>, %arg6: memref<1x256xf32, #tpu.memory_space<vmem>>) attributes {dimension_semantics = [#tpu.dimension_semantics<parallel>], iteration_bounds = array<i64: 2>, scalar_prefetch = 0 : i64, scratch_operands = 0 : i64, tpu.core_type = #tpu.core_type<tc>, window_params = [{transform_indices = @transform_0, window_bounds = array<i64: 256, 64>}, {pipeline_mode = #tpu.pipeline_mode<synchronous>, transform_indices = @transform_1, window_bounds = array<i64: 32, 64>}, {pipeline_mode = #tpu.pipeline_mode<synchronous>, transform_indices = @transform_2, window_bounds = array<i64: 1, 32>}, {pipeline_mode = #tpu.pipeline_mode<synchronous>, transform_indices = @transform_3, window_bounds = array<i64: 1, 32>}, {transform_indices = @transform_4, window_bounds = array<i64: 1>}, {transform_indices = @transform_5, window_bounds = array<i64: 1, 256>}]} {
    %c0 = arith.constant 0 : index
    %c0_0 = arith.constant 0 : index
    %0 = vector.load %arg1[%c0, %c0_0] : memref<256x64xf32, #tpu.memory_space<vmem>>, vector<256x64xf32>
    %c0_1 = arith.constant 0 : index
    %c0_2 = arith.constant 0 : index
    %1 = vector.load %arg2[%c0_1, %c0_2] : memref<32x64xf32, #tpu.memory_space<vmem>>, vector<32x64xf32>
    %cst = arith.constant dense<0.000000e+00> : vector<256x32xf32>
    %2 = tpu.matmul %0, %1, %cst {dimension_numbers = #tpu.dot_dimension_numbers<[1], [1], [0], [0], [0, 0, 1, 0], [], []>, precision = #tpu.contract_precision<fp32>} : vector<256x64xf32>, vector<32x64xf32>, vector<256x32xf32> -> vector<256x32xf32>
    %c0_3 = arith.constant 0 : index
    %c0_4 = arith.constant 0 : index
    %3 = vector.load %arg3[%c0_3, %c0_4] : memref<1x32xf32, #tpu.memory_space<vmem>>, vector<1x32xf32>
    %4 = vector.broadcast %3 : vector<1x32xf32> to vector<256x32xf32>
    %5 = arith.addf %2, %4 : vector<256x32xf32>
    %cst_5 = arith.constant 0.000000e+00 : f32
    %6 = vector.broadcast %cst_5 : f32 to vector<256x32xf32>
    %7 = arith.maximumf %5, %6 : vector<256x32xf32>
    %c0_6 = arith.constant 0 : index
    %c0_7 = arith.constant 0 : index
    %8 = vector.load %arg4[%c0_6, %c0_7] : memref<1x32xf32, #tpu.memory_space<vmem>>, vector<1x32xf32>
    %9 = vector.broadcast %8 : vector<1x32xf32> to vector<256x32xf32>
    %10 = arith.mulf %7, %9 : vector<256x32xf32>
    %cst_8 = arith.constant dense<0.000000e+00> : vector<256xf32>
    %11 = vector.multi_reduction <add>, %10, %cst_8 [1] : vector<256x32xf32> to vector<256xf32>
    %c0_9 = arith.constant 0 : index
    %12 = memref.load %arg5[%c0_9] : memref<1xf32, #tpu.memory_space<smem>>
    %13 = vector.broadcast %12 : f32 to vector<256xf32>
    %14 = arith.addf %11, %13 : vector<256xf32>
    %15 = arith.negf %14 : vector<256xf32>
    %16 = math.exp %15 : vector<256xf32>
    %cst_10 = arith.constant 1.000000e+00 : f32
    %17 = vector.broadcast %cst_10 : f32 to vector<256xf32>
    %18 = arith.addf %17, %16 : vector<256xf32>
    %19 = arith.divf %17, %18 : vector<256xf32>
    %20 = vector.shape_cast %19 : vector<256xf32> to vector<1x256xf32>
    %c0_11 = arith.constant 0 : index
    %c0_12 = arith.constant 0 : index
    %21 = vector.load %arg6[%c0_11, %c0_12] : memref<1x256xf32, #tpu.memory_space<vmem>>, vector<1x256xf32>
    tpu.vector_store %arg6[%c0_11, %c0_12], %20 {strides = array<i32>} : memref<1x256xf32, #tpu.memory_space<vmem>>, vector<1x256xf32>,
    return
  }
  func.func @transform_0(%arg0: i32) -> (i32, i32) {
    %c0_i32 = arith.constant 0 : i32
    %c0_i32_0 = arith.constant 0 : i32
    return %arg0, %c0_i32 : i32, i32
  }
  func.func @transform_1(%arg0: i32) -> (i32, i32) {
    %c0_i32 = arith.constant 0 : i32
    %c0_i32_0 = arith.constant 0 : i32
    %c0_i32_1 = arith.constant 0 : i32
    return %c0_i32, %c0_i32_0 : i32, i32
  }
  func.func @transform_2(%arg0: i32) -> (i32, i32) {
    %c0_i32 = arith.constant 0 : i32
    %c0_i32_0 = arith.constant 0 : i32
    %c0_i32_1 = arith.constant 0 : i32
    return %c0_i32, %c0_i32_0 : i32, i32
  }
  func.func @transform_3(%arg0: i32) -> (i32, i32) {
    %c0_i32 = arith.constant 0 : i32
    %c0_i32_0 = arith.constant 0 : i32
    %c0_i32_1 = arith.constant 0 : i32
    return %c0_i32, %c0_i32_0 : i32, i32
  }
  func.func @transform_4(%arg0: i32) -> i32 {
    %c0_i32 = arith.constant 0 : i32
    %c0_i32_0 = arith.constant 0 : i32
    return %c0_i32 : i32
  }
  func.func @transform_5(%arg0: i32) -> (i32, i32) {
    %c0_i32 = arith.constant 0 : i32
    %c0_i32_0 = arith.constant 0 : i32
    return %c0_i32, %arg0 : i32, i32
  }
}

</mosaic_0001>

<llo_original>
// kernel: tpu_custom_call.1
$region0: #{tpu_custom_call.1}
  #allocation0 [shape = 'u32[]', space=smem, size = 0x4, offset = 0x4, fixed_abs, tag = 'smem constant byte address 0x4 - core index']
  #allocation1 [shape = 'u32[144,128]{1,0:T(1,128)}', space=vmem, size = 0x12000, scoped, tag = 'internal scratch']
  #allocation2 [shape = 'f32[1]{0:T(128)S(6)}', space=smem, size = 0x200, scoped, tag = 'scoped memory for tpu_custom_call.1']
  %s0 = inlined_call_operand.vmem [shape: f32[512,64], index: 0, kind: input, shape index: {}]
  %s1 = inlined_call_operand.vmem [shape: f32[32,64], index: 1, kind: input, shape index: {}]
  %s2 = inlined_call_operand.vmem [shape: f32[1,32], index: 2, kind: input, shape index: {}]
  %s3 = inlined_call_operand.vmem [shape: f32[1,32], index: 3, kind: input, shape index: {}]
  %s4 = inlined_call_operand.<no memory space> [shape: f32[1], index: 4, kind: input, shape index: {}]
  %s5 = inlined_call_operand.hbm [shape: f32[1,512], index: 5, kind: output, shape index: {}]
  %s6 = sld [smem:[#allocation0]]
  $region53: #{tpu_custom_call.1} parent=0
    _
  %s8 = ssub.s32 1, %s6
  %s9 = scalar_select 0, %s8, %s6
  %10 = sst [smem:[#allocation2]] %s4
  $region1: #{tpu_custom_call.1} parent=0
    #allocation3 [shape = 'u8[2048]{0}', space=vmem, size = 0x800, scoped, tag = 'output window, operand 0']
    #allocation4 [shape = 's32[2]{0}', space=sflag, size = 0x8, scoped, tag = 'scoped memory for tpu_custom_call.1']
    %11 = vsyncpa [#allocation4], 0
    %s12 = scalar_lea.sflag [#allocation4], 1
    %13 = vsyncpa %s12, 0
    loop: start=0, step=1, limit=4
    $region2: #{tpu_custom_call.1} parent=1 // loop_pre_header
      _
    $region3: #{tpu_custom_call.1} parent=1 // loop_header
      %s15 = sphi 0, %s19
      %p16 = scmp.ge.s32.totalorder %s15, 4
      %s25 = sphi 0, %s27
      %s28 = sphi 0, %s25
      %s29 = sphi 0, %s28
      %s45 = sphi 0, %s29
      %s49 = sphi 0, %s49
      %s51 = sphi 0, %s49
      %s52 = sphi 0, %s51
      %s66 = sphi 0, %s52
      %s70 = sphi 0, %s70
      %s72 = sphi 0, %s70
      %s73 = sphi 0, %s72
      %s87 = sphi 0, %s73
      %s91 = sphi 0, %s91
      %s93 = sphi 0, %s91
      %s94 = sphi 0, %s93
      %s108 = sphi 0, %s94
      %s112 = sphi 0, %s112
      %s114 = sphi 0, %s112
      %s115 = sphi 0, %s114
      %s129 = sphi 0, %s115
      %s135 = sphi 0, %s137
      %s138 = sphi 0, %s135
      %s139 = sphi 0, %s138
      %s155 = sphi 0, %s139
    $region4: #{tpu_custom_call.1} parent=1 // loop_header_branch
      %18 = sbr.rel (%p16) target = $region8
    $region5: #{tpu_custom_call.1} parent=1 // loop_body
      %s20 = ssub.s32 %s15, 1
      %s21 = ssub.s32 %s15, 2
      %s22 = sadd.s32 %s15, 1
      %s23 = ssub.s32 %s15, %s22
      %p24 = scmp.eq.s32.totalorder %s23, 0
      %s26 = sadd.s32 %s25, 1
      %s27 = scalar_select %p24, %s25, %s26
      %p30 = pneg %p24
      %p31 = scmp.eq.s32.totalorder %s15, 1
      %p32 = por %p30, %p31
      %p33 = scmp.ne.s32.totalorder %s25, %s28
      %p34 = scmp.eq.s32.totalorder %s15, 0
      %p35 = por %p33, %p34
      %p36 = scmp.ne.s32.totalorder %s25, %s28
      %p37 = scmp.eq.s32.totalorder %s20, 1
      %p38 = por %p36, %p37
      %p39 = scmp.ne.s32.totalorder %s28, %s29
      %p40 = scmp.eq.s32.totalorder %s20, 0
      %p41 = por %p39, %p40
      %p42 = scmp.ne.s32.totalorder %s28, %s29
      %p43 = scmp.eq.s32.totalorder %s21, 1
      %p44 = por %p42, %p43
      %p46 = scmp.ne.s32.totalorder %s29, %s45
      %p47 = scmp.eq.s32.totalorder %s21, 0
      %p48 = por %p46, %p47
      %s50 = sadd.s32 %s49, 1
      %p53 = scmp.eq.s32.totalorder %s15, 1
      %p54 = scmp.ne.s32.totalorder %s49, %s51
      %p55 = scmp.eq.s32.totalorder %s15, 0
      %p56 = por %p54, %p55
      %p57 = scmp.ne.s32.totalorder %s49, %s51
      %p58 = scmp.eq.s32.totalorder %s20, 1
      %p59 = por %p57, %p58
      %p60 = scmp.ne.s32.totalorder %s51, %s52
      %p61 = scmp.eq.s32.totalorder %s20, 0
      %p62 = por %p60, %p61
      %p63 = scmp.ne.s32.totalorder %s51, %s52
      %p64 = scmp.eq.s32.totalorder %s21, 1
      %p65 = por %p63, %p64
      %p67 = scmp.ne.s32.totalorder %s52, %s66
      %p68 = scmp.eq.s32.totalorder %s21, 0
      %p69 = por %p67, %p68
      %s71 = sadd.s32 %s70, 1
      %p74 = scmp.eq.s32.totalorder %s15, 1
      %p75 = scmp.ne.s32.totalorder %s70, %s72
      %p76 = scmp.eq.s32.totalorder %s15, 0
      %p77 = por %p75, %p76
      %p78 = scmp.ne.s32.totalorder %s70, %s72
      %p79 = scmp.eq.s32.totalorder %s20, 1
      %p80 = por %p78, %p79
      %p81 = scmp.ne.s32.totalorder %s72, %s73
      %p82 = scmp.eq.s32.totalorder %s20, 0
      %p83 = por %p81, %p82
      %p84 = scmp.ne.s32.totalorder %s72, %s73
      %p85 = scmp.eq.s32.totalorder %s21, 1
      %p86 = por %p84, %p85
      %p88 = scmp.ne.s32.totalorder %s73, %s87
      %p89 = scmp.eq.s32.totalorder %s21, 0
      %p90 = por %p88, %p89
      %s92 = sadd.s32 %s91, 1
      %p95 = scmp.eq.s32.totalorder %s15, 1
      %p96 = scmp.ne.s32.totalorder %s91, %s93
      %p97 = scmp.eq.s32.totalorder %s15, 0
      %p98 = por %p96, %p97
      %p99 = scmp.ne.s32.totalorder %s91, %s93
      %p100 = scmp.eq.s32.totalorder %s20, 1
      %p101 = por %p99, %p100
      %p102 = scmp.ne.s32.totalorder %s93, %s94
      %p103 = scmp.eq.s32.totalorder %s20, 0
      %p104 = por %p102, %p103
      %p105 = scmp.ne.s32.totalorder %s93, %s94
      %p106 = scmp.eq.s32.totalorder %s21, 1
      %p107 = por %p105, %p106
      %p109 = scmp.ne.s32.totalorder %s94, %s108
      %p110 = scmp.eq.s32.totalorder %s21, 0
      %p111 = por %p109, %p110
      %s113 = sadd.s32 %s112, 1
      %p116 = scmp.eq.s32.totalorder %s15, 1
      %p117 = scmp.ne.s32.totalorder %s112, %s114
      %p118 = scmp.eq.s32.totalorder %s15, 0
      %p119 = por %p117, %p118
      %p120 = scmp.ne.s32.totalorder %s112, %s114
      %p121 = scmp.eq.s32.totalorder %s20, 1
      %p122 = por %p120, %p121
      %p123 = scmp.ne.s32.totalorder %s114, %s115
      %p124 = scmp.eq.s32.totalorder %s20, 0
      %p125 = por %p123, %p124
      %p126 = scmp.ne.s32.totalorder %s114, %s115
      %p127 = scmp.eq.s32.totalorder %s21, 1
      %p128 = por %p126, %p127
      %p130 = scmp.ne.s32.totalorder %s115, %s129
      %p131 = scmp.eq.s32.totalorder %s21, 0
      %p132 = por %p130, %p131
      %s133 = ssub.s32 %s15, %s22
      %p134 = scmp.eq.s32.totalorder %s133, 0
      %s136 = sadd.s32 %s135, 1
      %s137 = scalar_select %p134, %s135, %s136
      %p140 = pneg %p134
      %p141 = scmp.eq.s32.totalorder %s15, 1
      %p142 = por %p140, %p141
      %p143 = scmp.ne.s32.totalorder %s135, %s138
      %p144 = scmp.eq.s32.totalorder %s15, 0
      %p145 = por %p143, %p144
      %p146 = scmp.ne.s32.totalorder %s135, %s138
      %p147 = scmp.eq.s32.totalorder %s20, 1
      %p148 = por %p146, %p147
      %p149 = scmp.ne.s32.totalorder %s138, %s139
      %p150 = scmp.eq.s32.totalorder %s20, 0
      %p151 = por %p149, %p150
      %p152 = scmp.ne.s32.totalorder %s138, %s139
      %p153 = scmp.eq.s32.totalorder %s21, 1
      %p154 = por %p152, %p153
      %p156 = scmp.ne.s32.totalorder %s139, %s155
      %p157 = scmp.eq.s32.totalorder %s21, 0
      %p158 = por %p156, %p157
      %p159 = scmp.le.s32.totalorder 1, %s15
      %p160 = scmp.lt.s32.totalorder %s15, 3
      %p161 = pnand %p159, %p160
      %p162 = pneg %p161
      // Predicated region
      $region9: #{tpu_custom_call.1} parent=5 // pred_check
        _
      $region10: #{tpu_custom_call.1} parent=5 // pred_check_branch
        %164 = sbr.rel (%p161) target = $region12
      $region11: #{tpu_custom_call.1} parent=5 // pred_region
        %s165 = ssub.s32 %s15, 1
        // Predicated region
        $region13: #{tpu_custom_call.1} parent=11 // pred_check
          %p166 = pneg %p62
        $region14: #{tpu_custom_call.1} parent=11 // pred_check_branch
          %168 = sbr.rel (%p166) target = $region16
        $region15: #{tpu_custom_call.1} parent=11 // pred_region
          _
        $region16: #{tpu_custom_call.1} parent=11 // pred_fallthru
          _
        // Predicated region
        $region17: #{tpu_custom_call.1} parent=11 // pred_check
          %p169 = pneg %p83
        $region18: #{tpu_custom_call.1} parent=11 // pred_check_branch
          %171 = sbr.rel (%p169) target = $region20
        $region19: #{tpu_custom_call.1} parent=11 // pred_region
          _
        $region20: #{tpu_custom_call.1} parent=11 // pred_fallthru
          _
        // Predicated region
        $region21: #{tpu_custom_call.1} parent=11 // pred_check
          %p172 = pneg %p104
        $region22: #{tpu_custom_call.1} parent=11 // pred_check_branch
          %174 = sbr.rel (%p172) target = $region24
        $region23: #{tpu_custom_call.1} parent=11 // pred_region
          _
        $region24: #{tpu_custom_call.1} parent=11 // pred_fallthru
          _
        // Predicated region
        $region25: #{tpu_custom_call.1} parent=11 // pred_check
          %p175 = pneg %p125
        $region26: #{tpu_custom_call.1} parent=11 // pred_check_branch
          %177 = sbr.rel (%p175) target = $region28
        $region27: #{tpu_custom_call.1} parent=11 // pred_region
          _
        $region28: #{tpu_custom_call.1} parent=11 // pred_fallthru
          _
      $region12: #{tpu_custom_call.1} parent=5 // pred_fallthru
        _
      %p178 = scmp.lt.s32.totalorder %s15, 2
      // Predicated region
      $region29: #{tpu_custom_call.1} parent=5 // pred_check
        %p179 = pneg %p178
      $region30: #{tpu_custom_call.1} parent=5 // pred_check_branch
        %181 = sbr.rel (%p179) target = $region32
      $region31: #{tpu_custom_call.1} parent=5 // pred_region
        // Predicated region
        $region33: #{tpu_custom_call.1} parent=31 // pred_check
          %p182 = pneg %p35
        $region34: #{tpu_custom_call.1} parent=31 // pred_check_branch
          %184 = sbr.rel (%p182) target = $region36
        $region35: #{tpu_custom_call.1} parent=31 // pred_region
          %s185 = smul.u32 32, %s15
          %p186 = scmp.lt.s32.totalorder %s185, 63
          %s187 = scalar_select %p186, %s185, 63
          %s188 = smul.addr %s187, 8
          %s189 = scalar_lea.vmem %s0, %s188
          %s190 = smul.u32 32, %s15
        $region36: #{tpu_custom_call.1} parent=31 // pred_fallthru
          _
      $region32: #{tpu_custom_call.1} parent=5 // pred_fallthru
        _
      %p191 = scmp.le.s32.totalorder 1, %s15
      %p192 = scmp.lt.s32.totalorder %s15, 3
      %p193 = pnand %p191, %p192
      %p194 = pneg %p193
      // Predicated region
      $region37: #{tpu_custom_call.1} parent=5 // pred_check
        _
      $region38: #{tpu_custom_call.1} parent=5 // pred_check_branch
        %196 = sbr.rel (%p193) target = $region40
      $region39: #{tpu_custom_call.1} parent=5 // pred_region
        %s197 = ssub.s32 %s15, 1
        %s198 = smul.u32 32, %s20
        %p199 = scmp.lt.s32.totalorder %s198, 63
        %s200 = scalar_select %p199, %s198, 63
        %s201 = smul.addr %s200, 8
        %s202 = scalar_lea.vmem %s0, %s201
        %p203 = pneg %p41
        %p204 = pneg %p38
        %p205 = pneg %p62
        %p206 = pneg %p59
        %p207 = pneg %p83
        %p208 = pneg %p80
        %p209 = pneg %p104
        %p210 = pneg %p101
        %p211 = pneg %p125
        %p212 = pneg %p122
        %p213 = pneg %p151
        %p214 = pneg %p148
        %s215 = sand.u32 %s138, 1
        %s216 = scalar_lea.sflag [#allocation4], %s215
        %s217 = sand.u32 %s138, 1
        %s218 = smul.addr %s217, 2
        %s219 = scalar_lea.vmem [#allocation3], %s218
        %s220 = smul.u32 32, %s20
        %p221 = scmp.lt.s32.totalorder %s220, 63
        %s222 = scalar_select %p221, %s220, 63
        %s223 = smul.addr %s222, 8
        %s224 = scalar_lea.vmem %s0, %s223
        %s225 = smul.u32 32, %s20
        %s226 = smul.u32 2, %s20
        %v227 = vld [vmem:[%s224] sm:$0xff]
        %v228 = vld [vmem:[%s224 + $0x8] sm:$0xff]
        %v229 = vld [vmem:[%s224 + $0x10] sm:$0xff]
        %v230 = vld [vmem:[%s224 + $0x18] sm:$0xff]
        %v231 = vld [vmem:[%s224 + $0x20] sm:$0xff]
        %v232 = vld [vmem:[%s224 + $0x28] sm:$0xff]
        %v233 = vld [vmem:[%s224 + $0x30] sm:$0xff]
        %v234 = vld [vmem:[%s224 + $0x38] sm:$0xff]
        %v235 = vld [vmem:[%s224 + $0x40] sm:$0xff]
        %v236 = vld [vmem:[%s224 + $0x48] sm:$0xff]
        %v237 = vld [vmem:[%s224 + $0x50] sm:$0xff]
        %v238 = vld [vmem:[%s224 + $0x58] sm:$0xff]
        %v239 = vld [vmem:[%s224 + $0x60] sm:$0xff]
        %v240 = vld [vmem:[%s224 + $0x68] sm:$0xff]
        %v241 = vld [vmem:[%s224 + $0x70] sm:$0xff]
        %v242 = vld [vmem:[%s224 + $0x78] sm:$0xff]
        %v243 = vld [vmem:[%s224 + $0x80] sm:$0xff]
        %v244 = vld [vmem:[%s224 + $0x88] sm:$0xff]
        %v245 = vld [vmem:[%s224 + $0x90] sm:$0xff]
        %v246 = vld [vmem:[%s224 + $0x98] sm:$0xff]
        %v247 = vld [vmem:[%s224 + $0xa0] sm:$0xff]
        %v248 = vld [vmem:[%s224 + $0xa8] sm:$0xff]
        %v249 = vld [vmem:[%s224 + $0xb0] sm:$0xff]
        %v250 = vld [vmem:[%s224 + $0xb8] sm:$0xff]
        %v251 = vld [vmem:[%s224 + $0xc0] sm:$0xff]
        %v252 = vld [vmem:[%s224 + $0xc8] sm:$0xff]
        %v253 = vld [vmem:[%s224 + $0xd0] sm:$0xff]
        %v254 = vld [vmem:[%s224 + $0xd8] sm:$0xff]
        %v255 = vld [vmem:[%s224 + $0xe0] sm:$0xff]
        %v256 = vld [vmem:[%s224 + $0xe8] sm:$0xff]
        %v257 = vld [vmem:[%s224 + $0xf0] sm:$0xff]
        %v258 = vld [vmem:[%s224 + $0xf8] sm:$0xff]
        %v259 = vld [vmem:[%s1] sm:$0xff]
        %v260 = vld [vmem:[%s1 + $0x8] sm:$0xff]
        %v261 = vld [vmem:[%s1 + $0x10] sm:$0xff]
        %v262 = vld [vmem:[%s1 + $0x18] sm:$0xff]
        %v263 = vld [vmem:[%s2] sm:$0x1]
        %v265 = vlaneseq
        %v266 = vshrl.u32 %v265, 7
        %v267 = vsub.s32 0, %v266
        %v268 = vrot.slane %v263, %v267
        %vm270 = vcmask 523264
        %v272 = vsel %vm270, %v227, 0
        %v275 = vsel %vm270, %v228, 0
        %v278 = vsel %vm270, %v229, 0
        %v281 = vsel %vm270, %v230, 0
        %v284 = vsel %vm270, %v231, 0
        %v287 = vsel %vm270, %v232, 0
        %v290 = vsel %vm270, %v233, 0
        %v293 = vsel %vm270, %v234, 0
        %v296 = vsel %vm270, %v235, 0
        %v299 = vsel %vm270, %v236, 0
        %v302 = vsel %vm270, %v237, 0
        %v305 = vsel %vm270, %v238, 0
        %v308 = vsel %vm270, %v239, 0
        %v311 = vsel %vm270, %v240, 0
        %v314 = vsel %vm270, %v241, 0
        %v317 = vsel %vm270, %v242, 0
        %v320 = vsel %vm270, %v243, 0
        %v323 = vsel %vm270, %v244, 0
        %v326 = vsel %vm270, %v245, 0
        %v329 = vsel %vm270, %v246, 0
        %v332 = vsel %vm270, %v247, 0
        %v335 = vsel %vm270, %v248, 0
        %v338 = vsel %vm270, %v249, 0
        %v341 = vsel %vm270, %v250, 0
        %v344 = vsel %vm270, %v251, 0
        %v347 = vsel %vm270, %v252, 0
        %v350 = vsel %vm270, %v253, 0
        %v353 = vsel %vm270, %v254, 0
        %v356 = vsel %vm270, %v255, 0
        %v359 = vsel %vm270, %v256, 0
        %v362 = vsel %vm270, %v257, 0
        %v365 = vsel %vm270, %v258, 0
        %v368 = vsel %vm270, %v259, 0
        %v371 = vsel %vm270, %v260, 0
        %v374 = vsel %vm270, %v261, 0
        %v377 = vsel %vm270, %v262, 0
        %379 = vmatprep.subr.mxu0 0.0
        %v380 = vand.u32 %v368, 4294901760
        %381 = vmatpush1.xpose.msra.mxu0 %v380
        %382 = vmatprep.subr.mxu0 0.0
        %v383 = vand.u32 %v371, 4294901760
        %384 = vmatpush1.xpose.msra.mxu0 %v383
        %385 = vmatprep.subr.mxu0 0.0
        %v386 = vand.u32 %v374, 4294901760
        %387 = vmatpush1.xpose.msra.mxu0 %v386
        %388 = vmatprep.subr.mxu0 0.0
        %v389 = vand.u32 %v377, 4294901760
        %390 = vmatpush1.xpose.msra.mxu0 %v389
        %391 = vmatprep.subr.mxu0 0.0
        %392 = vmatpush1.xpose.msra.mxu0 0.0
        %393 = vmatprep.subr.mxu0 0.0
        %394 = vmatpush1.xpose.msra.mxu0 0.0
        %395 = vmatprep.subr.mxu0 0.0
        %396 = vmatpush1.xpose.msra.mxu0 0.0
        %397 = vmatprep.subr.mxu0 0.0
        %398 = vmatpush1.xpose.msra.mxu0 0.0
        %399 = vmatprep.subr.mxu0 0.0
        %400 = vmatpush1.xpose.msra.mxu0 0.0
        %401 = vmatprep.subr.mxu0 0.0
        %402 = vmatpush1.xpose.msra.mxu0 0.0
        %403 = vmatprep.subr.mxu0 0.0
        %404 = vmatpush1.xpose.msra.mxu0 0.0
        %405 = vmatprep.subr.mxu0 0.0
        %406 = vmatpush1.xpose.msra.mxu0 0.0
        %407 = vmatprep.subr.mxu0 0.0
        %408 = vmatpush1.xpose.msra.mxu0 0.0
        %409 = vmatprep.subr.mxu0 0.0
        %410 = vmatpush1.xpose.msra.mxu0 0.0
        %411 = vmatprep.subr.mxu0 0.0
        %412 = vmatpush1.xpose.msra.mxu0 0.0
        %413 = vmatprep.subr.mxu0 0.0
        %414 = vmatpush1.xpose.msra.mxu0 0.0
        %415 = vmatprep.subr.mxu0 0.0
        %416 = vmatpush1.xpose.msra.mxu0 0.0
        %417 = vmatprep.subr.mxu0 0.0
        %418 = vmatpush1.xpose.msra.mxu0 0.0
        %419 = vmatprep.subr.mxu0 0.0
        %420 = vmatpush1.xpose.msra.mxu0 0.0
        %421 = vmatprep.subr.mxu0 0.0
        %422 = vmatpush1.xpose.msra.mxu0 0.0
        %423 = vmatprep.subr.mxu0 0.0
        %424 = vmatpush1.xpose.msra.mxu0 0.0
        %425 = vmatprep.subr.mxu0 0.0
        %426 = vmatpush1.xpose.msra.mxu0 0.0
        %427 = vmatprep.subr.mxu0 0.0
        %428 = vmatpush1.xpose.msra.mxu0 0.0
        %429 = vmatprep.subr.mxu0 0.0
        %430 = vmatpush1.xpose.msra.mxu0 0.0
        %431 = vmatprep.subr.mxu0 0.0
        %432 = vmatpush1.xpose.msra.mxu0 0.0
        %433 = vmatprep.subr.mxu0 0.0
        %434 = vmatpush1.xpose.msra.mxu0 0.0
        %435 = vmatprep.subr.mxu0 0.0
        %436 = vmatpush1.xpose.msra.mxu0 0.0
        %437 = vmatprep.subr.mxu0 0.0
        %438 = vmatpush1.xpose.msra.mxu0 0.0
        %439 = vmatprep.subr.mxu0 0.0
        %440 = vmatpush1.xpose.msra.mxu0 0.0
        %441 = vmatprep.subr.mxu0 0.0
        %442 = vmatpush1.xpose.msra.mxu0 0.0
        %443 = vmatprep.subr.mxu0 0.0
        %444 = vmatpush1.xpose.msra.mxu0 0.0
        %445 = vmatprep.subr.mxu0 0.0
        %446 = vmatpush1.xpose.msra.mxu0 0.0
        %447 = vmatprep.mubr.f32.mxu0 0.0
        %v448 = vand.u32 %v272, 4294901760
        %v449 = vsub.f32 %v272, %v448
        %v450 = vand.u32 %v449, 4294901760
        %v451 = vsub.f32 %v449, %v450
        %v452 = vand.u32 %v451, 4294901760
        %453 = vmatmul.mubr.f32.gmra.mrb[0].mxu0 %v452
        %v454 = vpop.f32.mrb[0].mxu0
        %v455 = vadd.f32 %v268, %v454
        %v456 = vpop.f32.mrb[0].mxu0
        %457 = vmatprep.mubr.f32.mxu0 0.0
        %v458 = vand.u32 %v275, 4294901760
        %v459 = vsub.f32 %v275, %v458
        %v460 = vand.u32 %v459, 4294901760
        %v461 = vsub.f32 %v459, %v460
        %v462 = vand.u32 %v461, 4294901760
        %463 = vmatmul.mubr.f32.gmra.mrb[0].mxu0 %v462
        %v464 = vpop.f32.mrb[0].mxu0
        %v465 = vadd.f32 %v268, %v464
        %v466 = vpop.f32.mrb[0].mxu0
        %467 = vmatprep.mubr.f32.mxu0 0.0
        %v468 = vand.u32 %v278, 4294901760
        %v469 = vsub.f32 %v278, %v468
        %v470 = vand.u32 %v469, 4294901760
        %v471 = vsub.f32 %v469, %v470
        %v472 = vand.u32 %v471, 4294901760
        %473 = vmatmul.mubr.f32.gmra.mrb[0].mxu0 %v472
        %v474 = vpop.f32.mrb[0].mxu0
        %v475 = vadd.f32 %v268, %v474
        %v476 = vpop.f32.mrb[0].mxu0
        %477 = vmatprep.mubr.f32.mxu0 0.0
        %v478 = vand.u32 %v281, 4294901760
        %v479 = vsub.f32 %v281, %v478
        %v480 = vand.u32 %v479, 4294901760
        %v481 = vsub.f32 %v479, %v480
        %v482 = vand.u32 %v481, 4294901760
        %483 = vmatmul.mubr.f32.gmra.mrb[0].mxu0 %v482
        %v484 = vpop.f32.mrb[0].mxu0
        %v485 = vadd.f32 %v268, %v484
        %v486 = vpop.f32.mrb[0].mxu0
        %487 = vmatprep.mubr.f32.mxu0 0.0
        %v488 = vand.u32 %v284, 4294901760
        %v489 = vsub.f32 %v284, %v488
        %v490 = vand.u32 %v489, 4294901760
        %v491 = vsub.f32 %v489, %v490
        %v492 = vand.u32 %v491, 4294901760
        %493 = vmatmul.mubr.f32.gmra.mrb[0].mxu0 %v492
        %v494 = vpop.f32.mrb[0].mxu0
        %v495 = vadd.f32 %v268, %v494
        %v496 = vpop.f32.mrb[0].mxu0
        %497 = vmatprep.mubr.f32.mxu0 0.0
        %v498 = vand.u32 %v287, 4294901760
        %v499 = vsub.f32 %v287, %v498
        %v500 = vand.u32 %v499, 4294901760
        %v501 = vsub.f32 %v499, %v500
        %v502 = vand.u32 %v501, 4294901760
        %503 = vmatmul.mubr.f32.gmra.mrb[0].mxu0 %v502
        %v504 = vpop.f32.mrb[0].mxu0
        %v505 = vadd.f32 %v268, %v504
        %v506 = vpop.f32.mrb[0].mxu0
        %507 = vmatprep.mubr.f32.mxu0 0.0
        %v508 = vand.u32 %v290, 4294901760
        %v509 = vsub.f32 %v290, %v508
        %v510 = vand.u32 %v509, 4294901760
        %v511 = vsub.f32 %v509, %v510
        %v512 = vand.u32 %v511, 4294901760
        %513 = vmatmul.mubr.f32.gmra.mrb[0].mxu0 %v512
        %v514 = vpop.f32.mrb[0].mxu0
        %v515 = vadd.f32 %v268, %v514
        %v516 = vpop.f32.mrb[0].mxu0
        %517 = vmatprep.mubr.f32.mxu0 0.0
        %v518 = vand.u32 %v293, 4294901760
        %v519 = vsub.f32 %v293, %v518
        %v520 = vand.u32 %v519, 4294901760
        %v521 = vsub.f32 %v519, %v520
        %v522 = vand.u32 %v521, 4294901760
        %523 = vmatmul.mubr.f32.gmra.mrb[0].mxu0 %v522
        %v524 = vpop.f32.mrb[0].mxu0
        %v525 = vadd.f32 %v268, %v524
        %v526 = vpop.f32.mrb[0].mxu0
        %527 = vmatprep.mubr.f32.mxu0 0.0
        %v528 = vand.u32 %v296, 4294901760
        %v529 = vsub.f32 %v296, %v528
        %v530 = vand.u32 %v529, 4294901760
        %v531 = vsub.f32 %v529, %v530
        %v532 = vand.u32 %v531, 4294901760
        %533 = vmatmul.mubr.f32.gmra.mrb[0].mxu0 %v532
        %v534 = vpop.f32.mrb[0].mxu0
        %v535 = vadd.f32 %v268, %v534
        %v536 = vpop.f32.mrb[0].mxu0
        %537 = vmatprep.mubr.f32.mxu0 0.0
        %v538 = vand.u32 %v299, 4294901760
        %v539 = vsub.f32 %v299, %v538
        %v540 = vand.u32 %v539, 4294901760
        %v541 = vsub.f32 %v539, %v540
        %v542 = vand.u32 %v541, 4294901760
        %543 = vmatmul.mubr.f32.gmra.mrb[0].mxu0 %v542
        %v544 = vpop.f32.mrb[0].mxu0
        %v545 = vadd.f32 %v268, %v544
        %v546 = vpop.f32.mrb[0].mxu0
        %547 = vmatprep.mubr.f32.mxu0 0.0
        %v548 = vand.u32 %v302, 4294901760
        %v549 = vsub.f32 %v302, %v548
        %v550 = vand.u32 %v549, 4294901760
        %v551 = vsub.f32 %v549, %v550
        %v552 = vand.u32 %v551, 4294901760
        %553 = vmatmul.mubr.f32.gmra.mrb[0].mxu0 %v552
        %v554 = vpop.f32.mrb[0].mxu0
        %v555 = vadd.f32 %v268, %v554
        %v556 = vpop.f32.mrb[0].mxu0
        %557 = vmatprep.mubr.f32.mxu0 0.0
        %v558 = vand.u32 %v305, 4294901760
        %v559 = vsub.f32 %v305, %v558
        %v560 = vand.u32 %v559, 4294901760
        %v561 = vsub.f32 %v559, %v560
        %v562 = vand.u32 %v561, 4294901760
        %563 = vmatmul.mubr.f32.gmra.mrb[0].mxu0 %v562
        %v564 = vpop.f32.mrb[0].mxu0
        %v565 = vadd.f32 %v268, %v564
        %v566 = vpop.f32.mrb[0].mxu0
        %567 = vmatprep.mubr.f32.mxu0 0.0
        %v568 = vand.u32 %v308, 4294901760
        %v569 = vsub.f32 %v308, %v568
        %v570 = vand.u32 %v569, 4294901760
        %v571 = vsub.f32 %v569, %v570
        %v572 = vand.u32 %v571, 4294901760
        %573 = vmatmul.mubr.f32.gmra.mrb[0].mxu0 %v572
        %v574 = vpop.f32.mrb[0].mxu0
        %v575 = vadd.f32 %v268, %v574
        %v576 = vpop.f32.mrb[0].mxu0
        %577 = vmatprep.mubr.f32.mxu0 0.0
        %v578 = vand.u32 %v311, 4294901760
        %v579 = vsub.f32 %v311, %v578
        %v580 = vand.u32 %v579, 4294901760
        %v581 = vsub.f32 %v579, %v580
        %v582 = vand.u32 %v581, 4294901760
        %583 = vmatmul.mubr.f32.gmra.mrb[0].mxu0 %v582
        %v584 = vpop.f32.mrb[0].mxu0
        %v585 = vadd.f32 %v268, %v584
        %v586 = vpop.f32.mrb[0].mxu0
        %587 = vmatprep.mubr.f32.mxu0 0.0
        %v588 = vand.u32 %v314, 4294901760
        %v589 = vsub.f32 %v314, %v588
        %v590 = vand.u32 %v589, 4294901760
        %v591 = vsub.f32 %v589, %v590
        %v592 = vand.u32 %v591, 4294901760
        %593 = vmatmul.mubr.f32.gmra.mrb[0].mxu0 %v592
        %v594 = vpop.f32.mrb[0].mxu0
        %v595 = vadd.f32 %v268, %v594
        %v596 = vpop.f32.mrb[0].mxu0
        %597 = vmatprep.mubr.f32.mxu0 0.0
        %v598 = vand.u32 %v317, 4294901760
        %v599 = vsub.f32 %v317, %v598
        %v600 = vand.u32 %v599, 4294901760
        %v601 = vsub.f32 %v599, %v600
        %v602 = vand.u32 %v601, 4294901760
        %603 = vmatmul.mubr.f32.gmra.mrb[0].mxu0 %v602
        %v604 = vpop.f32.mrb[0].mxu0
        %v605 = vadd.f32 %v268, %v604
        %v606 = vpop.f32.mrb[0].mxu0
        %607 = vmatprep.mubr.f32.mxu0 0.0
        %v608 = vand.u32 %v320, 4294901760
        %v609 = vsub.f32 %v320, %v608
        %v610 = vand.u32 %v609, 4294901760
        %v611 = vsub.f32 %v609, %v610
        %v612 = vand.u32 %v611, 4294901760
        %613 = vmatmul.mubr.f32.gmra.mrb[0].mxu0 %v612
        %v614 = vpop.f32.mrb[0].mxu0
        %v615 = vadd.f32 %v268, %v614
        %v616 = vpop.f32.mrb[0].mxu0
        %617 = vmatprep.mubr.f32.mxu0 0.0
        %v618 = vand.u32 %v323, 4294901760
        %v619 = vsub.f32 %v323, %v618
        %v620 = vand.u32 %v619, 4294901760
        %v621 = vsub.f32 %v619, %v620
        %v622 = vand.u32 %v621, 4294901760
        %623 = vmatmul.mubr.f32.gmra.mrb[0].mxu0 %v622
        %v624 = vpop.f32.mrb[0].mxu0
        %v625 = vadd.f32 %v268, %v624
        %v626 = vpop.f32.mrb[0].mxu0
        %627 = vmatprep.mubr.f32.mxu0 0.0
        %v628 = vand.u32 %v326, 4294901760
        %v629 = vsub.f32 %v326, %v628
        %v630 = vand.u32 %v629, 4294901760
        %v631 = vsub.f32 %v629, %v630
        %v632 = vand.u32 %v631, 4294901760
        %633 = vmatmul.mubr.f32.gmra.mrb[0].mxu0 %v632
        %v634 = vpop.f32.mrb[0].mxu0
        %v635 = vadd.f32 %v268, %v634
        %v636 = vpop.f32.mrb[0].mxu0
        %637 = vmatprep.mubr.f32.mxu0 0.0
        %v638 = vand.u32 %v329, 4294901760
        %v639 = vsub.f32 %v329, %v638
        %v640 = vand.u32 %v639, 4294901760
        %v641 = vsub.f32 %v639, %v640
        %v642 = vand.u32 %v641, 4294901760
        %643 = vmatmul.mubr.f32.gmra.mrb[0].mxu0 %v642
        %v644 = vpop.f32.mrb[0].mxu0
        %v645 = vadd.f32 %v268, %v644
        %v646 = vpop.f32.mrb[0].mxu0
        %647 = vmatprep.mubr.f32.mxu0 0.0
        %v648 = vand.u32 %v332, 4294901760
        %v649 = vsub.f32 %v332, %v648
        %v650 = vand.u32 %v649, 4294901760
        %v651 = vsub.f32 %v649, %v650
        %v652 = vand.u32 %v651, 4294901760
        %653 = vmatmul.mubr.f32.gmra.mrb[0].mxu0 %v652
        %v654 = vpop.f32.mrb[0].mxu0
        %v655 = vadd.f32 %v268, %v654
        %v656 = vpop.f32.mrb[0].mxu0
        %657 = vmatprep.mubr.f32.mxu0 0.0
        %v658 = vand.u32 %v335, 4294901760
        %v659 = vsub.f32 %v335, %v658
        %v660 = vand.u32 %v659, 4294901760
        %v661 = vsub.f32 %v659, %v660
        %v662 = vand.u32 %v661, 4294901760
        %663 = vmatmul.mubr.f32.gmra.mrb[0].mxu0 %v662
        %v664 = vpop.f32.mrb[0].mxu0
        %v665 = vadd.f32 %v268, %v664
        %v666 = vpop.f32.mrb[0].mxu0
        %667 = vmatprep.mubr.f32.mxu0 0.0
        %v668 = vand.u32 %v338, 4294901760
        %v669 = vsub.f32 %v338, %v668
        %v670 = vand.u32 %v669, 4294901760
        %v671 = vsub.f32 %v669, %v670
        %v672 = vand.u32 %v671, 4294901760
        %673 = vmatmul.mubr.f32.gmra.mrb[0].mxu0 %v672
        %v674 = vpop.f32.mrb[0].mxu0
        %v675 = vadd.f32 %v268, %v674
        %v676 = vpop.f32.mrb[0].mxu0
        %677 = vmatprep.mubr.f32.mxu0 0.0
        %v678 = vand.u32 %v341, 4294901760
        %v679 = vsub.f32 %v341, %v678
        %v680 = vand.u32 %v679, 4294901760
        %v681 = vsub.f32 %v679, %v680
        %v682 = vand.u32 %v681, 4294901760
        %683 = vmatmul.mubr.f32.gmra.mrb[0].mxu0 %v682
        %v684 = vpop.f32.mrb[0].mxu0
        %v685 = vadd.f32 %v268, %v684
        %v686 = vpop.f32.mrb[0].mxu0
        %687 = vmatprep.mubr.f32.mxu0 0.0
        %v688 = vand.u32 %v344, 4294901760
        %v689 = vsub.f32 %v344, %v688
        %v690 = vand.u32 %v689, 4294901760
        %v691 = vsub.f32 %v689, %v690
        %v692 = vand.u32 %v691, 4294901760
        %693 = vmatmul.mubr.f32.gmra.mrb[0].mxu0 %v692
        %v694 = vpop.f32.mrb[0].mxu0
        %v695 = vadd.f32 %v268, %v694
        %v696 = vpop.f32.mrb[0].mxu0
        %697 = vmatprep.mubr.f32.mxu0 0.0
        %v698 = vand.u32 %v347, 4294901760
        %v699 = vsub.f32 %v347, %v698
        %v700 = vand.u32 %v699, 4294901760
        %v701 = vsub.f32 %v699, %v700
        %v702 = vand.u32 %v701, 4294901760
        %703 = vmatmul.mubr.f32.gmra.mrb[0].mxu0 %v702
        %v704 = vpop.f32.mrb[0].mxu0
        %v705 = vadd.f32 %v268, %v704
        %v706 = vpop.f32.mrb[0].mxu0
        %707 = vmatprep.mubr.f32.mxu0 0.0
        %v708 = vand.u32 %v350, 4294901760
        %v709 = vsub.f32 %v350, %v708
        %v710 = vand.u32 %v709, 4294901760
        %v711 = vsub.f32 %v709, %v710
        %v712 = vand.u32 %v711, 4294901760
        %713 = vmatmul.mubr.f32.gmra.mrb[0].mxu0 %v712
        %v714 = vpop.f32.mrb[0].mxu0
        %v715 = vadd.f32 %v268, %v714
        %v716 = vpop.f32.mrb[0].mxu0
        %717 = vmatprep.mubr.f32.mxu0 0.0
        %v718 = vand.u32 %v353, 4294901760
        %v719 = vsub.f32 %v353, %v718
        %v720 = vand.u32 %v719, 4294901760
        %v721 = vsub.f32 %v719, %v720
        %v722 = vand.u32 %v721, 4294901760
        %723 = vmatmul.mubr.f32.gmra.mrb[0].mxu0 %v722
        %v724 = vpop.f32.mrb[0].mxu0
        %v725 = vadd.f32 %v268, %v724
        %v726 = vpop.f32.mrb[0].mxu0
        %727 = vmatprep.mubr.f32.mxu0 0.0
        %v728 = vand.u32 %v356, 4294901760
        %v729 = vsub.f32 %v356, %v728
        %v730 = vand.u32 %v729, 4294901760
        %v731 = vsub.f32 %v729, %v730
        %v732 = vand.u32 %v731, 4294901760
        %733 = vmatmul.mubr.f32.gmra.mrb[0].mxu0 %v732
        %v734 = vpop.f32.mrb[0].mxu0
        %v735 = vadd.f32 %v268, %v734
        %v736 = vpop.f32.mrb[0].mxu0
        %737 = vmatprep.mubr.f32.mxu0 0.0
        %v738 = vand.u32 %v359, 4294901760
        %v739 = vsub.f32 %v359, %v738
        %v740 = vand.u32 %v739, 4294901760
        %v741 = vsub.f32 %v739, %v740
        %v742 = vand.u32 %v741, 4294901760
        %743 = vmatmul.mubr.f32.gmra.mrb[0].mxu0 %v742
        %v744 = vpop.f32.mrb[0].mxu0
        %v745 = vadd.f32 %v268, %v744
        %v746 = vpop.f32.mrb[0].mxu0
        %747 = vmatprep.mubr.f32.mxu0 0.0
        %v748 = vand.u32 %v362, 4294901760
        %v749 = vsub.f32 %v362, %v748
        %v750 = vand.u32 %v749, 4294901760
        %v751 = vsub.f32 %v749, %v750
        %v752 = vand.u32 %v751, 4294901760
        %753 = vmatmul.mubr.f32.gmra.mrb[0].mxu0 %v752
        %v754 = vpop.f32.mrb[0].mxu0
        %v755 = vadd.f32 %v268, %v754
        %v756 = vpop.f32.mrb[0].mxu0
        %757 = vmatprep.mubr.f32.mxu0 0.0
        %v758 = vand.u32 %v365, 4294901760
        %v759 = vsub.f32 %v365, %v758
        %v760 = vand.u32 %v759, 4294901760
        %v761 = vsub.f32 %v759, %v760
        %v762 = vand.u32 %v761, 4294901760
        %763 = vmatmul.mubr.f32.gmra.mrb[0].mxu0 %v762
        %v764 = vpop.f32.mrb[0].mxu0
        %v765 = vadd.f32 %v268, %v764
        %v766 = vpop.f32.mrb[0].mxu0
        %767 = vdwg.mxu0
        %768 = vmatprep.subr.mxu0 0.0
        %v769 = vand.u32 %v368, 4294901760
        %v770 = vsub.f32 %v368, %v769
        %v771 = vand.u32 %v770, 4294901760
        %v772 = vsub.f32 %v770, %v771
        %v773 = vand.u32 %v772, 4294901760
        %774 = vmatpush1.xpose.msra.mxu0 %v773
        %775 = vmatprep.subr.mxu0 0.0
        %v776 = vand.u32 %v371, 4294901760
        %v777 = vsub.f32 %v371, %v776
        %v778 = vand.u32 %v777, 4294901760
        %v779 = vsub.f32 %v777, %v778
        %v780 = vand.u32 %v779, 4294901760
        %781 = vmatpush1.xpose.msra.mxu0 %v780
        %782 = vmatprep.subr.mxu0 0.0
        %v783 = vand.u32 %v374, 4294901760
        %v784 = vsub.f32 %v374, %v783
        %v785 = vand.u32 %v784, 4294901760
        %v786 = vsub.f32 %v784, %v785
        %v787 = vand.u32 %v786, 4294901760
        %788 = vmatpush1.xpose.msra.mxu0 %v787
        %789 = vmatprep.subr.mxu0 0.0
        %v790 = vand.u32 %v377, 4294901760
        %v791 = vsub.f32 %v377, %v790
        %v792 = vand.u32 %v791, 4294901760
        %v793 = vsub.f32 %v791, %v792
        %v794 = vand.u32 %v793, 4294901760
        %795 = vmatpush1.xpose.msra.mxu0 %v794
        %796 = vmatprep.subr.mxu0 0.0
        %797 = vmatpush1.xpose.msra.mxu0 0.0
        %798 = vmatprep.subr.mxu0 0.0
        %799 = vmatpush1.xpose.msra.mxu0 0.0
        %800 = vmatprep.subr.mxu0 0.0
        %801 = vmatpush1.xpose.msra.mxu0 0.0
        %802 = vmatprep.subr.mxu0 0.0
        %803 = vmatpush1.xpose.msra.mxu0 0.0
        %804 = vmatprep.subr.mxu0 0.0
        %805 = vmatpush1.xpose.msra.mxu0 0.0
        %806 = vmatprep.subr.mxu0 0.0
        %807 = vmatpush1.xpose.msra.mxu0 0.0
        %808 = vmatprep.subr.mxu0 0.0
        %809 = vmatpush1.xpose.msra.mxu0 0.0
        %810 = vmatprep.subr.mxu0 0.0
        %811 = vmatpush1.xpose.msra.mxu0 0.0
        %812 = vmatprep.subr.mxu0 0.0
        %813 = vmatpush1.xpose.msra.mxu0 0.0
        %814 = vmatprep.subr.mxu0 0.0
        %815 = vmatpush1.xpose.msra.mxu0 0.0
        %816 = vmatprep.subr.mxu0 0.0
        %817 = vmatpush1.xpose.msra.mxu0 0.0
        %818 = vmatprep.subr.mxu0 0.0
        %819 = vmatpush1.xpose.msra.mxu0 0.0
        %820 = vmatprep.subr.mxu0 0.0
        %821 = vmatpush1.xpose.msra.mxu0 0.0
        %822 = vmatprep.subr.mxu0 0.0
        %823 = vmatpush1.xpose.msra.mxu0 0.0
        %824 = vmatprep.subr.mxu0 0.0
        %825 = vmatpush1.xpose.msra.mxu0 0.0
        %826 = vmatprep.subr.mxu0 0.0
        %827 = vmatpush1.xpose.msra.mxu0 0.0
        %828 = vmatprep.subr.mxu0 0.0
        %829 = vmatpush1.xpose.msra.mxu0 0.0
        %830 = vmatprep.subr.mxu0 0.0
        %831 = vmatpush1.xpose.msra.mxu0 0.0
        %832 = vmatprep.subr.mxu0 0.0
        %833 = vmatpush1.xpose.msra.mxu0 0.0
        %834 = vmatprep.subr.mxu0 0.0
        %835 = vmatpush1.xpose.msra.mxu0 0.0
        %836 = vmatprep.subr.mxu0 0.0
        %837 = vmatpush1.xpose.msra.mxu0 0.0
        %838 = vmatprep.subr.mxu0 0.0
        %839 = vmatpush1.xpose.msra.mxu0 0.0
        %840 = vmatprep.subr.mxu0 0.0
        %841 = vmatpush1.xpose.msra.mxu0 0.0
        %842 = vmatprep.subr.mxu0 0.0
        %843 = vmatpush1.xpose.msra.mxu0 0.0
        %844 = vmatprep.subr.mxu0 0.0
        %845 = vmatpush1.xpose.msra.mxu0 0.0
        %846 = vmatprep.subr.mxu0 0.0
        %847 = vmatpush1.xpose.msra.mxu0 0.0
        %848 = vmatprep.subr.mxu0 0.0
        %849 = vmatpush1.xpose.msra.mxu0 0.0
        %850 = vmatprep.subr.mxu0 0.0
        %851 = vmatpush1.xpose.msra.mxu0 0.0
        %852 = vmatprep.mubr.f32.mxu0 0.0
        %v853 = vand.u32 %v272, 4294901760
        %854 = vmatmul.mubr.f32.gmra.mrb[0].mxu0 %v853
        %v855 = vpop.f32.mrb[0].mxu0
        %v856 = vadd.f32 %v455, %v855
        %v857 = vpop.f32.mrb[0].mxu0
        %858 = vmatprep.mubr.f32.mxu0 0.0
        %v859 = vand.u32 %v275, 4294901760
        %860 = vmatmul.mubr.f32.gmra.mrb[0].mxu0 %v859
        %v861 = vpop.f32.mrb[0].mxu0
        %v862 = vadd.f32 %v465, %v861
        %v863 = vpop.f32.mrb[0].mxu0
        %864 = vmatprep.mubr.f32.mxu0 0.0
        %v865 = vand.u32 %v278, 4294901760
        %866 = vmatmul.mubr.f32.gmra.mrb[0].mxu0 %v865
        %v867 = vpop.f32.mrb[0].mxu0
        %v868 = vadd.f32 %v475, %v867
        %v869 = vpop.f32.mrb[0].mxu0
        %870 = vmatprep.mubr.f32.mxu0 0.0
        %v871 = vand.u32 %v281, 4294901760
        %872 = vmatmul.mubr.f32.gmra.mrb[0].mxu0 %v871
        %v873 = vpop.f32.mrb[0].mxu0
        %v874 = vadd.f32 %v485, %v873
        %v875 = vpop.f32.mrb[0].mxu0
        %876 = vmatprep.mubr.f32.mxu0 0.0
        %v877 = vand.u32 %v284, 4294901760
        %878 = vmatmul.mubr.f32.gmra.mrb[0].mxu0 %v877
        %v879 = vpop.f32.mrb[0].mxu0
        %v880 = vadd.f32 %v495, %v879
        %v881 = vpop.f32.mrb[0].mxu0
        %882 = vmatprep.mubr.f32.mxu0 0.0
        %v883 = vand.u32 %v287, 4294901760
        %884 = vmatmul.mubr.f32.gmra.mrb[0].mxu0 %v883
        %v885 = vpop.f32.mrb[0].mxu0
        %v886 = vadd.f32 %v505, %v885
        %v887 = vpop.f32.mrb[0].mxu0
        %888 = vmatprep.mubr.f32.mxu0 0.0
        %v889 = vand.u32 %v290, 4294901760
        %890 = vmatmul.mubr.f32.gmra.mrb[0].mxu0 %v889
        %v891 = vpop.f32.mrb[0].mxu0
        %v892 = vadd.f32 %v515, %v891
        %v893 = vpop.f32.mrb[0].mxu0
        %894 = vmatprep.mubr.f32.mxu0 0.0
        %v895 = vand.u32 %v293, 4294901760
        %896 = vmatmul.mubr.f32.gmra.mrb[0].mxu0 %v895
        %v897 = vpop.f32.mrb[0].mxu0
        %v898 = vadd.f32 %v525, %v897
        %v899 = vpop.f32.mrb[0].mxu0
        %900 = vmatprep.mubr.f32.mxu0 0.0
        %v901 = vand.u32 %v296, 4294901760
        %902 = vmatmul.mubr.f32.gmra.mrb[0].mxu0 %v901
        %v903 = vpop.f32.mrb[0].mxu0
        %v904 = vadd.f32 %v535, %v903
        %v905 = vpop.f32.mrb[0].mxu0
        %906 = vmatprep.mubr.f32.mxu0 0.0
        %v907 = vand.u32 %v299, 4294901760
        %908 = vmatmul.mubr.f32.gmra.mrb[0].mxu0 %v907
        %v909 = vpop.f32.mrb[0].mxu0
        %v910 = vadd.f32 %v545, %v909
        %v911 = vpop.f32.mrb[0].mxu0
        %912 = vmatprep.mubr.f32.mxu0 0.0
        %v913 = vand.u32 %v302, 4294901760
        %914 = vmatmul.mubr.f32.gmra.mrb[0].mxu0 %v913
        %v915 = vpop.f32.mrb[0].mxu0
        %v916 = vadd.f32 %v555, %v915
        %v917 = vpop.f32.mrb[0].mxu0
        %918 = vmatprep.mubr.f32.mxu0 0.0
        %v919 = vand.u32 %v305, 4294901760
        %920 = vmatmul.mubr.f32.gmra.mrb[0].mxu0 %v919
        %v921 = vpop.f32.mrb[0].mxu0
        %v922 = vadd.f32 %v565, %v921
        %v923 = vpop.f32.mrb[0].mxu0
        %924 = vmatprep.mubr.f32.mxu0 0.0
        %v925 = vand.u32 %v308, 4294901760
        %926 = vmatmul.mubr.f32.gmra.mrb[0].mxu0 %v925
        %v927 = vpop.f32.mrb[0].mxu0
        %v928 = vadd.f32 %v575, %v927
        %v929 = vpop.f32.mrb[0].mxu0
        %930 = vmatprep.mubr.f32.mxu0 0.0
        %v931 = vand.u32 %v311, 4294901760
        %932 = vmatmul.mubr.f32.gmra.mrb[0].mxu0 %v931
        %v933 = vpop.f32.mrb[0].mxu0
        %v934 = vadd.f32 %v585, %v933
        %v935 = vpop.f32.mrb[0].mxu0
        %936 = vmatprep.mubr.f32.mxu0 0.0
        %v937 = vand.u32 %v314, 4294901760
        %938 = vmatmul.mubr.f32.gmra.mrb[0].mxu0 %v937
        %v939 = vpop.f32.mrb[0].mxu0
        %v940 = vadd.f32 %v595, %v939
        %v941 = vpop.f32.mrb[0].mxu0
        %942 = vmatprep.mubr.f32.mxu0 0.0
        %v943 = vand.u32 %v317, 4294901760
        %944 = vmatmul.mubr.f32.gmra.mrb[0].mxu0 %v943
        %v945 = vpop.f32.mrb[0].mxu0
        %v946 = vadd.f32 %v605, %v945
        %v947 = vpop.f32.mrb[0].mxu0
        %948 = vmatprep.mubr.f32.mxu0 0.0
        %v949 = vand.u32 %v320, 4294901760
        %950 = vmatmul.mubr.f32.gmra.mrb[0].mxu0 %v949
        %v951 = vpop.f32.mrb[0].mxu0
        %v952 = vadd.f32 %v615, %v951
        %v953 = vpop.f32.mrb[0].mxu0
        %954 = vmatprep.mubr.f32.mxu0 0.0
        %v955 = vand.u32 %v323, 4294901760
        %956 = vmatmul.mubr.f32.gmra.mrb[0].mxu0 %v955
        %v957 = vpop.f32.mrb[0].mxu0
        %v958 = vadd.f32 %v625, %v957
        %v959 = vpop.f32.mrb[0].mxu0
        %960 = vmatprep.mubr.f32.mxu0 0.0
        %v961 = vand.u32 %v326, 4294901760
        %962 = vmatmul.mubr.f32.gmra.mrb[0].mxu0 %v961
        %v963 = vpop.f32.mrb[0].mxu0
        %v964 = vadd.f32 %v635, %v963
        %v965 = vpop.f32.mrb[0].mxu0
        %966 = vmatprep.mubr.f32.mxu0 0.0
        %v967 = vand.u32 %v329, 4294901760
        %968 = vmatmul.mubr.f32.gmra.mrb[0].mxu0 %v967
        %v969 = vpop.f32.mrb[0].mxu0
        %v970 = vadd.f32 %v645, %v969
        %v971 = vpop.f32.mrb[0].mxu0
        %972 = vmatprep.mubr.f32.mxu0 0.0
        %v973 = vand.u32 %v332, 4294901760
        %974 = vmatmul.mubr.f32.gmra.mrb[0].mxu0 %v973
        %v975 = vpop.f32.mrb[0].mxu0
        %v976 = vadd.f32 %v655, %v975
        %v977 = vpop.f32.mrb[0].mxu0
        %978 = vmatprep.mubr.f32.mxu0 0.0
        %v979 = vand.u32 %v335, 4294901760
        %980 = vmatmul.mubr.f32.gmra.mrb[0].mxu0 %v979
        %v981 = vpop.f32.mrb[0].mxu0
        %v982 = vadd.f32 %v665, %v981
        %v983 = vpop.f32.mrb[0].mxu0
        %984 = vmatprep.mubr.f32.mxu0 0.0
        %v985 = vand.u32 %v338, 4294901760
        %986 = vmatmul.mubr.f32.gmra.mrb[0].mxu0 %v985
        %v987 = vpop.f32.mrb[0].mxu0
        %v988 = vadd.f32 %v675, %v987
        %v989 = vpop.f32.mrb[0].mxu0
        %990 = vmatprep.mubr.f32.mxu0 0.0
        %v991 = vand.u32 %v341, 4294901760
        %992 = vmatmul.mubr.f32.gmra.mrb[0].mxu0 %v991
        %v993 = vpop.f32.mrb[0].mxu0
        %v994 = vadd.f32 %v685, %v993
        %v995 = vpop.f32.mrb[0].mxu0
        %996 = vmatprep.mubr.f32.mxu0 0.0
        %v997 = vand.u32 %v344, 4294901760
        %998 = vmatmul.mubr.f32.gmra.mrb[0].mxu0 %v997
        %v999 = vpop.f32.mrb[0].mxu0
        %v1000 = vadd.f32 %v695, %v999
        %v1001 = vpop.f32.mrb[0].mxu0
        %1002 = vmatprep.mubr.f32.mxu0 0.0
        %v1003 = vand.u32 %v347, 4294901760
        %1004 = vmatmul.mubr.f32.gmra.mrb[0].mxu0 %v1003
        %v1005 = vpop.f32.mrb[0].mxu0
        %v1006 = vadd.f32 %v705, %v1005
        %v1007 = vpop.f32.mrb[0].mxu0
        %1008 = vmatprep.mubr.f32.mxu0 0.0
        %v1009 = vand.u32 %v350, 4294901760
        %1010 = vmatmul.mubr.f32.gmra.mrb[0].mxu0 %v1009
        %v1011 = vpop.f32.mrb[0].mxu0
        %v1012 = vadd.f32 %v715, %v1011
        %v1013 = vpop.f32.mrb[0].mxu0
        %1014 = vmatprep.mubr.f32.mxu0 0.0
        %v1015 = vand.u32 %v353, 4294901760
        %1016 = vmatmul.mubr.f32.gmra.mrb[0].mxu0 %v1015
        %v1017 = vpop.f32.mrb[0].mxu0
        %v1018 = vadd.f32 %v725, %v1017
        %v1019 = vpop.f32.mrb[0].mxu0
        %1020 = vmatprep.mubr.f32.mxu0 0.0
        %v1021 = vand.u32 %v356, 4294901760
        %1022 = vmatmul.mubr.f32.gmra.mrb[0].mxu0 %v1021
        %v1023 = vpop.f32.mrb[0].mxu0
        %v1024 = vadd.f32 %v735, %v1023
        %v1025 = vpop.f32.mrb[0].mxu0
        %1026 = vmatprep.mubr.f32.mxu0 0.0
        %v1027 = vand.u32 %v359, 4294901760
        %1028 = vmatmul.mubr.f32.gmra.mrb[0].mxu0 %v1027
        %v1029 = vpop.f32.mrb[0].mxu0
        %v1030 = vadd.f32 %v745, %v1029
        %v1031 = vpop.f32.mrb[0].mxu0
        %1032 = vmatprep.mubr.f32.mxu0 0.0
        %v1033 = vand.u32 %v362, 4294901760
        %1034 = vmatmul.mubr.f32.gmra.mrb[0].mxu0 %v1033
        %v1035 = vpop.f32.mrb[0].mxu0
        %v1036 = vadd.f32 %v755, %v1035
        %v1037 = vpop.f32.mrb[0].mxu0
        %1038 = vmatprep.mubr.f32.mxu0 0.0
        %v1039 = vand.u32 %v365, 4294901760
        %1040 = vmatmul.mubr.f32.gmra.mrb[0].mxu0 %v1039
        %v1041 = vpop.f32.mrb[0].mxu0
        %v1042 = vadd.f32 %v765, %v1041
        %v1043 = vpop.f32.mrb[0].mxu0
        %1044 = vdwg.mxu0
        %1045 = vmatprep.subr.mxu0 0.0
        %v1046 = vand.u32 %v368, 4294901760
        %v1047 = vsub.f32 %v368, %v1046
        %1048 = vmatpush1.xpose.msra.mxu0 %v1047
        %1049 = vmatprep.subr.mxu0 0.0
        %v1050 = vand.u32 %v371, 4294901760
        %v1051 = vsub.f32 %v371, %v1050
        %1052 = vmatpush1.xpose.msra.mxu0 %v1051
        %1053 = vmatprep.subr.mxu0 0.0
        %v1054 = vand.u32 %v374, 4294901760
        %v1055 = vsub.f32 %v374, %v1054
        %1056 = vmatpush1.xpose.msra.mxu0 %v1055
        %1057 = vmatprep.subr.mxu0 0.0
        %v1058 = vand.u32 %v377, 4294901760
        %v1059 = vsub.f32 %v377, %v1058
        %1060 = vmatpush1.xpose.msra.mxu0 %v1059
        %1061 = vmatprep.subr.mxu0 0.0
        %1062 = vmatpush1.xpose.msra.mxu0 0.0
        %1063 = vmatprep.subr.mxu0 0.0
        %1064 = vmatpush1.xpose.msra.mxu0 0.0
        %1065 = vmatprep.subr.mxu0 0.0
        %1066 = vmatpush1.xpose.msra.mxu0 0.0
        %1067 = vmatprep.subr.mxu0 0.0
        %1068 = vmatpush1.xpose.msra.mxu0 0.0
        %1069 = vmatprep.subr.mxu0 0.0
        %1070 = vmatpush1.xpose.msra.mxu0 0.0
        %1071 = vmatprep.subr.mxu0 0.0
        %1072 = vmatpush1.xpose.msra.mxu0 0.0
        %1073 = vmatprep.subr.mxu0 0.0
        %1074 = vmatpush1.xpose.msra.mxu0 0.0
        %1075 = vmatprep.subr.mxu0 0.0
        %1076 = vmatpush1.xpose.msra.mxu0 0.0
        %1077 = vmatprep.subr.mxu0 0.0
        %1078 = vmatpush1.xpose.msra.mxu0 0.0
        %1079 = vmatprep.subr.mxu0 0.0
        %1080 = vmatpush1.xpose.msra.mxu0 0.0
        %1081 = vmatprep.subr.mxu0 0.0
        %1082 = vmatpush1.xpose.msra.mxu0 0.0
        %1083 = vmatprep.subr.mxu0 0.0
        %1084 = vmatpush1.xpose.msra.mxu0 0.0
        %1085 = vmatprep.subr.mxu0 0.0
        %1086 = vmatpush1.xpose.msra.mxu0 0.0
        %1087 = vmatprep.subr.mxu0 0.0
        %1088 = vmatpush1.xpose.msra.mxu0 0.0
        %1089 = vmatprep.subr.mxu0 0.0
        %1090 = vmatpush1.xpose.msra.mxu0 0.0
        %1091 = vmatprep.subr.mxu0 0.0
        %1092 = vmatpush1.xpose.msra.mxu0 0.0
        %1093 = vmatprep.subr.mxu0 0.0
        %1094 = vmatpush1.xpose.msra.mxu0 0.0
        %1095 = vmatprep.subr.mxu0 0.0
        %1096 = vmatpush1.xpose.msra.mxu0 0.0
        %1097 = vmatprep.subr.mxu0 0.0
        %1098 = vmatpush1.xpose.msra.mxu0 0.0
        %1099 = vmatprep.subr.mxu0 0.0
        %1100 = vmatpush1.xpose.msra.mxu0 0.0
        %1101 = vmatprep.subr.mxu0 0.0
        %1102 = vmatpush1.xpose.msra.mxu0 0.0
        %1103 = vmatprep.subr.mxu0 0.0
        %1104 = vmatpush1.xpose.msra.mxu0 0.0
        %1105 = vmatprep.subr.mxu0 0.0
        %1106 = vmatpush1.xpose.msra.mxu0 0.0
        %1107 = vmatprep.subr.mxu0 0.0
        %1108 = vmatpush1.xpose.msra.mxu0 0.0
        %1109 = vmatprep.subr.mxu0 0.0
        %1110 = vmatpush1.xpose.msra.mxu0 0.0
        %1111 = vmatprep.subr.mxu0 0.0
        %1112 = vmatpush1.xpose.msra.mxu0 0.0
        %1113 = vmatprep.subr.mxu0 0.0
        %1114 = vmatpush1.xpose.msra.mxu0 0.0
        %1115 = vmatprep.subr.mxu0 0.0
        %1116 = vmatpush1.xpose.msra.mxu0 0.0
        %1117 = vmatprep.mubr.f32.mxu0 0.0
        %v1118 = vand.u32 %v272, 4294901760
        %v1119 = vsub.f32 %v272, %v1118
        %1120 = vmatmul.mubr.f32.gmra.mrb[0].mxu0 %v1119
        %v1121 = vpop.f32.mrb[0].mxu0
        %v1122 = vadd.f32 %v856, %v1121
        %v1123 = vpop.f32.mrb[0].mxu0
        %1124 = vmatprep.mubr.f32.mxu0 0.0
        %v1125 = vand.u32 %v275, 4294901760
        %v1126 = vsub.f32 %v275, %v1125
        %1127 = vmatmul.mubr.f32.gmra.mrb[0].mxu0 %v1126
        %v1128 = vpop.f32.mrb[0].mxu0
        %v1129 = vadd.f32 %v862, %v1128
        %v1130 = vpop.f32.mrb[0].mxu0
        %1131 = vmatprep.mubr.f32.mxu0 0.0
        %v1132 = vand.u32 %v278, 4294901760
        %v1133 = vsub.f32 %v278, %v1132
        %1134 = vmatmul.mubr.f32.gmra.mrb[0].mxu0 %v1133
        %v1135 = vpop.f32.mrb[0].mxu0
        %v1136 = vadd.f32 %v868, %v1135
        %v1137 = vpop.f32.mrb[0].mxu0
        %1138 = vmatprep.mubr.f32.mxu0 0.0
        %v1139 = vand.u32 %v281, 4294901760
        %v1140 = vsub.f32 %v281, %v1139
        %1141 = vmatmul.mubr.f32.gmra.mrb[0].mxu0 %v1140
        %v1142 = vpop.f32.mrb[0].mxu0
        %v1143 = vadd.f32 %v874, %v1142
        %v1144 = vpop.f32.mrb[0].mxu0
        %1145 = vmatprep.mubr.f32.mxu0 0.0
        %v1146 = vand.u32 %v284, 4294901760
        %v1147 = vsub.f32 %v284, %v1146
        %1148 = vmatmul.mubr.f32.gmra.mrb[0].mxu0 %v1147
        %v1149 = vpop.f32.mrb[0].mxu0
        %v1150 = vadd.f32 %v880, %v1149
        %v1151 = vpop.f32.mrb[0].mxu0
        %1152 = vmatprep.mubr.f32.mxu0 0.0
        %v1153 = vand.u32 %v287, 4294901760
        %v1154 = vsub.f32 %v287, %v1153
        %1155 = vmatmul.mubr.f32.gmra.mrb[0].mxu0 %v1154
        %v1156 = vpop.f32.mrb[0].mxu0
        %v1157 = vadd.f32 %v886, %v1156
        %v1158 = vpop.f32.mrb[0].mxu0
        %1159 = vmatprep.mubr.f32.mxu0 0.0
        %v1160 = vand.u32 %v290, 4294901760
        %v1161 = vsub.f32 %v290, %v1160
        %1162 = vmatmul.mubr.f32.gmra.mrb[0].mxu0 %v1161
        %v1163 = vpop.f32.mrb[0].mxu0
        %v1164 = vadd.f32 %v892, %v1163
        %v1165 = vpop.f32.mrb[0].mxu0
        %1166 = vmatprep.mubr.f32.mxu0 0.0
        %v1167 = vand.u32 %v293, 4294901760
        %v1168 = vsub.f32 %v293, %v1167
        %1169 = vmatmul.mubr.f32.gmra.mrb[0].mxu0 %v1168
        %v1170 = vpop.f32.mrb[0].mxu0
        %v1171 = vadd.f32 %v898, %v1170
        %v1172 = vpop.f32.mrb[0].mxu0
        %1173 = vmatprep.mubr.f32.mxu0 0.0
        %v1174 = vand.u32 %v296, 4294901760
        %v1175 = vsub.f32 %v296, %v1174
        %1176 = vmatmul.mubr.f32.gmra.mrb[0].mxu0 %v1175
        %v1177 = vpop.f32.mrb[0].mxu0
        %v1178 = vadd.f32 %v904, %v1177
        %v1179 = vpop.f32.mrb[0].mxu0
        %1180 = vmatprep.mubr.f32.mxu0 0.0
        %v1181 = vand.u32 %v299, 4294901760
        %v1182 = vsub.f32 %v299, %v1181
        %1183 = vmatmul.mubr.f32.gmra.mrb[0].mxu0 %v1182
        %v1184 = vpop.f32.mrb[0].mxu0
        %v1185 = vadd.f32 %v910, %v1184
        %v1186 = vpop.f32.mrb[0].mxu0
        %1187 = vmatprep.mubr.f32.mxu0 0.0
        %v1188 = vand.u32 %v302, 4294901760
        %v1189 = vsub.f32 %v302, %v1188
        %1190 = vmatmul.mubr.f32.gmra.mrb[0].mxu0 %v1189
        %v1191 = vpop.f32.mrb[0].mxu0
        %v1192 = vadd.f32 %v916, %v1191
        %v1193 = vpop.f32.mrb[0].mxu0
        %1194 = vmatprep.mubr.f32.mxu0 0.0
        %v1195 = vand.u32 %v305, 4294901760
        %v1196 = vsub.f32 %v305, %v1195
        %1197 = vmatmul.mubr.f32.gmra.mrb[0].mxu0 %v1196
        %v1198 = vpop.f32.mrb[0].mxu0
        %v1199 = vadd.f32 %v922, %v1198
        %v1200 = vpop.f32.mrb[0].mxu0
        %1201 = vmatprep.mubr.f32.mxu0 0.0
        %v1202 = vand.u32 %v308, 4294901760
        %v1203 = vsub.f32 %v308, %v1202
        %1204 = vmatmul.mubr.f32.gmra.mrb[0].mxu0 %v1203
        %v1205 = vpop.f32.mrb[0].mxu0
        %v1206 = vadd.f32 %v928, %v1205
        %v1207 = vpop.f32.mrb[0].mxu0
        %1208 = vmatprep.mubr.f32.mxu0 0.0
        %v1209 = vand.u32 %v311, 4294901760
        %v1210 = vsub.f32 %v311, %v1209
        %1211 = vmatmul.mubr.f32.gmra.mrb[0].mxu0 %v1210
        %v1212 = vpop.f32.mrb[0].mxu0
        %v1213 = vadd.f32 %v934, %v1212
        %v1214 = vpop.f32.mrb[0].mxu0
        %1215 = vmatprep.mubr.f32.mxu0 0.0
        %v1216 = vand.u32 %v314, 4294901760
        %v1217 = vsub.f32 %v314, %v1216
        %1218 = vmatmul.mubr.f32.gmra.mrb[0].mxu0 %v1217
        %v1219 = vpop.f32.mrb[0].mxu0
        %v1220 = vadd.f32 %v940, %v1219
        %v1221 = vpop.f32.mrb[0].mxu0
        %1222 = vmatprep.mubr.f32.mxu0 0.0
        %v1223 = vand.u32 %v317, 4294901760
        %v1224 = vsub.f32 %v317, %v1223
        %1225 = vmatmul.mubr.f32.gmra.mrb[0].mxu0 %v1224
        %v1226 = vpop.f32.mrb[0].mxu0
        %v1227 = vadd.f32 %v946, %v1226
        %v1228 = vpop.f32.mrb[0].mxu0
        %1229 = vmatprep.mubr.f32.mxu0 0.0
        %v1230 = vand.u32 %v320, 4294901760
        %v1231 = vsub.f32 %v320, %v1230
        %1232 = vmatmul.mubr.f32.gmra.mrb[0].mxu0 %v1231
        %v1233 = vpop.f32.mrb[0].mxu0
        %v1234 = vadd.f32 %v952, %v1233
        %v1235 = vpop.f32.mrb[0].mxu0
        %1236 = vmatprep.mubr.f32.mxu0 0.0
        %v1237 = vand.u32 %v323, 4294901760
        %v1238 = vsub.f32 %v323, %v1237
        %1239 = vmatmul.mubr.f32.gmra.mrb[0].mxu0 %v1238
        %v1240 = vpop.f32.mrb[0].mxu0
        %v1241 = vadd.f32 %v958, %v1240
        %v1242 = vpop.f32.mrb[0].mxu0
        %1243 = vmatprep.mubr.f32.mxu0 0.0
        %v1244 = vand.u32 %v326, 4294901760
        %v1245 = vsub.f32 %v326, %v1244
        %1246 = vmatmul.mubr.f32.gmra.mrb[0].mxu0 %v1245
        %v1247 = vpop.f32.mrb[0].mxu0
        %v1248 = vadd.f32 %v964, %v1247
        %v1249 = vpop.f32.mrb[0].mxu0
        %1250 = vmatprep.mubr.f32.mxu0 0.0
        %v1251 = vand.u32 %v329, 4294901760
        %v1252 = vsub.f32 %v329, %v1251
        %1253 = vmatmul.mubr.f32.gmra.mrb[0].mxu0 %v1252
        %v1254 = vpop.f32.mrb[0].mxu0
        %v1255 = vadd.f32 %v970, %v1254
        %v1256 = vpop.f32.mrb[0].mxu0
        %1257 = vmatprep.mubr.f32.mxu0 0.0
        %v1258 = vand.u32 %v332, 4294901760
        %v1259 = vsub.f32 %v332, %v1258
        %1260 = vmatmul.mubr.f32.gmra.mrb[0].mxu0 %v1259
        %v1261 = vpop.f32.mrb[0].mxu0
        %v1262 = vadd.f32 %v976, %v1261
        %v1263 = vpop.f32.mrb[0].mxu0
        %1264 = vmatprep.mubr.f32.mxu0 0.0
        %v1265 = vand.u32 %v335, 4294901760
        %v1266 = vsub.f32 %v335, %v1265
        %1267 = vmatmul.mubr.f32.gmra.mrb[0].mxu0 %v1266
        %v1268 = vpop.f32.mrb[0].mxu0
        %v1269 = vadd.f32 %v982, %v1268
        %v1270 = vpop.f32.mrb[0].mxu0
        %1271 = vmatprep.mubr.f32.mxu0 0.0
        %v1272 = vand.u32 %v338, 4294901760
        %v1273 = vsub.f32 %v338, %v1272
        %1274 = vmatmul.mubr.f32.gmra.mrb[0].mxu0 %v1273
        %v1275 = vpop.f32.mrb[0].mxu0
        %v1276 = vadd.f32 %v988, %v1275
        %v1277 = vpop.f32.mrb[0].mxu0
        %1278 = vmatprep.mubr.f32.mxu0 0.0
        %v1279 = vand.u32 %v341, 4294901760
        %v1280 = vsub.f32 %v341, %v1279
        %1281 = vmatmul.mubr.f32.gmra.mrb[0].mxu0 %v1280
        %v1282 = vpop.f32.mrb[0].mxu0
        %v1283 = vadd.f32 %v994, %v1282
        %v1284 = vpop.f32.mrb[0].mxu0
        %1285 = vmatprep.mubr.f32.mxu0 0.0
        %v1286 = vand.u32 %v344, 4294901760
        %v1287 = vsub.f32 %v344, %v1286
        %1288 = vmatmul.mubr.f32.gmra.mrb[0].mxu0 %v1287
        %v1289 = vpop.f32.mrb[0].mxu0
        %v1290 = vadd.f32 %v1000, %v1289
        %v1291 = vpop.f32.mrb[0].mxu0
        %1292 = vmatprep.mubr.f32.mxu0 0.0
        %v1293 = vand.u32 %v347, 4294901760
        %v1294 = vsub.f32 %v347, %v1293
        %1295 = vmatmul.mubr.f32.gmra.mrb[0].mxu0 %v1294
        %v1296 = vpop.f32.mrb[0].mxu0
        %v1297 = vadd.f32 %v1006, %v1296
        %v1298 = vpop.f32.mrb[0].mxu0
        %1299 = vmatprep.mubr.f32.mxu0 0.0
        %v1300 = vand.u32 %v350, 4294901760
        %v1301 = vsub.f32 %v350, %v1300
        %1302 = vmatmul.mubr.f32.gmra.mrb[0].mxu0 %v1301
        %v1303 = vpop.f32.mrb[0].mxu0
        %v1304 = vadd.f32 %v1012, %v1303
        %v1305 = vpop.f32.mrb[0].mxu0
        %1306 = vmatprep.mubr.f32.mxu0 0.0
        %v1307 = vand.u32 %v353, 4294901760
        %v1308 = vsub.f32 %v353, %v1307
        %1309 = vmatmul.mubr.f32.gmra.mrb[0].mxu0 %v1308
        %v1310 = vpop.f32.mrb[0].mxu0
        %v1311 = vadd.f32 %v1018, %v1310
        %v1312 = vpop.f32.mrb[0].mxu0
        %1313 = vmatprep.mubr.f32.mxu0 0.0
        %v1314 = vand.u32 %v356, 4294901760
        %v1315 = vsub.f32 %v356, %v1314
        %1316 = vmatmul.mubr.f32.gmra.mrb[0].mxu0 %v1315
        %v1317 = vpop.f32.mrb[0].mxu0
        %v1318 = vadd.f32 %v1024, %v1317
        %v1319 = vpop.f32.mrb[0].mxu0
        %1320 = vmatprep.mubr.f32.mxu0 0.0
        %v1321 = vand.u32 %v359, 4294901760
        %v1322 = vsub.f32 %v359, %v1321
        %1323 = vmatmul.mubr.f32.gmra.mrb[0].mxu0 %v1322
        %v1324 = vpop.f32.mrb[0].mxu0
        %v1325 = vadd.f32 %v1030, %v1324
        %v1326 = vpop.f32.mrb[0].mxu0
        %1327 = vmatprep.mubr.f32.mxu0 0.0
        %v1328 = vand.u32 %v362, 4294901760
        %v1329 = vsub.f32 %v362, %v1328
        %1330 = vmatmul.mubr.f32.gmra.mrb[0].mxu0 %v1329
        %v1331 = vpop.f32.mrb[0].mxu0
        %v1332 = vadd.f32 %v1036, %v1331
        %v1333 = vpop.f32.mrb[0].mxu0
        %1334 = vmatprep.mubr.f32.mxu0 0.0
        %v1335 = vand.u32 %v365, 4294901760
        %v1336 = vsub.f32 %v365, %v1335
        %1337 = vmatmul.mubr.f32.gmra.mrb[0].mxu0 %v1336
        %v1338 = vpop.f32.mrb[0].mxu0
        %v1339 = vadd.f32 %v1042, %v1338
        %v1340 = vpop.f32.mrb[0].mxu0
        %1341 = vdwg.mxu0
        %1342 = vmatprep.subr.mxu0 0.0
        %v1343 = vand.u32 %v368, 4294901760
        %1344 = vmatpush1.xpose.msra.mxu0 %v1343
        %1345 = vmatprep.subr.mxu0 0.0
        %v1346 = vand.u32 %v371, 4294901760
        %1347 = vmatpush1.xpose.msra.mxu0 %v1346
        %1348 = vmatprep.subr.mxu0 0.0
        %v1349 = vand.u32 %v374, 4294901760
        %1350 = vmatpush1.xpose.msra.mxu0 %v1349
        %1351 = vmatprep.subr.mxu0 0.0
        %v1352 = vand.u32 %v377, 4294901760
        %1353 = vmatpush1.xpose.msra.mxu0 %v1352
        %1354 = vmatprep.subr.mxu0 0.0
        %1355 = vmatpush1.xpose.msra.mxu0 0.0
        %1356 = vmatprep.subr.mxu0 0.0
        %1357 = vmatpush1.xpose.msra.mxu0 0.0
        %1358 = vmatprep.subr.mxu0 0.0
        %1359 = vmatpush1.xpose.msra.mxu0 0.0
        %1360 = vmatprep.subr.mxu0 0.0
        %1361 = vmatpush1.xpose.msra.mxu0 0.0
        %1362 = vmatprep.subr.mxu0 0.0
        %1363 = vmatpush1.xpose.msra.mxu0 0.0
        %1364 = vmatprep.subr.mxu0 0.0
        %1365 = vmatpush1.xpose.msra.mxu0 0.0
        %1366 = vmatprep.subr.mxu0 0.0
        %1367 = vmatpush1.xpose.msra.mxu0 0.0
        %1368 = vmatprep.subr.mxu0 0.0
        %1369 = vmatpush1.xpose.msra.mxu0 0.0
        %1370 = vmatprep.subr.mxu0 0.0
        %1371 = vmatpush1.xpose.msra.mxu0 0.0
        %1372 = vmatprep.subr.mxu0 0.0
        %1373 = vmatpush1.xpose.msra.mxu0 0.0
        %1374 = vmatprep.subr.mxu0 0.0
        %1375 = vmatpush1.xpose.msra.mxu0 0.0
        %1376 = vmatprep.subr.mxu0 0.0
        %1377 = vmatpush1.xpose.msra.mxu0 0.0
        %1378 = vmatprep.subr.mxu0 0.0
        %1379 = vmatpush1.xpose.msra.mxu0 0.0
        %1380 = vmatprep.subr.mxu0 0.0
        %1381 = vmatpush1.xpose.msra.mxu0 0.0
        %1382 = vmatprep.subr.mxu0 0.0
        %1383 = vmatpush1.xpose.msra.mxu0 0.0
        %1384 = vmatprep.subr.mxu0 0.0
        %1385 = vmatpush1.xpose.msra.mxu0 0.0
        %1386 = vmatprep.subr.mxu0 0.0
        %1387 = vmatpush1.xpose.msra.mxu0 0.0
        %1388 = vmatprep.subr.mxu0 0.0
        %1389 = vmatpush1.xpose.msra.mxu0 0.0
        %1390 = vmatprep.subr.mxu0 0.0
        %1391 = vmatpush1.xpose.msra.mxu0 0.0
        %1392 = vmatprep.subr.mxu0 0.0
        %1393 = vmatpush1.xpose.msra.mxu0 0.0
        %1394 = vmatprep.subr.mxu0 0.0
        %1395 = vmatpush1.xpose.msra.mxu0 0.0
        %1396 = vmatprep.subr.mxu0 0.0
        %1397 = vmatpush1.xpose.msra.mxu0 0.0
        %1398 = vmatprep.subr.mxu0 0.0
        %1399 = vmatpush1.xpose.msra.mxu0 0.0
        %1400 = vmatprep.subr.mxu0 0.0
        %1401 = vmatpush1.xpose.msra.mxu0 0.0
        %1402 = vmatprep.subr.mxu0 0.0
        %1403 = vmatpush1.xpose.msra.mxu0 0.0
        %1404 = vmatprep.subr.mxu0 0.0
        %1405 = vmatpush1.xpose.msra.mxu0 0.0
        %1406 = vmatprep.subr.mxu0 0.0
        %1407 = vmatpush1.xpose.msra.mxu0 0.0
        %1408 = vmatprep.subr.mxu0 0.0
        %1409 = vmatpush1.xpose.msra.mxu0 0.0
        %1410 = vmatprep.mubr.f32.mxu0 0.0
        %v1411 = vand.u32 %v272, 4294901760
        %v1412 = vsub.f32 %v272, %v1411
        %v1413 = vand.u32 %v1412, 4294901760
        %1414 = vmatmul.mubr.f32.gmra.mrb[0].mxu0 %v1413
        %v1415 = vpop.f32.mrb[0].mxu0
        %v1416 = vadd.f32 %v1122, %v1415
        %v1417 = vpop.f32.mrb[0].mxu0
        %1418 = vmatprep.mubr.f32.mxu0 0.0
        %v1419 = vand.u32 %v275, 4294901760
        %v1420 = vsub.f32 %v275, %v1419
        %v1421 = vand.u32 %v1420, 4294901760
        %1422 = vmatmul.mubr.f32.gmra.mrb[0].mxu0 %v1421
        %v1423 = vpop.f32.mrb[0].mxu0
        %v1424 = vadd.f32 %v1129, %v1423
        %v1425 = vpop.f32.mrb[0].mxu0
        %1426 = vmatprep.mubr.f32.mxu0 0.0
        %v1427 = vand.u32 %v278, 4294901760
        %v1428 = vsub.f32 %v278, %v1427
        %v1429 = vand.u32 %v1428, 4294901760
        %1430 = vmatmul.mubr.f32.gmra.mrb[0].mxu0 %v1429
        %v1431 = vpop.f32.mrb[0].mxu0
        %v1432 = vadd.f32 %v1136, %v1431
        %v1433 = vpop.f32.mrb[0].mxu0
        %1434 = vmatprep.mubr.f32.mxu0 0.0
        %v1435 = vand.u32 %v281, 4294901760
        %v1436 = vsub.f32 %v281, %v1435
        %v1437 = vand.u32 %v1436, 4294901760
        %1438 = vmatmul.mubr.f32.gmra.mrb[0].mxu0 %v1437
        %v1439 = vpop.f32.mrb[0].mxu0
        %v1440 = vadd.f32 %v1143, %v1439
        %v1441 = vpop.f32.mrb[0].mxu0
        %1442 = vmatprep.mubr.f32.mxu0 0.0
        %v1443 = vand.u32 %v284, 4294901760
        %v1444 = vsub.f32 %v284, %v1443
        %v1445 = vand.u32 %v1444, 4294901760
        %1446 = vmatmul.mubr.f32.gmra.mrb[0].mxu0 %v1445
        %v1447 = vpop.f32.mrb[0].mxu0
        %v1448 = vadd.f32 %v1150, %v1447
        %v1449 = vpop.f32.mrb[0].mxu0
        %1450 = vmatprep.mubr.f32.mxu0 0.0
        %v1451 = vand.u32 %v287, 4294901760
        %v1452 = vsub.f32 %v287, %v1451
        %v1453 = vand.u32 %v1452, 4294901760
        %1454 = vmatmul.mubr.f32.gmra.mrb[0].mxu0 %v1453
        %v1455 = vpop.f32.mrb[0].mxu0
        %v1456 = vadd.f32 %v1157, %v1455
        %v1457 = vpop.f32.mrb[0].mxu0
        %1458 = vmatprep.mubr.f32.mxu0 0.0
        %v1459 = vand.u32 %v290, 4294901760
        %v1460 = vsub.f32 %v290, %v1459
        %v1461 = vand.u32 %v1460, 4294901760
        %1462 = vmatmul.mubr.f32.gmra.mrb[0].mxu0 %v1461
        %v1463 = vpop.f32.mrb[0].mxu0
        %v1464 = vadd.f32 %v1164, %v1463
        %v1465 = vpop.f32.mrb[0].mxu0
        %1466 = vmatprep.mubr.f32.mxu0 0.0
        %v1467 = vand.u32 %v293, 4294901760
        %v1468 = vsub.f32 %v293, %v1467
        %v1469 = vand.u32 %v1468, 4294901760
        %1470 = vmatmul.mubr.f32.gmra.mrb[0].mxu0 %v1469
        %v1471 = vpop.f32.mrb[0].mxu0
        %v1472 = vadd.f32 %v1171, %v1471
        %v1473 = vpop.f32.mrb[0].mxu0
        %1474 = vmatprep.mubr.f32.mxu0 0.0
        %v1475 = vand.u32 %v296, 4294901760
        %v1476 = vsub.f32 %v296, %v1475
        %v1477 = vand.u32 %v1476, 4294901760
        %1478 = vmatmul.mubr.f32.gmra.mrb[0].mxu0 %v1477
        %v1479 = vpop.f32.mrb[0].mxu0
        %v1480 = vadd.f32 %v1178, %v1479
        %v1481 = vpop.f32.mrb[0].mxu0
        %1482 = vmatprep.mubr.f32.mxu0 0.0
        %v1483 = vand.u32 %v299, 4294901760
        %v1484 = vsub.f32 %v299, %v1483
        %v1485 = vand.u32 %v1484, 4294901760
        %1486 = vmatmul.mubr.f32.gmra.mrb[0].mxu0 %v1485
        %v1487 = vpop.f32.mrb[0].mxu0
        %v1488 = vadd.f32 %v1185, %v1487
        %v1489 = vpop.f32.mrb[0].mxu0
        %1490 = vmatprep.mubr.f32.mxu0 0.0
        %v1491 = vand.u32 %v302, 4294901760
        %v1492 = vsub.f32 %v302, %v1491
        %v1493 = vand.u32 %v1492, 4294901760
        %1494 = vmatmul.mubr.f32.gmra.mrb[0].mxu0 %v1493
        %v1495 = vpop.f32.mrb[0].mxu0
        %v1496 = vadd.f32 %v1192, %v1495
        %v1497 = vpop.f32.mrb[0].mxu0
        %1498 = vmatprep.mubr.f32.mxu0 0.0
        %v1499 = vand.u32 %v305, 4294901760
        %v1500 = vsub.f32 %v305, %v1499
        %v1501 = vand.u32 %v1500, 4294901760
        %1502 = vmatmul.mubr.f32.gmra.mrb[0].mxu0 %v1501
        %v1503 = vpop.f32.mrb[0].mxu0
        %v1504 = vadd.f32 %v1199, %v1503
        %v1505 = vpop.f32.mrb[0].mxu0
        %1506 = vmatprep.mubr.f32.mxu0 0.0
        %v1507 = vand.u32 %v308, 4294901760
        %v1508 = vsub.f32 %v308, %v1507
        %v1509 = vand.u32 %v1508, 4294901760
        %1510 = vmatmul.mubr.f32.gmra.mrb[0].mxu0 %v1509
        %v1511 = vpop.f32.mrb[0].mxu0
        %v1512 = vadd.f32 %v1206, %v1511
        %v1513 = vpop.f32.mrb[0].mxu0
        %1514 = vmatprep.mubr.f32.mxu0 0.0
        %v1515 = vand.u32 %v311, 4294901760
        %v1516 = vsub.f32 %v311, %v1515
        %v1517 = vand.u32 %v1516, 4294901760
        %1518 = vmatmul.mubr.f32.gmra.mrb[0].mxu0 %v1517
        %v1519 = vpop.f32.mrb[0].mxu0
        %v1520 = vadd.f32 %v1213, %v1519
        %v1521 = vpop.f32.mrb[0].mxu0
        %1522 = vmatprep.mubr.f32.mxu0 0.0
        %v1523 = vand.u32 %v314, 4294901760
        %v1524 = vsub.f32 %v314, %v1523
        %v1525 = vand.u32 %v1524, 4294901760
        %1526 = vmatmul.mubr.f32.gmra.mrb[0].mxu0 %v1525
        %v1527 = vpop.f32.mrb[0].mxu0
        %v1528 = vadd.f32 %v1220, %v1527
        %v1529 = vpop.f32.mrb[0].mxu0
        %1530 = vmatprep.mubr.f32.mxu0 0.0
        %v1531 = vand.u32 %v317, 4294901760
        %v1532 = vsub.f32 %v317, %v1531
        %v1533 = vand.u32 %v1532, 4294901760
        %1534 = vmatmul.mubr.f32.gmra.mrb[0].mxu0 %v1533
        %v1535 = vpop.f32.mrb[0].mxu0
        %v1536 = vadd.f32 %v1227, %v1535
        %v1537 = vpop.f32.mrb[0].mxu0
        %1538 = vmatprep.mubr.f32.mxu0 0.0
        %v1539 = vand.u32 %v320, 4294901760
        %v1540 = vsub.f32 %v320, %v1539
        %v1541 = vand.u32 %v1540, 4294901760
        %1542 = vmatmul.mubr.f32.gmra.mrb[0].mxu0 %v1541
        %v1543 = vpop.f32.mrb[0].mxu0
        %v1544 = vadd.f32 %v1234, %v1543
        %v1545 = vpop.f32.mrb[0].mxu0
        %1546 = vmatprep.mubr.f32.mxu0 0.0
        %v1547 = vand.u32 %v323, 4294901760
        %v1548 = vsub.f32 %v323, %v1547
        %v1549 = vand.u32 %v1548, 4294901760
        %1550 = vmatmul.mubr.f32.gmra.mrb[0].mxu0 %v1549
        %v1551 = vpop.f32.mrb[0].mxu0
        %v1552 = vadd.f32 %v1241, %v1551
        %v1553 = vpop.f32.mrb[0].mxu0
        %1554 = vmatprep.mubr.f32.mxu0 0.0
        %v1555 = vand.u32 %v326, 4294901760
        %v1556 = vsub.f32 %v326, %v1555
        %v1557 = vand.u32 %v1556, 4294901760
        %1558 = vmatmul.mubr.f32.gmra.mrb[0].mxu0 %v1557
        %v1559 = vpop.f32.mrb[0].mxu0
        %v1560 = vadd.f32 %v1248, %v1559
        %v1561 = vpop.f32.mrb[0].mxu0
        %1562 = vmatprep.mubr.f32.mxu0 0.0
        %v1563 = vand.u32 %v329, 4294901760
        %v1564 = vsub.f32 %v329, %v1563
        %v1565 = vand.u32 %v1564, 4294901760
        %1566 = vmatmul.mubr.f32.gmra.mrb[0].mxu0 %v1565
        %v1567 = vpop.f32.mrb[0].mxu0
        %v1568 = vadd.f32 %v1255, %v1567
        %v1569 = vpop.f32.mrb[0].mxu0
        %1570 = vmatprep.mubr.f32.mxu0 0.0
        %v1571 = vand.u32 %v332, 4294901760
        %v1572 = vsub.f32 %v332, %v1571
        %v1573 = vand.u32 %v1572, 4294901760
        %1574 = vmatmul.mubr.f32.gmra.mrb[0].mxu0 %v1573
        %v1575 = vpop.f32.mrb[0].mxu0
        %v1576 = vadd.f32 %v1262, %v1575
        %v1577 = vpop.f32.mrb[0].mxu0
        %1578 = vmatprep.mubr.f32.mxu0 0.0
        %v1579 = vand.u32 %v335, 4294901760
        %v1580 = vsub.f32 %v335, %v1579
        %v1581 = vand.u32 %v1580, 4294901760
        %1582 = vmatmul.mubr.f32.gmra.mrb[0].mxu0 %v1581
        %v1583 = vpop.f32.mrb[0].mxu0
        %v1584 = vadd.f32 %v1269, %v1583
        %v1585 = vpop.f32.mrb[0].mxu0
        %1586 = vmatprep.mubr.f32.mxu0 0.0
        %v1587 = vand.u32 %v338, 4294901760
        %v1588 = vsub.f32 %v338, %v1587
        %v1589 = vand.u32 %v1588, 4294901760
        %1590 = vmatmul.mubr.f32.gmra.mrb[0].mxu0 %v1589
        %v1591 = vpop.f32.mrb[0].mxu0
        %v1592 = vadd.f32 %v1276, %v1591
        %v1593 = vpop.f32.mrb[0].mxu0
        %1594 = vmatprep.mubr.f32.mxu0 0.0
        %v1595 = vand.u32 %v341, 4294901760
        %v1596 = vsub.f32 %v341, %v1595
        %v1597 = vand.u32 %v1596, 4294901760
        %1598 = vmatmul.mubr.f32.gmra.mrb[0].mxu0 %v1597
        %v1599 = vpop.f32.mrb[0].mxu0
        %v1600 = vadd.f32 %v1283, %v1599
        %v1601 = vpop.f32.mrb[0].mxu0
        %1602 = vmatprep.mubr.f32.mxu0 0.0
        %v1603 = vand.u32 %v344, 4294901760
        %v1604 = vsub.f32 %v344, %v1603
        %v1605 = vand.u32 %v1604, 4294901760
        %1606 = vmatmul.mubr.f32.gmra.mrb[0].mxu0 %v1605
        %v1607 = vpop.f32.mrb[0].mxu0
        %v1608 = vadd.f32 %v1290, %v1607
        %v1609 = vpop.f32.mrb[0].mxu0
        %1610 = vmatprep.mubr.f32.mxu0 0.0
        %v1611 = vand.u32 %v347, 4294901760
        %v1612 = vsub.f32 %v347, %v1611
        %v1613 = vand.u32 %v1612, 4294901760
        %1614 = vmatmul.mubr.f32.gmra.mrb[0].mxu0 %v1613
        %v1615 = vpop.f32.mrb[0].mxu0
        %v1616 = vadd.f32 %v1297, %v1615
        %v1617 = vpop.f32.mrb[0].mxu0
        %1618 = vmatprep.mubr.f32.mxu0 0.0
        %v1619 = vand.u32 %v350, 4294901760
        %v1620 = vsub.f32 %v350, %v1619
        %v1621 = vand.u32 %v1620, 4294901760
        %1622 = vmatmul.mubr.f32.gmra.mrb[0].mxu0 %v1621
        %v1623 = vpop.f32.mrb[0].mxu0
        %v1624 = vadd.f32 %v1304, %v1623
        %v1625 = vpop.f32.mrb[0].mxu0
        %1626 = vmatprep.mubr.f32.mxu0 0.0
        %v1627 = vand.u32 %v353, 4294901760
        %v1628 = vsub.f32 %v353, %v1627
        %v1629 = vand.u32 %v1628, 4294901760
        %1630 = vmatmul.mubr.f32.gmra.mrb[0].mxu0 %v1629
        %v1631 = vpop.f32.mrb[0].mxu0
        %v1632 = vadd.f32 %v1311, %v1631
        %v1633 = vpop.f32.mrb[0].mxu0
        %1634 = vmatprep.mubr.f32.mxu0 0.0
        %v1635 = vand.u32 %v356, 4294901760
        %v1636 = vsub.f32 %v356, %v1635
        %v1637 = vand.u32 %v1636, 4294901760
        %1638 = vmatmul.mubr.f32.gmra.mrb[0].mxu0 %v1637
        %v1639 = vpop.f32.mrb[0].mxu0
        %v1640 = vadd.f32 %v1318, %v1639
        %v1641 = vpop.f32.mrb[0].mxu0
        %1642 = vmatprep.mubr.f32.mxu0 0.0
        %v1643 = vand.u32 %v359, 4294901760
        %v1644 = vsub.f32 %v359, %v1643
        %v1645 = vand.u32 %v1644, 4294901760
        %1646 = vmatmul.mubr.f32.gmra.mrb[0].mxu0 %v1645
        %v1647 = vpop.f32.mrb[0].mxu0
        %v1648 = vadd.f32 %v1325, %v1647
        %v1649 = vpop.f32.mrb[0].mxu0
        %1650 = vmatprep.mubr.f32.mxu0 0.0
        %v1651 = vand.u32 %v362, 4294901760
        %v1652 = vsub.f32 %v362, %v1651
        %v1653 = vand.u32 %v1652, 4294901760
        %1654 = vmatmul.mubr.f32.gmra.mrb[0].mxu0 %v1653
        %v1655 = vpop.f32.mrb[0].mxu0
        %v1656 = vadd.f32 %v1332, %v1655
        %v1657 = vpop.f32.mrb[0].mxu0
        %1658 = vmatprep.mubr.f32.mxu0 0.0
        %v1659 = vand.u32 %v365, 4294901760
        %v1660 = vsub.f32 %v365, %v1659
        %v1661 = vand.u32 %v1660, 4294901760
        %1662 = vmatmul.mubr.f32.gmra.mrb[0].mxu0 %v1661
        %v1663 = vpop.f32.mrb[0].mxu0
        %v1664 = vadd.f32 %v1339, %v1663
        %v1665 = vpop.f32.mrb[0].mxu0
        %1666 = vdwg.mxu0
        %1667 = vmatprep.subr.mxu0 0.0
        %v1668 = vand.u32 %v368, 4294901760
        %v1669 = vsub.f32 %v368, %v1668
        %v1670 = vand.u32 %v1669, 4294901760
        %1671 = vmatpush1.xpose.msra.mxu0 %v1670
        %1672 = vmatprep.subr.mxu0 0.0
        %v1673 = vand.u32 %v371, 4294901760
        %v1674 = vsub.f32 %v371, %v1673
        %v1675 = vand.u32 %v1674, 4294901760
        %1676 = vmatpush1.xpose.msra.mxu0 %v1675
        %1677 = vmatprep.subr.mxu0 0.0
        %v1678 = vand.u32 %v374, 4294901760
        %v1679 = vsub.f32 %v374, %v1678
        %v1680 = vand.u32 %v1679, 4294901760
        %1681 = vmatpush1.xpose.msra.mxu0 %v1680
        %1682 = vmatprep.subr.mxu0 0.0
        %v1683 = vand.u32 %v377, 4294901760
        %v1684 = vsub.f32 %v377, %v1683
        %v1685 = vand.u32 %v1684, 4294901760
        %1686 = vmatpush1.xpose.msra.mxu0 %v1685
        %1687 = vmatprep.subr.mxu0 0.0
        %1688 = vmatpush1.xpose.msra.mxu0 0.0
        %1689 = vmatprep.subr.mxu0 0.0
        %1690 = vmatpush1.xpose.msra.mxu0 0.0
        %1691 = vmatprep.subr.mxu0 0.0
        %1692 = vmatpush1.xpose.msra.mxu0 0.0
        %1693 = vmatprep.subr.mxu0 0.0
        %1694 = vmatpush1.xpose.msra.mxu0 0.0
        %1695 = vmatprep.subr.mxu0 0.0
        %1696 = vmatpush1.xpose.msra.mxu0 0.0
        %1697 = vmatprep.subr.mxu0 0.0
        %1698 = vmatpush1.xpose.msra.mxu0 0.0
        %1699 = vmatprep.subr.mxu0 0.0
        %1700 = vmatpush1.xpose.msra.mxu0 0.0
        %1701 = vmatprep.subr.mxu0 0.0
        %1702 = vmatpush1.xpose.msra.mxu0 0.0
        %1703 = vmatprep.subr.mxu0 0.0
        %1704 = vmatpush1.xpose.msra.mxu0 0.0
        %1705 = vmatprep.subr.mxu0 0.0
        %1706 = vmatpush1.xpose.msra.mxu0 0.0
        %1707 = vmatprep.subr.mxu0 0.0
        %1708 = vmatpush1.xpose.msra.mxu0 0.0
        %1709 = vmatprep.subr.mxu0 0.0
        %1710 = vmatpush1.xpose.msra.mxu0 0.0
        %1711 = vmatprep.subr.mxu0 0.0
        %1712 = vmatpush1.xpose.msra.mxu0 0.0
        %1713 = vmatprep.subr.mxu0 0.0
        %1714 = vmatpush1.xpose.msra.mxu0 0.0
        %1715 = vmatprep.subr.mxu0 0.0
        %1716 = vmatpush1.xpose.msra.mxu0 0.0
        %1717 = vmatprep.subr.mxu0 0.0
        %1718 = vmatpush1.xpose.msra.mxu0 0.0
        %1719 = vmatprep.subr.mxu0 0.0
        %1720 = vmatpush1.xpose.msra.mxu0 0.0
        %1721 = vmatprep.subr.mxu0 0.0
        %1722 = vmatpush1.xpose.msra.mxu0 0.0
        %1723 = vmatprep.subr.mxu0 0.0
        %1724 = vmatpush1.xpose.msra.mxu0 0.0
        %1725 = vmatprep.subr.mxu0 0.0
        %1726 = vmatpush1.xpose.msra.mxu0 0.0
        %1727 = vmatprep.subr.mxu0 0.0
        %1728 = vmatpush1.xpose.msra.mxu0 0.0
        %1729 = vmatprep.subr.mxu0 0.0
        %1730 = vmatpush1.xpose.msra.mxu0 0.0
        %1731 = vmatprep.subr.mxu0 0.0
        %1732 = vmatpush1.xpose.msra.mxu0 0.0
        %1733 = vmatprep.subr.mxu0 0.0
        %1734 = vmatpush1.xpose.msra.mxu0 0.0
        %1735 = vmatprep.subr.mxu0 0.0
        %1736 = vmatpush1.xpose.msra.mxu0 0.0
        %1737 = vmatprep.subr.mxu0 0.0
        %1738 = vmatpush1.xpose.msra.mxu0 0.0
        %1739 = vmatprep.subr.mxu0 0.0
        %1740 = vmatpush1.xpose.msra.mxu0 0.0
        %1741 = vmatprep.subr.mxu0 0.0
        %1742 = vmatpush1.xpose.msra.mxu0 0.0
        %1743 = vmatprep.mubr.f32.mxu0 0.0
        %v1744 = vand.u32 %v272, 4294901760
        %1745 = vmatmul.mubr.f32.gmra.mrb[0].mxu0 %v1744
        %v1746 = vpop.f32.mrb[0].mxu0
        %v1747 = vadd.f32 %v1416, %v1746
        %v1748 = vpop.f32.mrb[0].mxu0
        %1749 = vmatprep.mubr.f32.mxu0 0.0
        %v1750 = vand.u32 %v275, 4294901760
        %1751 = vmatmul.mubr.f32.gmra.mrb[0].mxu0 %v1750
        %v1752 = vpop.f32.mrb[0].mxu0
        %v1753 = vadd.f32 %v1424, %v1752
        %v1754 = vpop.f32.mrb[0].mxu0
        %1755 = vmatprep.mubr.f32.mxu0 0.0
        %v1756 = vand.u32 %v278, 4294901760
        %1757 = vmatmul.mubr.f32.gmra.mrb[0].mxu0 %v1756
        %v1758 = vpop.f32.mrb[0].mxu0
        %v1759 = vadd.f32 %v1432, %v1758
        %v1760 = vpop.f32.mrb[0].mxu0
        %1761 = vmatprep.mubr.f32.mxu0 0.0
        %v1762 = vand.u32 %v281, 4294901760
        %1763 = vmatmul.mubr.f32.gmra.mrb[0].mxu0 %v1762
        %v1764 = vpop.f32.mrb[0].mxu0
        %v1765 = vadd.f32 %v1440, %v1764
        %v1766 = vpop.f32.mrb[0].mxu0
        %1767 = vmatprep.mubr.f32.mxu0 0.0
        %v1768 = vand.u32 %v284, 4294901760
        %1769 = vmatmul.mubr.f32.gmra.mrb[0].mxu0 %v1768
        %v1770 = vpop.f32.mrb[0].mxu0
        %v1771 = vadd.f32 %v1448, %v1770
        %v1772 = vpop.f32.mrb[0].mxu0
        %1773 = vmatprep.mubr.f32.mxu0 0.0
        %v1774 = vand.u32 %v287, 4294901760
        %1775 = vmatmul.mubr.f32.gmra.mrb[0].mxu0 %v1774
        %v1776 = vpop.f32.mrb[0].mxu0
        %v1777 = vadd.f32 %v1456, %v1776
        %v1778 = vpop.f32.mrb[0].mxu0
        %1779 = vmatprep.mubr.f32.mxu0 0.0
        %v1780 = vand.u32 %v290, 4294901760
        %1781 = vmatmul.mubr.f32.gmra.mrb[0].mxu0 %v1780
        %v1782 = vpop.f32.mrb[0].mxu0
        %v1783 = vadd.f32 %v1464, %v1782
        %v1784 = vpop.f32.mrb[0].mxu0
        %1785 = vmatprep.mubr.f32.mxu0 0.0
        %v1786 = vand.u32 %v293, 4294901760
        %1787 = vmatmul.mubr.f32.gmra.mrb[0].mxu0 %v1786
        %v1788 = vpop.f32.mrb[0].mxu0
        %v1789 = vadd.f32 %v1472, %v1788
        %v1790 = vpop.f32.mrb[0].mxu0
        %1791 = vmatprep.mubr.f32.mxu0 0.0
        %v1792 = vand.u32 %v296, 4294901760
        %1793 = vmatmul.mubr.f32.gmra.mrb[0].mxu0 %v1792
        %v1794 = vpop.f32.mrb[0].mxu0
        %v1795 = vadd.f32 %v1480, %v1794
        %v1796 = vpop.f32.mrb[0].mxu0
        %1797 = vmatprep.mubr.f32.mxu0 0.0
        %v1798 = vand.u32 %v299, 4294901760
        %1799 = vmatmul.mubr.f32.gmra.mrb[0].mxu0 %v1798
        %v1800 = vpop.f32.mrb[0].mxu0
        %v1801 = vadd.f32 %v1488, %v1800
        %v1802 = vpop.f32.mrb[0].mxu0
        %1803 = vmatprep.mubr.f32.mxu0 0.0
        %v1804 = vand.u32 %v302, 4294901760
        %1805 = vmatmul.mubr.f32.gmra.mrb[0].mxu0 %v1804
        %v1806 = vpop.f32.mrb[0].mxu0
        %v1807 = vadd.f32 %v1496, %v1806
        %v1808 = vpop.f32.mrb[0].mxu0
        %1809 = vmatprep.mubr.f32.mxu0 0.0
        %v1810 = vand.u32 %v305, 4294901760
        %1811 = vmatmul.mubr.f32.gmra.mrb[0].mxu0 %v1810
        %v1812 = vpop.f32.mrb[0].mxu0
        %v1813 = vadd.f32 %v1504, %v1812
        %v1814 = vpop.f32.mrb[0].mxu0
        %1815 = vmatprep.mubr.f32.mxu0 0.0
        %v1816 = vand.u32 %v308, 4294901760
        %1817 = vmatmul.mubr.f32.gmra.mrb[0].mxu0 %v1816
        %v1818 = vpop.f32.mrb[0].mxu0
        %v1819 = vadd.f32 %v1512, %v1818
        %v1820 = vpop.f32.mrb[0].mxu0
        %1821 = vmatprep.mubr.f32.mxu0 0.0
        %v1822 = vand.u32 %v311, 4294901760
        %1823 = vmatmul.mubr.f32.gmra.mrb[0].mxu0 %v1822
        %v1824 = vpop.f32.mrb[0].mxu0
        %v1825 = vadd.f32 %v1520, %v1824
        %v1826 = vpop.f32.mrb[0].mxu0
        %1827 = vmatprep.mubr.f32.mxu0 0.0
        %v1828 = vand.u32 %v314, 4294901760
        %1829 = vmatmul.mubr.f32.gmra.mrb[0].mxu0 %v1828
        %v1830 = vpop.f32.mrb[0].mxu0
        %v1831 = vadd.f32 %v1528, %v1830
        %v1832 = vpop.f32.mrb[0].mxu0
        %1833 = vmatprep.mubr.f32.mxu0 0.0
        %v1834 = vand.u32 %v317, 4294901760
        %1835 = vmatmul.mubr.f32.gmra.mrb[0].mxu0 %v1834
        %v1836 = vpop.f32.mrb[0].mxu0
        %v1837 = vadd.f32 %v1536, %v1836
        %v1838 = vpop.f32.mrb[0].mxu0
        %1839 = vmatprep.mubr.f32.mxu0 0.0
        %v1840 = vand.u32 %v320, 4294901760
        %1841 = vmatmul.mubr.f32.gmra.mrb[0].mxu0 %v1840
        %v1842 = vpop.f32.mrb[0].mxu0
        %v1843 = vadd.f32 %v1544, %v1842
        %v1844 = vpop.f32.mrb[0].mxu0
        %1845 = vmatprep.mubr.f32.mxu0 0.0
        %v1846 = vand.u32 %v323, 4294901760
        %1847 = vmatmul.mubr.f32.gmra.mrb[0].mxu0 %v1846
        %v1848 = vpop.f32.mrb[0].mxu0
        %v1849 = vadd.f32 %v1552, %v1848
        %v1850 = vpop.f32.mrb[0].mxu0
        %1851 = vmatprep.mubr.f32.mxu0 0.0
        %v1852 = vand.u32 %v326, 4294901760
        %1853 = vmatmul.mubr.f32.gmra.mrb[0].mxu0 %v1852
        %v1854 = vpop.f32.mrb[0].mxu0
        %v1855 = vadd.f32 %v1560, %v1854
        %v1856 = vpop.f32.mrb[0].mxu0
        %1857 = vmatprep.mubr.f32.mxu0 0.0
        %v1858 = vand.u32 %v329, 4294901760
        %1859 = vmatmul.mubr.f32.gmra.mrb[0].mxu0 %v1858
        %v1860 = vpop.f32.mrb[0].mxu0
        %v1861 = vadd.f32 %v1568, %v1860
        %v1862 = vpop.f32.mrb[0].mxu0
        %1863 = vmatprep.mubr.f32.mxu0 0.0
        %v1864 = vand.u32 %v332, 4294901760
        %1865 = vmatmul.mubr.f32.gmra.mrb[0].mxu0 %v1864
        %v1866 = vpop.f32.mrb[0].mxu0
        %v1867 = vadd.f32 %v1576, %v1866
        %v1868 = vpop.f32.mrb[0].mxu0
        %1869 = vmatprep.mubr.f32.mxu0 0.0
        %v1870 = vand.u32 %v335, 4294901760
        %1871 = vmatmul.mubr.f32.gmra.mrb[0].mxu0 %v1870
        %v1872 = vpop.f32.mrb[0].mxu0
        %v1873 = vadd.f32 %v1584, %v1872
        %v1874 = vpop.f32.mrb[0].mxu0
        %1875 = vmatprep.mubr.f32.mxu0 0.0
        %v1876 = vand.u32 %v338, 4294901760
        %1877 = vmatmul.mubr.f32.gmra.mrb[0].mxu0 %v1876
        %v1878 = vpop.f32.mrb[0].mxu0
        %v1879 = vadd.f32 %v1592, %v1878
        %v1880 = vpop.f32.mrb[0].mxu0
        %1881 = vmatprep.mubr.f32.mxu0 0.0
        %v1882 = vand.u32 %v341, 4294901760
        %1883 = vmatmul.mubr.f32.gmra.mrb[0].mxu0 %v1882
        %v1884 = vpop.f32.mrb[0].mxu0
        %v1885 = vadd.f32 %v1600, %v1884
        %v1886 = vpop.f32.mrb[0].mxu0
        %1887 = vmatprep.mubr.f32.mxu0 0.0
        %v1888 = vand.u32 %v344, 4294901760
        %1889 = vmatmul.mubr.f32.gmra.mrb[0].mxu0 %v1888
        %v1890 = vpop.f32.mrb[0].mxu0
        %v1891 = vadd.f32 %v1608, %v1890
        %v1892 = vpop.f32.mrb[0].mxu0
        %1893 = vmatprep.mubr.f32.mxu0 0.0
        %v1894 = vand.u32 %v347, 4294901760
        %1895 = vmatmul.mubr.f32.gmra.mrb[0].mxu0 %v1894
        %v1896 = vpop.f32.mrb[0].mxu0
        %v1897 = vadd.f32 %v1616, %v1896
        %v1898 = vpop.f32.mrb[0].mxu0
        %1899 = vmatprep.mubr.f32.mxu0 0.0
        %v1900 = vand.u32 %v350, 4294901760
        %1901 = vmatmul.mubr.f32.gmra.mrb[0].mxu0 %v1900
        %v1902 = vpop.f32.mrb[0].mxu0
        %v1903 = vadd.f32 %v1624, %v1902
        %v1904 = vpop.f32.mrb[0].mxu0
        %1905 = vmatprep.mubr.f32.mxu0 0.0
        %v1906 = vand.u32 %v353, 4294901760
        %1907 = vmatmul.mubr.f32.gmra.mrb[0].mxu0 %v1906
        %v1908 = vpop.f32.mrb[0].mxu0
        %v1909 = vadd.f32 %v1632, %v1908
        %v1910 = vpop.f32.mrb[0].mxu0
        %1911 = vmatprep.mubr.f32.mxu0 0.0
        %v1912 = vand.u32 %v356, 4294901760
        %1913 = vmatmul.mubr.f32.gmra.mrb[0].mxu0 %v1912
        %v1914 = vpop.f32.mrb[0].mxu0
        %v1915 = vadd.f32 %v1640, %v1914
        %v1916 = vpop.f32.mrb[0].mxu0
        %1917 = vmatprep.mubr.f32.mxu0 0.0
        %v1918 = vand.u32 %v359, 4294901760
        %1919 = vmatmul.mubr.f32.gmra.mrb[0].mxu0 %v1918
        %v1920 = vpop.f32.mrb[0].mxu0
        %v1921 = vadd.f32 %v1648, %v1920
        %v1922 = vpop.f32.mrb[0].mxu0
        %1923 = vmatprep.mubr.f32.mxu0 0.0
        %v1924 = vand.u32 %v362, 4294901760
        %1925 = vmatmul.mubr.f32.gmra.mrb[0].mxu0 %v1924
        %v1926 = vpop.f32.mrb[0].mxu0
        %v1927 = vadd.f32 %v1656, %v1926
        %v1928 = vpop.f32.mrb[0].mxu0
        %1929 = vmatprep.mubr.f32.mxu0 0.0
        %v1930 = vand.u32 %v365, 4294901760
        %1931 = vmatmul.mubr.f32.gmra.mrb[0].mxu0 %v1930
        %v1932 = vpop.f32.mrb[0].mxu0
        %v1933 = vadd.f32 %v1664, %v1932
        %v1934 = vpop.f32.mrb[0].mxu0
        %1935 = vdwg.mxu0
        %1936 = vmatprep.subr.mxu0 0.0
        %v1937 = vand.u32 %v368, 4294901760
        %1938 = vmatpush1.xpose.msra.mxu0 %v1937
        %1939 = vmatprep.subr.mxu0 0.0
        %v1940 = vand.u32 %v371, 4294901760
        %1941 = vmatpush1.xpose.msra.mxu0 %v1940
        %1942 = vmatprep.subr.mxu0 0.0
        %v1943 = vand.u32 %v374, 4294901760
        %1944 = vmatpush1.xpose.msra.mxu0 %v1943
        %1945 = vmatprep.subr.mxu0 0.0
        %v1946 = vand.u32 %v377, 4294901760
        %1947 = vmatpush1.xpose.msra.mxu0 %v1946
        %1948 = vmatprep.subr.mxu0 0.0
        %1949 = vmatpush1.xpose.msra.mxu0 0.0
        %1950 = vmatprep.subr.mxu0 0.0
        %1951 = vmatpush1.xpose.msra.mxu0 0.0
        %1952 = vmatprep.subr.mxu0 0.0
        %1953 = vmatpush1.xpose.msra.mxu0 0.0
        %1954 = vmatprep.subr.mxu0 0.0
        %1955 = vmatpush1.xpose.msra.mxu0 0.0
        %1956 = vmatprep.subr.mxu0 0.0
        %1957 = vmatpush1.xpose.msra.mxu0 0.0
        %1958 = vmatprep.subr.mxu0 0.0
        %1959 = vmatpush1.xpose.msra.mxu0 0.0
        %1960 = vmatprep.subr.mxu0 0.0
        %1961 = vmatpush1.xpose.msra.mxu0 0.0
        %1962 = vmatprep.subr.mxu0 0.0
        %1963 = vmatpush1.xpose.msra.mxu0 0.0
        %1964 = vmatprep.subr.mxu0 0.0
        %1965 = vmatpush1.xpose.msra.mxu0 0.0
        %1966 = vmatprep.subr.mxu0 0.0
        %1967 = vmatpush1.xpose.msra.mxu0 0.0
        %1968 = vmatprep.subr.mxu0 0.0
        %1969 = vmatpush1.xpose.msra.mxu0 0.0
        %1970 = vmatprep.subr.mxu0 0.0
        %1971 = vmatpush1.xpose.msra.mxu0 0.0
        %1972 = vmatprep.subr.mxu0 0.0
        %1973 = vmatpush1.xpose.msra.mxu0 0.0
        %1974 = vmatprep.subr.mxu0 0.0
        %1975 = vmatpush1.xpose.msra.mxu0 0.0
        %1976 = vmatprep.subr.mxu0 0.0
        %1977 = vmatpush1.xpose.msra.mxu0 0.0
        %1978 = vmatprep.subr.mxu0 0.0
        %1979 = vmatpush1.xpose.msra.mxu0 0.0
        %1980 = vmatprep.subr.mxu0 0.0
        %1981 = vmatpush1.xpose.msra.mxu0 0.0
        %1982 = vmatprep.subr.mxu0 0.0
        %1983 = vmatpush1.xpose.msra.mxu0 0.0
        %1984 = vmatprep.subr.mxu0 0.0
        %1985 = vmatpush1.xpose.msra.mxu0 0.0
        %1986 = vmatprep.subr.mxu0 0.0
        %1987 = vmatpush1.xpose.msra.mxu0 0.0
        %1988 = vmatprep.subr.mxu0 0.0
        %1989 = vmatpush1.xpose.msra.mxu0 0.0
        %1990 = vmatprep.subr.mxu0 0.0
        %1991 = vmatpush1.xpose.msra.mxu0 0.0
        %1992 = vmatprep.subr.mxu0 0.0
        %1993 = vmatpush1.xpose.msra.mxu0 0.0
        %1994 = vmatprep.subr.mxu0 0.0
        %1995 = vmatpush1.xpose.msra.mxu0 0.0
        %1996 = vmatprep.subr.mxu0 0.0
        %1997 = vmatpush1.xpose.msra.mxu0 0.0
        %1998 = vmatprep.subr.mxu0 0.0
        %1999 = vmatpush1.xpose.msra.mxu0 0.0
        %2000 = vmatprep.subr.mxu0 0.0
        %2001 = vmatpush1.xpose.msra.mxu0 0.0
        %2002 = vmatprep.subr.mxu0 0.0
        %2003 = vmatpush1.xpose.msra.mxu0 0.0
        %2004 = vmatprep.mubr.f32.mxu0 0.0
        %v2005 = vand.u32 %v272, 4294901760
        %2006 = vmatmul.mubr.f32.gmra.mrb[0].mxu0 %v2005
        %v2007 = vpop.f32.mrb[0].mxu0
        %v2008 = vadd.f32 %v1747, %v2007
        %v2009 = vpop.f32.mrb[0].mxu0
        %2010 = vmatprep.mubr.f32.mxu0 0.0
        %v2011 = vand.u32 %v275, 4294901760
        %2012 = vmatmul.mubr.f32.gmra.mrb[0].mxu0 %v2011
        %v2013 = vpop.f32.mrb[0].mxu0
        %v2014 = vadd.f32 %v1753, %v2013
        %v2015 = vpop.f32.mrb[0].mxu0
        %2016 = vmatprep.mubr.f32.mxu0 0.0
        %v2017 = vand.u32 %v278, 4294901760
        %2018 = vmatmul.mubr.f32.gmra.mrb[0].mxu0 %v2017
        %v2019 = vpop.f32.mrb[0].mxu0
        %v2020 = vadd.f32 %v1759, %v2019
        %v2021 = vpop.f32.mrb[0].mxu0
        %2022 = vmatprep.mubr.f32.mxu0 0.0
        %v2023 = vand.u32 %v281, 4294901760
        %2024 = vmatmul.mubr.f32.gmra.mrb[0].mxu0 %v2023
        %v2025 = vpop.f32.mrb[0].mxu0
        %v2026 = vadd.f32 %v1765, %v2025
        %v2027 = vpop.f32.mrb[0].mxu0
        %2028 = vmatprep.mubr.f32.mxu0 0.0
        %v2029 = vand.u32 %v284, 4294901760
        %2030 = vmatmul.mubr.f32.gmra.mrb[0].mxu0 %v2029
        %v2031 = vpop.f32.mrb[0].mxu0
        %v2032 = vadd.f32 %v1771, %v2031
        %v2033 = vpop.f32.mrb[0].mxu0
        %2034 = vmatprep.mubr.f32.mxu0 0.0
        %v2035 = vand.u32 %v287, 4294901760
        %2036 = vmatmul.mubr.f32.gmra.mrb[0].mxu0 %v2035
        %v2037 = vpop.f32.mrb[0].mxu0
        %v2038 = vadd.f32 %v1777, %v2037
        %v2039 = vpop.f32.mrb[0].mxu0
        %2040 = vmatprep.mubr.f32.mxu0 0.0
        %v2041 = vand.u32 %v290, 4294901760
        %2042 = vmatmul.mubr.f32.gmra.mrb[0].mxu0 %v2041
        %v2043 = vpop.f32.mrb[0].mxu0
        %v2044 = vadd.f32 %v1783, %v2043
        %v2045 = vpop.f32.mrb[0].mxu0
        %2046 = vmatprep.mubr.f32.mxu0 0.0
        %v2047 = vand.u32 %v293, 4294901760
        %2048 = vmatmul.mubr.f32.gmra.mrb[0].mxu0 %v2047
        %v2049 = vpop.f32.mrb[0].mxu0
        %v2050 = vadd.f32 %v1789, %v2049
        %v2051 = vpop.f32.mrb[0].mxu0
        %2052 = vmatprep.mubr.f32.mxu0 0.0
        %v2053 = vand.u32 %v296, 4294901760
        %2054 = vmatmul.mubr.f32.gmra.mrb[0].mxu0 %v2053
        %v2055 = vpop.f32.mrb[0].mxu0
        %v2056 = vadd.f32 %v1795, %v2055
        %v2057 = vpop.f32.mrb[0].mxu0
        %2058 = vmatprep.mubr.f32.mxu0 0.0
        %v2059 = vand.u32 %v299, 4294901760
        %2060 = vmatmul.mubr.f32.gmra.mrb[0].mxu0 %v2059
        %v2061 = vpop.f32.mrb[0].mxu0
        %v2062 = vadd.f32 %v1801, %v2061
        %v2063 = vpop.f32.mrb[0].mxu0
        %2064 = vmatprep.mubr.f32.mxu0 0.0
        %v2065 = vand.u32 %v302, 4294901760
        %2066 = vmatmul.mubr.f32.gmra.mrb[0].mxu0 %v2065
        %v2067 = vpop.f32.mrb[0].mxu0
        %v2068 = vadd.f32 %v1807, %v2067
        %v2069 = vpop.f32.mrb[0].mxu0
        %2070 = vmatprep.mubr.f32.mxu0 0.0
        %v2071 = vand.u32 %v305, 4294901760
        %2072 = vmatmul.mubr.f32.gmra.mrb[0].mxu0 %v2071
        %v2073 = vpop.f32.mrb[0].mxu0
        %v2074 = vadd.f32 %v1813, %v2073
        %v2075 = vpop.f32.mrb[0].mxu0
        %2076 = vmatprep.mubr.f32.mxu0 0.0
        %v2077 = vand.u32 %v308, 4294901760
        %2078 = vmatmul.mubr.f32.gmra.mrb[0].mxu0 %v2077
        %v2079 = vpop.f32.mrb[0].mxu0
        %v2080 = vadd.f32 %v1819, %v2079
        %v2081 = vpop.f32.mrb[0].mxu0
        %2082 = vmatprep.mubr.f32.mxu0 0.0
        %v2083 = vand.u32 %v311, 4294901760
        %2084 = vmatmul.mubr.f32.gmra.mrb[0].mxu0 %v2083
        %v2085 = vpop.f32.mrb[0].mxu0
        %v2086 = vadd.f32 %v1825, %v2085
        %v2087 = vpop.f32.mrb[0].mxu0
        %2088 = vmatprep.mubr.f32.mxu0 0.0
        %v2089 = vand.u32 %v314, 4294901760
        %2090 = vmatmul.mubr.f32.gmra.mrb[0].mxu0 %v2089
        %v2091 = vpop.f32.mrb[0].mxu0
        %v2092 = vadd.f32 %v1831, %v2091
        %v2093 = vpop.f32.mrb[0].mxu0
        %2094 = vmatprep.mubr.f32.mxu0 0.0
        %v2095 = vand.u32 %v317, 4294901760
        %2096 = vmatmul.mubr.f32.gmra.mrb[0].mxu0 %v2095
        %v2097 = vpop.f32.mrb[0].mxu0
        %v2098 = vadd.f32 %v1837, %v2097
        %v2099 = vpop.f32.mrb[0].mxu0
        %2100 = vmatprep.mubr.f32.mxu0 0.0
        %v2101 = vand.u32 %v320, 4294901760
        %2102 = vmatmul.mubr.f32.gmra.mrb[0].mxu0 %v2101
        %v2103 = vpop.f32.mrb[0].mxu0
        %v2104 = vadd.f32 %v1843, %v2103
        %v2105 = vpop.f32.mrb[0].mxu0
        %2106 = vmatprep.mubr.f32.mxu0 0.0
        %v2107 = vand.u32 %v323, 4294901760
        %2108 = vmatmul.mubr.f32.gmra.mrb[0].mxu0 %v2107
        %v2109 = vpop.f32.mrb[0].mxu0
        %v2110 = vadd.f32 %v1849, %v2109
        %v2111 = vpop.f32.mrb[0].mxu0
        %2112 = vmatprep.mubr.f32.mxu0 0.0
        %v2113 = vand.u32 %v326, 4294901760
        %2114 = vmatmul.mubr.f32.gmra.mrb[0].mxu0 %v2113
        %v2115 = vpop.f32.mrb[0].mxu0
        %v2116 = vadd.f32 %v1855, %v2115
        %v2117 = vpop.f32.mrb[0].mxu0
        %2118 = vmatprep.mubr.f32.mxu0 0.0
        %v2119 = vand.u32 %v329, 4294901760
        %2120 = vmatmul.mubr.f32.gmra.mrb[0].mxu0 %v2119
        %v2121 = vpop.f32.mrb[0].mxu0
        %v2122 = vadd.f32 %v1861, %v2121
        %v2123 = vpop.f32.mrb[0].mxu0
        %2124 = vmatprep.mubr.f32.mxu0 0.0
        %v2125 = vand.u32 %v332, 4294901760
        %2126 = vmatmul.mubr.f32.gmra.mrb[0].mxu0 %v2125
        %v2127 = vpop.f32.mrb[0].mxu0
        %v2128 = vadd.f32 %v1867, %v2127
        %v2129 = vpop.f32.mrb[0].mxu0
        %2130 = vmatprep.mubr.f32.mxu0 0.0
        %v2131 = vand.u32 %v335, 4294901760
        %2132 = vmatmul.mubr.f32.gmra.mrb[0].mxu0 %v2131
        %v2133 = vpop.f32.mrb[0].mxu0
        %v2134 = vadd.f32 %v1873, %v2133
        %v2135 = vpop.f32.mrb[0].mxu0
        %2136 = vmatprep.mubr.f32.mxu0 0.0
        %v2137 = vand.u32 %v338, 4294901760
        %2138 = vmatmul.mubr.f32.gmra.mrb[0].mxu0 %v2137
        %v2139 = vpop.f32.mrb[0].mxu0
        %v2140 = vadd.f32 %v1879, %v2139
        %v2141 = vpop.f32.mrb[0].mxu0
        %2142 = vmatprep.mubr.f32.mxu0 0.0
        %v2143 = vand.u32 %v341, 4294901760
        %2144 = vmatmul.mubr.f32.gmra.mrb[0].mxu0 %v2143
        %v2145 = vpop.f32.mrb[0].mxu0
        %v2146 = vadd.f32 %v1885, %v2145
        %v2147 = vpop.f32.mrb[0].mxu0
        %2148 = vmatprep.mubr.f32.mxu0 0.0
        %v2149 = vand.u32 %v344, 4294901760
        %2150 = vmatmul.mubr.f32.gmra.mrb[0].mxu0 %v2149
        %v2151 = vpop.f32.mrb[0].mxu0
        %v2152 = vadd.f32 %v1891, %v2151
        %v2153 = vpop.f32.mrb[0].mxu0
        %2154 = vmatprep.mubr.f32.mxu0 0.0
        %v2155 = vand.u32 %v347, 4294901760
        %2156 = vmatmul.mubr.f32.gmra.mrb[0].mxu0 %v2155
        %v2157 = vpop.f32.mrb[0].mxu0
        %v2158 = vadd.f32 %v1897, %v2157
        %v2159 = vpop.f32.mrb[0].mxu0
        %2160 = vmatprep.mubr.f32.mxu0 0.0
        %v2161 = vand.u32 %v350, 4294901760
        %2162 = vmatmul.mubr.f32.gmra.mrb[0].mxu0 %v2161
        %v2163 = vpop.f32.mrb[0].mxu0
        %v2164 = vadd.f32 %v1903, %v2163
        %v2165 = vpop.f32.mrb[0].mxu0
        %2166 = vmatprep.mubr.f32.mxu0 0.0
        %v2167 = vand.u32 %v353, 4294901760
        %2168 = vmatmul.mubr.f32.gmra.mrb[0].mxu0 %v2167
        %v2169 = vpop.f32.mrb[0].mxu0
        %v2170 = vadd.f32 %v1909, %v2169
        %v2171 = vpop.f32.mrb[0].mxu0
        %2172 = vmatprep.mubr.f32.mxu0 0.0
        %v2173 = vand.u32 %v356, 4294901760
        %2174 = vmatmul.mubr.f32.gmra.mrb[0].mxu0 %v2173
        %v2175 = vpop.f32.mrb[0].mxu0
        %v2176 = vadd.f32 %v1915, %v2175
        %v2177 = vpop.f32.mrb[0].mxu0
        %2178 = vmatprep.mubr.f32.mxu0 0.0
        %v2179 = vand.u32 %v359, 4294901760
        %2180 = vmatmul.mubr.f32.gmra.mrb[0].mxu0 %v2179
        %v2181 = vpop.f32.mrb[0].mxu0
        %v2182 = vadd.f32 %v1921, %v2181
        %v2183 = vpop.f32.mrb[0].mxu0
        %2184 = vmatprep.mubr.f32.mxu0 0.0
        %v2185 = vand.u32 %v362, 4294901760
        %2186 = vmatmul.mubr.f32.gmra.mrb[0].mxu0 %v2185
        %v2187 = vpop.f32.mrb[0].mxu0
        %v2188 = vadd.f32 %v1927, %v2187
        %v2189 = vpop.f32.mrb[0].mxu0
        %2190 = vmatprep.mubr.f32.mxu0 0.0
        %v2191 = vand.u32 %v365, 4294901760
        %2192 = vmatmul.mubr.f32.gmra.mrb[0].mxu0 %v2191
        %v2193 = vpop.f32.mrb[0].mxu0
        %v2194 = vadd.f32 %v1933, %v2193
        %v2195 = vpop.f32.mrb[0].mxu0
        %2196 = vdwg.mxu0
        %v2197 = vmax.f32 %v2008, 0.0
        %v2198 = vmax.f32 %v2014, 0.0
        %v2199 = vmax.f32 %v2020, 0.0
        %v2200 = vmax.f32 %v2026, 0.0
        %v2201 = vmax.f32 %v2032, 0.0
        %v2202 = vmax.f32 %v2038, 0.0
        %v2203 = vmax.f32 %v2044, 0.0
        %v2204 = vmax.f32 %v2050, 0.0
        %v2205 = vmax.f32 %v2056, 0.0
        %v2206 = vmax.f32 %v2062, 0.0
        %v2207 = vmax.f32 %v2068, 0.0
        %v2208 = vmax.f32 %v2074, 0.0
        %v2209 = vmax.f32 %v2080, 0.0
        %v2210 = vmax.f32 %v2086, 0.0
        %v2211 = vmax.f32 %v2092, 0.0
        %v2212 = vmax.f32 %v2098, 0.0
        %v2213 = vmax.f32 %v2104, 0.0
        %v2214 = vmax.f32 %v2110, 0.0
        %v2215 = vmax.f32 %v2116, 0.0
        %v2216 = vmax.f32 %v2122, 0.0
        %v2217 = vmax.f32 %v2128, 0.0
        %v2218 = vmax.f32 %v2134, 0.0
        %v2219 = vmax.f32 %v2140, 0.0
        %v2220 = vmax.f32 %v2146, 0.0
        %v2221 = vmax.f32 %v2152, 0.0
        %v2222 = vmax.f32 %v2158, 0.0
        %v2223 = vmax.f32 %v2164, 0.0
        %v2224 = vmax.f32 %v2170, 0.0
        %v2225 = vmax.f32 %v2176, 0.0
        %v2226 = vmax.f32 %v2182, 0.0
        %v2227 = vmax.f32 %v2188, 0.0
        %v2228 = vmax.f32 %v2194, 0.0
        %v2229 = vld [vmem:[%s3] sm:$0x1]
        %v2231 = vlaneseq
        %v2232 = vshrl.u32 %v2231, 7
        %v2233 = vsub.s32 0, %v2232
        %v2234 = vrot.slane %v2229, %v2233
        %v2236 = vmul.f32 %v2197, %v2234
        %v2237 = vmul.f32 %v2198, %v2234
        %v2238 = vmul.f32 %v2199, %v2234
        %v2239 = vmul.f32 %v2200, %v2234
        %v2240 = vmul.f32 %v2201, %v2234
        %v2241 = vmul.f32 %v2202, %v2234
        %v2242 = vmul.f32 %v2203, %v2234
        %v2243 = vmul.f32 %v2204, %v2234
        %v2244 = vmul.f32 %v2205, %v2234
        %v2245 = vmul.f32 %v2206, %v2234
        %v2246 = vmul.f32 %v2207, %v2234
        %v2247 = vmul.f32 %v2208, %v2234
        %v2248 = vmul.f32 %v2209, %v2234
        %v2249 = vmul.f32 %v2210, %v2234
        %v2250 = vmul.f32 %v2211, %v2234
        %v2251 = vmul.f32 %v2212, %v2234
        %v2252 = vmul.f32 %v2213, %v2234
        %v2253 = vmul.f32 %v2214, %v2234
        %v2254 = vmul.f32 %v2215, %v2234
        %v2255 = vmul.f32 %v2216, %v2234
        %v2256 = vmul.f32 %v2217, %v2234
        %v2257 = vmul.f32 %v2218, %v2234
        %v2258 = vmul.f32 %v2219, %v2234
        %v2259 = vmul.f32 %v2220, %v2234
        %v2260 = vmul.f32 %v2221, %v2234
        %v2261 = vmul.f32 %v2222, %v2234
        %v2262 = vmul.f32 %v2223, %v2234
        %v2263 = vmul.f32 %v2224, %v2234
        %v2264 = vmul.f32 %v2225, %v2234
        %v2265 = vmul.f32 %v2226, %v2234
        %v2266 = vmul.f32 %v2227, %v2234
        %v2267 = vmul.f32 %v2228, %v2234
        %vm2268 = vcmask 261120
        %v2269 = vsel %vm2268, %v2236, 0.0
        %2270 = vadd.xlane.f32.xlu0 %v2269
        %v2271 = vpop.xlane.xlu0 %2270
        %v2272 = vsel %vm2268, %v2237, 0.0
        %2273 = vadd.xlane.f32.xlu0 %v2272
        %v2274 = vpop.xlane.xlu0 %2273
        %v2275 = vsel %vm2268, %v2238, 0.0
        %2276 = vadd.xlane.f32.xlu0 %v2275
        %v2277 = vpop.xlane.xlu0 %2276
        %v2278 = vsel %vm2268, %v2239, 0.0
        %2279 = vadd.xlane.f32.xlu0 %v2278
        %v2280 = vpop.xlane.xlu0 %2279
        %v2281 = vsel %vm2268, %v2240, 0.0
        %2282 = vadd.xlane.f32.xlu0 %v2281
        %v2283 = vpop.xlane.xlu0 %2282
        %v2284 = vsel %vm2268, %v2241, 0.0
        %2285 = vadd.xlane.f32.xlu0 %v2284
        %v2286 = vpop.xlane.xlu0 %2285
        %v2287 = vsel %vm2268, %v2242, 0.0
        %2288 = vadd.xlane.f32.xlu0 %v2287
        %v2289 = vpop.xlane.xlu0 %2288
        %v2290 = vsel %vm2268, %v2243, 0.0
        %2291 = vadd.xlane.f32.xlu0 %v2290
        %v2292 = vpop.xlane.xlu0 %2291
        %v2293 = vsel %vm2268, %v2244, 0.0
        %2294 = vadd.xlane.f32.xlu0 %v2293
        %v2295 = vpop.xlane.xlu0 %2294
        %v2296 = vsel %vm2268, %v2245, 0.0
        %2297 = vadd.xlane.f32.xlu0 %v2296
        %v2298 = vpop.xlane.xlu0 %2297
        %v2299 = vsel %vm2268, %v2246, 0.0
        %2300 = vadd.xlane.f32.xlu0 %v2299
        %v2301 = vpop.xlane.xlu0 %2300
        %v2302 = vsel %vm2268, %v2247, 0.0
        %2303 = vadd.xlane.f32.xlu0 %v2302
        %v2304 = vpop.xlane.xlu0 %2303
        %v2305 = vsel %vm2268, %v2248, 0.0
        %2306 = vadd.xlane.f32.xlu0 %v2305
        %v2307 = vpop.xlane.xlu0 %2306
        %v2308 = vsel %vm2268, %v2249, 0.0
        %2309 = vadd.xlane.f32.xlu0 %v2308
        %v2310 = vpop.xlane.xlu0 %2309
        %v2311 = vsel %vm2268, %v2250, 0.0
        %2312 = vadd.xlane.f32.xlu0 %v2311
        %v2313 = vpop.xlane.xlu0 %2312
        %v2314 = vsel %vm2268, %v2251, 0.0
        %2315 = vadd.xlane.f32.xlu0 %v2314
        %v2316 = vpop.xlane.xlu0 %2315
        %v2317 = vsel %vm2268, %v2252, 0.0
        %2318 = vadd.xlane.f32.xlu0 %v2317
        %v2319 = vpop.xlane.xlu0 %2318
        %v2320 = vsel %vm2268, %v2253, 0.0
        %2321 = vadd.xlane.f32.xlu0 %v2320
        %v2322 = vpop.xlane.xlu0 %2321
        %v2323 = vsel %vm2268, %v2254, 0.0
        %2324 = vadd.xlane.f32.xlu0 %v2323
        %v2325 = vpop.xlane.xlu0 %2324
        %v2326 = vsel %vm2268, %v2255, 0.0
        %2327 = vadd.xlane.f32.xlu0 %v2326
        %v2328 = vpop.xlane.xlu0 %2327
        %v2329 = vsel %vm2268, %v2256, 0.0
        %2330 = vadd.xlane.f32.xlu0 %v2329
        %v2331 = vpop.xlane.xlu0 %2330
        %v2332 = vsel %vm2268, %v2257, 0.0
        %2333 = vadd.xlane.f32.xlu0 %v2332
        %v2334 = vpop.xlane.xlu0 %2333
        %v2335 = vsel %vm2268, %v2258, 0.0
        %2336 = vadd.xlane.f32.xlu0 %v2335
        %v2337 = vpop.xlane.xlu0 %2336
        %v2338 = vsel %vm2268, %v2259, 0.0
        %2339 = vadd.xlane.f32.xlu0 %v2338
        %v2340 = vpop.xlane.xlu0 %2339
        %v2341 = vsel %vm2268, %v2260, 0.0
        %2342 = vadd.xlane.f32.xlu0 %v2341
        %v2343 = vpop.xlane.xlu0 %2342
        %v2344 = vsel %vm2268, %v2261, 0.0
        %2345 = vadd.xlane.f32.xlu0 %v2344
        %v2346 = vpop.xlane.xlu0 %2345
        %v2347 = vsel %vm2268, %v2262, 0.0
        %2348 = vadd.xlane.f32.xlu0 %v2347
        %v2349 = vpop.xlane.xlu0 %2348
        %v2350 = vsel %vm2268, %v2263, 0.0
        %2351 = vadd.xlane.f32.xlu0 %v2350
        %v2352 = vpop.xlane.xlu0 %2351
        %v2353 = vsel %vm2268, %v2264, 0.0
        %2354 = vadd.xlane.f32.xlu0 %v2353
        %v2355 = vpop.xlane.xlu0 %2354
        %v2356 = vsel %vm2268, %v2265, 0.0
        %2357 = vadd.xlane.f32.xlu0 %v2356
        %v2358 = vpop.xlane.xlu0 %2357
        %v2359 = vsel %vm2268, %v2266, 0.0
        %2360 = vadd.xlane.f32.xlu0 %v2359
        %v2361 = vpop.xlane.xlu0 %2360
        %v2362 = vsel %vm2268, %v2267, 0.0
        %2363 = vadd.xlane.f32.xlu0 %v2362
        %v2364 = vpop.xlane.xlu0 %2363
        %s2365 = sld [smem:[#allocation2]]
        %v2366 = vstv %s2365
        %v2367 = vadd.f32 %v2271, %v2366
        %v2368 = vadd.f32 %v2274, %v2366
        %v2369 = vadd.f32 %v2277, %v2366
        %v2370 = vadd.f32 %v2280, %v2366
        %v2371 = vadd.f32 %v2283, %v2366
        %v2372 = vadd.f32 %v2286, %v2366
        %v2373 = vadd.f32 %v2289, %v2366
        %v2374 = vadd.f32 %v2292, %v2366
        %v2375 = vadd.f32 %v2295, %v2366
        %v2376 = vadd.f32 %v2298, %v2366
        %v2377 = vadd.f32 %v2301, %v2366
        %v2378 = vadd.f32 %v2304, %v2366
        %v2379 = vadd.f32 %v2307, %v2366
        %v2380 = vadd.f32 %v2310, %v2366
        %v2381 = vadd.f32 %v2313, %v2366
        %v2382 = vadd.f32 %v2316, %v2366
        %v2383 = vadd.f32 %v2319, %v2366
        %v2384 = vadd.f32 %v2322, %v2366
        %v2385 = vadd.f32 %v2325, %v2366
        %v2386 = vadd.f32 %v2328, %v2366
        %v2387 = vadd.f32 %v2331, %v2366
        %v2388 = vadd.f32 %v2334, %v2366
        %v2389 = vadd.f32 %v2337, %v2366
        %v2390 = vadd.f32 %v2340, %v2366
        %v2391 = vadd.f32 %v2343, %v2366
        %v2392 = vadd.f32 %v2346, %v2366
        %v2393 = vadd.f32 %v2349, %v2366
        %v2394 = vadd.f32 %v2352, %v2366
        %v2395 = vadd.f32 %v2355, %v2366
        %v2396 = vadd.f32 %v2358, %v2366
        %v2397 = vadd.f32 %v2361, %v2366
        %v2398 = vadd.f32 %v2364, %v2366
        %v2399 = vxor.u32 %v2367, 2147483648
        %v2400 = vxor.u32 %v2368, 2147483648
        %v2401 = vxor.u32 %v2369, 2147483648
        %v2402 = vxor.u32 %v2370, 2147483648
        %v2403 = vxor.u32 %v2371, 2147483648
        %v2404 = vxor.u32 %v2372, 2147483648
        %v2405 = vxor.u32 %v2373, 2147483648
        %v2406 = vxor.u32 %v2374, 2147483648
        %v2407 = vxor.u32 %v2375, 2147483648
        %v2408 = vxor.u32 %v2376, 2147483648
        %v2409 = vxor.u32 %v2377, 2147483648
        %v2410 = vxor.u32 %v2378, 2147483648
        %v2411 = vxor.u32 %v2379, 2147483648
        %v2412 = vxor.u32 %v2380, 2147483648
        %v2413 = vxor.u32 %v2381, 2147483648
        %v2414 = vxor.u32 %v2382, 2147483648
        %v2415 = vxor.u32 %v2383, 2147483648
        %v2416 = vxor.u32 %v2384, 2147483648
        %v2417 = vxor.u32 %v2385, 2147483648
        %v2418 = vxor.u32 %v2386, 2147483648
        %v2419 = vxor.u32 %v2387, 2147483648
        %v2420 = vxor.u32 %v2388, 2147483648
        %v2421 = vxor.u32 %v2389, 2147483648
        %v2422 = vxor.u32 %v2390, 2147483648
        %v2423 = vxor.u32 %v2391, 2147483648
        %v2424 = vxor.u32 %v2392, 2147483648
        %v2425 = vxor.u32 %v2393, 2147483648
        %v2426 = vxor.u32 %v2394, 2147483648
        %v2427 = vxor.u32 %v2395, 2147483648
        %v2428 = vxor.u32 %v2396, 2147483648
        %v2429 = vxor.u32 %v2397, 2147483648
        %v2430 = vxor.u32 %v2398, 2147483648
        %v2431 = vmul.f32 %v2399, 1.442695
        %v2432 = vpow.pop %v2431
        %v2433 = vmul.f32 %v2400, 1.442695
        %v2434 = vpow.pop %v2433
        %v2435 = vmul.f32 %v2401, 1.442695
        %v2436 = vpow.pop %v2435
        %v2437 = vmul.f32 %v2402, 1.442695
        %v2438 = vpow.pop %v2437
        %v2439 = vmul.f32 %v2403, 1.442695
        %v2440 = vpow.pop %v2439
        %v2441 = vmul.f32 %v2404, 1.442695
        %v2442 = vpow.pop %v2441
        %v2443 = vmul.f32 %v2405, 1.442695
        %v2444 = vpow.pop %v2443
        %v2445 = vmul.f32 %v2406, 1.442695
        %v2446 = vpow.pop %v2445
        %v2447 = vmul.f32 %v2407, 1.442695
        %v2448 = vpow.pop %v2447
        %v2449 = vmul.f32 %v2408, 1.442695
        %v2450 = vpow.pop %v2449
        %v2451 = vmul.f32 %v2409, 1.442695
        %v2452 = vpow.pop %v2451
        %v2453 = vmul.f32 %v2410, 1.442695
        %v2454 = vpow.pop %v2453
        %v2455 = vmul.f32 %v2411, 1.442695
        %v2456 = vpow.pop %v2455
        %v2457 = vmul.f32 %v2412, 1.442695
        %v2458 = vpow.pop %v2457
        %v2459 = vmul.f32 %v2413, 1.442695
        %v2460 = vpow.pop %v2459
        %v2461 = vmul.f32 %v2414, 1.442695
        %v2462 = vpow.pop %v2461
        %v2463 = vmul.f32 %v2415, 1.442695
        %v2464 = vpow.pop %v2463
        %v2465 = vmul.f32 %v2416, 1.442695
        %v2466 = vpow.pop %v2465
        %v2467 = vmul.f32 %v2417, 1.442695
        %v2468 = vpow.pop %v2467
        %v2469 = vmul.f32 %v2418, 1.442695
        %v2470 = vpow.pop %v2469
        %v2471 = vmul.f32 %v2419, 1.442695
        %v2472 = vpow.pop %v2471
        %v2473 = vmul.f32 %v2420, 1.442695
        %v2474 = vpow.pop %v2473
        %v2475 = vmul.f32 %v2421, 1.442695
        %v2476 = vpow.pop %v2475
        %v2477 = vmul.f32 %v2422, 1.442695
        %v2478 = vpow.pop %v2477
        %v2479 = vmul.f32 %v2423, 1.442695
        %v2480 = vpow.pop %v2479
        %v2481 = vmul.f32 %v2424, 1.442695
        %v2482 = vpow.pop %v2481
        %v2483 = vmul.f32 %v2425, 1.442695
        %v2484 = vpow.pop %v2483
        %v2485 = vmul.f32 %v2426, 1.442695
        %v2486 = vpow.pop %v2485
        %v2487 = vmul.f32 %v2427, 1.442695
        %v2488 = vpow.pop %v2487
        %v2489 = vmul.f32 %v2428, 1.442695
        %v2490 = vpow.pop %v2489
        %v2491 = vmul.f32 %v2429, 1.442695
        %v2492 = vpow.pop %v2491
        %v2493 = vmul.f32 %v2430, 1.442695
        %v2494 = vpow.pop %v2493
        %v2495 = vadd.f32 %v2432, 1.0
        %v2496 = vadd.f32 %v2434, 1.0
        %v2497 = vadd.f32 %v2436, 1.0
        %v2498 = vadd.f32 %v2438, 1.0
        %v2499 = vadd.f32 %v2440, 1.0
        %v2500 = vadd.f32 %v2442, 1.0
        %v2501 = vadd.f32 %v2444, 1.0
        %v2502 = vadd.f32 %v2446, 1.0
        %v2503 = vadd.f32 %v2448, 1.0
        %v2504 = vadd.f32 %v2450, 1.0
        %v2505 = vadd.f32 %v2452, 1.0
        %v2506 = vadd.f32 %v2454, 1.0
        %v2507 = vadd.f32 %v2456, 1.0
        %v2508 = vadd.f32 %v2458, 1.0
        %v2509 = vadd.f32 %v2460, 1.0
        %v2510 = vadd.f32 %v2462, 1.0
        %v2511 = vadd.f32 %v2464, 1.0
        %v2512 = vadd.f32 %v2466, 1.0
        %v2513 = vadd.f32 %v2468, 1.0
        %v2514 = vadd.f32 %v2470, 1.0
        %v2515 = vadd.f32 %v2472, 1.0
        %v2516 = vadd.f32 %v2474, 1.0
        %v2517 = vadd.f32 %v2476, 1.0
        %v2518 = vadd.f32 %v2478, 1.0
        %v2519 = vadd.f32 %v2480, 1.0
        %v2520 = vadd.f32 %v2482, 1.0
        %v2521 = vadd.f32 %v2484, 1.0
        %v2522 = vadd.f32 %v2486, 1.0
        %v2523 = vadd.f32 %v2488, 1.0
        %v2524 = vadd.f32 %v2490, 1.0
        %v2525 = vadd.f32 %v2492, 1.0
        %v2526 = vadd.f32 %v2494, 1.0
        %v2527 = vrcp.pop %v2495
        %v2528 = vmul.f32 1.0, %v2527
        %v2529 = vrcp.pop %v2496
        %v2530 = vmul.f32 1.0, %v2529
        %v2531 = vrcp.pop %v2497
        %v2532 = vmul.f32 1.0, %v2531
        %v2533 = vrcp.pop %v2498
        %v2534 = vmul.f32 1.0, %v2533
        %v2535 = vrcp.pop %v2499
        %v2536 = vmul.f32 1.0, %v2535
        %v2537 = vrcp.pop %v2500
        %v2538 = vmul.f32 1.0, %v2537
        %v2539 = vrcp.pop %v2501
        %v2540 = vmul.f32 1.0, %v2539
        %v2541 = vrcp.pop %v2502
        %v2542 = vmul.f32 1.0, %v2541
        %v2543 = vrcp.pop %v2503
        %v2544 = vmul.f32 1.0, %v2543
        %v2545 = vrcp.pop %v2504
        %v2546 = vmul.f32 1.0, %v2545
        %v2547 = vrcp.pop %v2505
        %v2548 = vmul.f32 1.0, %v2547
        %v2549 = vrcp.pop %v2506
        %v2550 = vmul.f32 1.0, %v2549
        %v2551 = vrcp.pop %v2507
        %v2552 = vmul.f32 1.0, %v2551
        %v2553 = vrcp.pop %v2508
        %v2554 = vmul.f32 1.0, %v2553
        %v2555 = vrcp.pop %v2509
        %v2556 = vmul.f32 1.0, %v2555
        %v2557 = vrcp.pop %v2510
        %v2558 = vmul.f32 1.0, %v2557
        %v2559 = vrcp.pop %v2511
        %v2560 = vmul.f32 1.0, %v2559
        %v2561 = vrcp.pop %v2512
        %v2562 = vmul.f32 1.0, %v2561
        %v2563 = vrcp.pop %v2513
        %v2564 = vmul.f32 1.0, %v2563
        %v2565 = vrcp.pop %v2514
        %v2566 = vmul.f32 1.0, %v2565
        %v2567 = vrcp.pop %v2515
        %v2568 = vmul.f32 1.0, %v2567
        %v2569 = vrcp.pop %v2516
        %v2570 = vmul.f32 1.0, %v2569
        %v2571 = vrcp.pop %v2517
        %v2572 = vmul.f32 1.0, %v2571
        %v2573 = vrcp.pop %v2518
        %v2574 = vmul.f32 1.0, %v2573
        %v2575 = vrcp.pop %v2519
        %v2576 = vmul.f32 1.0, %v2575
        %v2577 = vrcp.pop %v2520
        %v2578 = vmul.f32 1.0, %v2577
        %v2579 = vrcp.pop %v2521
        %v2580 = vmul.f32 1.0, %v2579
        %v2581 = vrcp.pop %v2522
        %v2582 = vmul.f32 1.0, %v2581
        %v2583 = vrcp.pop %v2523
        %v2584 = vmul.f32 1.0, %v2583
        %v2585 = vrcp.pop %v2524
        %v2586 = vmul.f32 1.0, %v2585
        %v2587 = vrcp.pop %v2525
        %v2588 = vmul.f32 1.0, %v2587
        %v2589 = vrcp.pop %v2526
        %v2590 = vmul.f32 1.0, %v2589
        %v2623 = vlaneseq
        %v2624 = vshrl.u32 %v2623, 7
        %v2625 = vsub.s32 0, %v2624
        %v2626 = vrot.slane %v2528, %v2625
        %v2627 = vlaneseq
        %v2628 = vshrl.u32 %v2627, 7
        %v2629 = vsub.s32 1, %v2628
        %v2630 = vrot.slane %v2528, %v2629
        %v2631 = vlaneseq
        %v2632 = vshrl.u32 %v2631, 7
        %v2633 = vsub.s32 2, %v2632
        %v2634 = vrot.slane %v2528, %v2633
        %v2635 = vlaneseq
        %v2636 = vshrl.u32 %v2635, 7
        %v2637 = vsub.s32 3, %v2636
        %v2638 = vrot.slane %v2528, %v2637
        %v2639 = vlaneseq
        %v2640 = vshrl.u32 %v2639, 7
        %v2641 = vsub.s32 4, %v2640
        %v2642 = vrot.slane %v2528, %v2641
        %v2643 = vlaneseq
        %v2644 = vshrl.u32 %v2643, 7
        %v2645 = vsub.s32 5, %v2644
        %v2646 = vrot.slane %v2528, %v2645
        %v2647 = vlaneseq
        %v2648 = vshrl.u32 %v2647, 7
        %v2649 = vsub.s32 6, %v2648
        %v2650 = vrot.slane %v2528, %v2649
        %v2651 = vlaneseq
        %v2652 = vshrl.u32 %v2651, 7
        %v2653 = vsub.s32 7, %v2652
        %v2654 = vrot.slane %v2528, %v2653
        %v2655 = vlaneseq
        %v2656 = vshrl.u32 %v2655, 7
        %v2657 = vsub.s32 0, %v2656
        %v2658 = vrot.slane %v2530, %v2657
        %v2659 = vlaneseq
        %v2660 = vshrl.u32 %v2659, 7
        %v2661 = vsub.s32 1, %v2660
        %v2662 = vrot.slane %v2530, %v2661
        %v2663 = vlaneseq
        %v2664 = vshrl.u32 %v2663, 7
        %v2665 = vsub.s32 2, %v2664
        %v2666 = vrot.slane %v2530, %v2665
        %v2667 = vlaneseq
        %v2668 = vshrl.u32 %v2667, 7
        %v2669 = vsub.s32 3, %v2668
        %v2670 = vrot.slane %v2530, %v2669
        %v2671 = vlaneseq
        %v2672 = vshrl.u32 %v2671, 7
        %v2673 = vsub.s32 4, %v2672
        %v2674 = vrot.slane %v2530, %v2673
        %v2675 = vlaneseq
        %v2676 = vshrl.u32 %v2675, 7
        %v2677 = vsub.s32 5, %v2676
        %v2678 = vrot.slane %v2530, %v2677
        %v2679 = vlaneseq
        %v2680 = vshrl.u32 %v2679, 7
        %v2681 = vsub.s32 6, %v2680
        %v2682 = vrot.slane %v2530, %v2681
        %v2683 = vlaneseq
        %v2684 = vshrl.u32 %v2683, 7
        %v2685 = vsub.s32 7, %v2684
        %v2686 = vrot.slane %v2530, %v2685
        %v2687 = vlaneseq
        %v2688 = vshrl.u32 %v2687, 7
        %v2689 = vsub.s32 0, %v2688
        %v2690 = vrot.slane %v2532, %v2689
        %v2691 = vlaneseq
        %v2692 = vshrl.u32 %v2691, 7
        %v2693 = vsub.s32 1, %v2692
        %v2694 = vrot.slane %v2532, %v2693
        %v2695 = vlaneseq
        %v2696 = vshrl.u32 %v2695, 7
        %v2697 = vsub.s32 2, %v2696
        %v2698 = vrot.slane %v2532, %v2697
        %v2699 = vlaneseq
        %v2700 = vshrl.u32 %v2699, 7
        %v2701 = vsub.s32 3, %v2700
        %v2702 = vrot.slane %v2532, %v2701
        %v2703 = vlaneseq
        %v2704 = vshrl.u32 %v2703, 7
        %v2705 = vsub.s32 4, %v2704
        %v2706 = vrot.slane %v2532, %v2705
        %v2707 = vlaneseq
        %v2708 = vshrl.u32 %v2707, 7
        %v2709 = vsub.s32 5, %v2708
        %v2710 = vrot.slane %v2532, %v2709
        %v2711 = vlaneseq
        %v2712 = vshrl.u32 %v2711, 7
        %v2713 = vsub.s32 6, %v2712
        %v2714 = vrot.slane %v2532, %v2713
        %v2715 = vlaneseq
        %v2716 = vshrl.u32 %v2715, 7
        %v2717 = vsub.s32 7, %v2716
        %v2718 = vrot.slane %v2532, %v2717
        %v2719 = vlaneseq
        %v2720 = vshrl.u32 %v2719, 7
        %v2721 = vsub.s32 0, %v2720
        %v2722 = vrot.slane %v2534, %v2721
        %v2723 = vlaneseq
        %v2724 = vshrl.u32 %v2723, 7
        %v2725 = vsub.s32 1, %v2724
        %v2726 = vrot.slane %v2534, %v2725
        %v2727 = vlaneseq
        %v2728 = vshrl.u32 %v2727, 7
        %v2729 = vsub.s32 2, %v2728
        %v2730 = vrot.slane %v2534, %v2729
        %v2731 = vlaneseq
        %v2732 = vshrl.u32 %v2731, 7
        %v2733 = vsub.s32 3, %v2732
        %v2734 = vrot.slane %v2534, %v2733
        %v2735 = vlaneseq
        %v2736 = vshrl.u32 %v2735, 7
        %v2737 = vsub.s32 4, %v2736
        %v2738 = vrot.slane %v2534, %v2737
        %v2739 = vlaneseq
        %v2740 = vshrl.u32 %v2739, 7
        %v2741 = vsub.s32 5, %v2740
        %v2742 = vrot.slane %v2534, %v2741
        %v2743 = vlaneseq
        %v2744 = vshrl.u32 %v2743, 7
        %v2745 = vsub.s32 6, %v2744
        %v2746 = vrot.slane %v2534, %v2745
        %v2747 = vlaneseq
        %v2748 = vshrl.u32 %v2747, 7
        %v2749 = vsub.s32 7, %v2748
        %v2750 = vrot.slane %v2534, %v2749
        %v2751 = vlaneseq
        %v2752 = vshrl.u32 %v2751, 7
        %v2753 = vsub.s32 0, %v2752
        %v2754 = vrot.slane %v2536, %v2753
        %v2755 = vlaneseq
        %v2756 = vshrl.u32 %v2755, 7
        %v2757 = vsub.s32 1, %v2756
        %v2758 = vrot.slane %v2536, %v2757
        %v2759 = vlaneseq
        %v2760 = vshrl.u32 %v2759, 7
        %v2761 = vsub.s32 2, %v2760
        %v2762 = vrot.slane %v2536, %v2761
        %v2763 = vlaneseq
        %v2764 = vshrl.u32 %v2763, 7
        %v2765 = vsub.s32 3, %v2764
        %v2766 = vrot.slane %v2536, %v2765
        %v2767 = vlaneseq
        %v2768 = vshrl.u32 %v2767, 7
        %v2769 = vsub.s32 4, %v2768
        %v2770 = vrot.slane %v2536, %v2769
        %v2771 = vlaneseq
        %v2772 = vshrl.u32 %v2771, 7
        %v2773 = vsub.s32 5, %v2772
        %v2774 = vrot.slane %v2536, %v2773
        %v2775 = vlaneseq
        %v2776 = vshrl.u32 %v2775, 7
        %v2777 = vsub.s32 6, %v2776
        %v2778 = vrot.slane %v2536, %v2777
        %v2779 = vlaneseq
        %v2780 = vshrl.u32 %v2779, 7
        %v2781 = vsub.s32 7, %v2780
        %v2782 = vrot.slane %v2536, %v2781
        %v2783 = vlaneseq
        %v2784 = vshrl.u32 %v2783, 7
        %v2785 = vsub.s32 0, %v2784
        %v2786 = vrot.slane %v2538, %v2785
        %v2787 = vlaneseq
        %v2788 = vshrl.u32 %v2787, 7
        %v2789 = vsub.s32 1, %v2788
        %v2790 = vrot.slane %v2538, %v2789
        %v2791 = vlaneseq
        %v2792 = vshrl.u32 %v2791, 7
        %v2793 = vsub.s32 2, %v2792
        %v2794 = vrot.slane %v2538, %v2793
        %v2795 = vlaneseq
        %v2796 = vshrl.u32 %v2795, 7
        %v2797 = vsub.s32 3, %v2796
        %v2798 = vrot.slane %v2538, %v2797
        %v2799 = vlaneseq
        %v2800 = vshrl.u32 %v2799, 7
        %v2801 = vsub.s32 4, %v2800
        %v2802 = vrot.slane %v2538, %v2801
        %v2803 = vlaneseq
        %v2804 = vshrl.u32 %v2803, 7
        %v2805 = vsub.s32 5, %v2804
        %v2806 = vrot.slane %v2538, %v2805
        %v2807 = vlaneseq
        %v2808 = vshrl.u32 %v2807, 7
        %v2809 = vsub.s32 6, %v2808
        %v2810 = vrot.slane %v2538, %v2809
        %v2811 = vlaneseq
        %v2812 = vshrl.u32 %v2811, 7
        %v2813 = vsub.s32 7, %v2812
        %v2814 = vrot.slane %v2538, %v2813
        %v2815 = vlaneseq
        %v2816 = vshrl.u32 %v2815, 7
        %v2817 = vsub.s32 0, %v2816
        %v2818 = vrot.slane %v2540, %v2817
        %v2819 = vlaneseq
        %v2820 = vshrl.u32 %v2819, 7
        %v2821 = vsub.s32 1, %v2820
        %v2822 = vrot.slane %v2540, %v2821
        %v2823 = vlaneseq
        %v2824 = vshrl.u32 %v2823, 7
        %v2825 = vsub.s32 2, %v2824
        %v2826 = vrot.slane %v2540, %v2825
        %v2827 = vlaneseq
        %v2828 = vshrl.u32 %v2827, 7
        %v2829 = vsub.s32 3, %v2828
        %v2830 = vrot.slane %v2540, %v2829
        %v2831 = vlaneseq
        %v2832 = vshrl.u32 %v2831, 7
        %v2833 = vsub.s32 4, %v2832
        %v2834 = vrot.slane %v2540, %v2833
        %v2835 = vlaneseq
        %v2836 = vshrl.u32 %v2835, 7
        %v2837 = vsub.s32 5, %v2836
        %v2838 = vrot.slane %v2540, %v2837
        %v2839 = vlaneseq
        %v2840 = vshrl.u32 %v2839, 7
        %v2841 = vsub.s32 6, %v2840
        %v2842 = vrot.slane %v2540, %v2841
        %v2843 = vlaneseq
        %v2844 = vshrl.u32 %v2843, 7
        %v2845 = vsub.s32 7, %v2844
        %v2846 = vrot.slane %v2540, %v2845
        %v2847 = vlaneseq
        %v2848 = vshrl.u32 %v2847, 7
        %v2849 = vsub.s32 0, %v2848
        %v2850 = vrot.slane %v2542, %v2849
        %v2851 = vlaneseq
        %v2852 = vshrl.u32 %v2851, 7
        %v2853 = vsub.s32 1, %v2852
        %v2854 = vrot.slane %v2542, %v2853
        %v2855 = vlaneseq
        %v2856 = vshrl.u32 %v2855, 7
        %v2857 = vsub.s32 2, %v2856
        %v2858 = vrot.slane %v2542, %v2857
        %v2859 = vlaneseq
        %v2860 = vshrl.u32 %v2859, 7
        %v2861 = vsub.s32 3, %v2860
        %v2862 = vrot.slane %v2542, %v2861
        %v2863 = vlaneseq
        %v2864 = vshrl.u32 %v2863, 7
        %v2865 = vsub.s32 4, %v2864
        %v2866 = vrot.slane %v2542, %v2865
        %v2867 = vlaneseq
        %v2868 = vshrl.u32 %v2867, 7
        %v2869 = vsub.s32 5, %v2868
        %v2870 = vrot.slane %v2542, %v2869
        %v2871 = vlaneseq
        %v2872 = vshrl.u32 %v2871, 7
        %v2873 = vsub.s32 6, %v2872
        %v2874 = vrot.slane %v2542, %v2873
        %v2875 = vlaneseq
        %v2876 = vshrl.u32 %v2875, 7
        %v2877 = vsub.s32 7, %v2876
        %v2878 = vrot.slane %v2542, %v2877
        %v2879 = vlaneseq
        %v2880 = vshrl.u32 %v2879, 7
        %v2881 = vsub.s32 0, %v2880
        %v2882 = vrot.slane %v2544, %v2881
        %v2883 = vlaneseq
        %v2884 = vshrl.u32 %v2883, 7
        %v2885 = vsub.s32 1, %v2884
        %v2886 = vrot.slane %v2544, %v2885
        %v2887 = vlaneseq
        %v2888 = vshrl.u32 %v2887, 7
        %v2889 = vsub.s32 2, %v2888
        %v2890 = vrot.slane %v2544, %v2889
        %v2891 = vlaneseq
        %v2892 = vshrl.u32 %v2891, 7
        %v2893 = vsub.s32 3, %v2892
        %v2894 = vrot.slane %v2544, %v2893
        %v2895 = vlaneseq
        %v2896 = vshrl.u32 %v2895, 7
        %v2897 = vsub.s32 4, %v2896
        %v2898 = vrot.slane %v2544, %v2897
        %v2899 = vlaneseq
        %v2900 = vshrl.u32 %v2899, 7
        %v2901 = vsub.s32 5, %v2900
        %v2902 = vrot.slane %v2544, %v2901
        %v2903 = vlaneseq
        %v2904 = vshrl.u32 %v2903, 7
        %v2905 = vsub.s32 6, %v2904
        %v2906 = vrot.slane %v2544, %v2905
        %v2907 = vlaneseq
        %v2908 = vshrl.u32 %v2907, 7
        %v2909 = vsub.s32 7, %v2908
        %v2910 = vrot.slane %v2544, %v2909
        %v2911 = vlaneseq
        %v2912 = vshrl.u32 %v2911, 7
        %v2913 = vsub.s32 0, %v2912
        %v2914 = vrot.slane %v2546, %v2913
        %v2915 = vlaneseq
        %v2916 = vshrl.u32 %v2915, 7
        %v2917 = vsub.s32 1, %v2916
        %v2918 = vrot.slane %v2546, %v2917
        %v2919 = vlaneseq
        %v2920 = vshrl.u32 %v2919, 7
        %v2921 = vsub.s32 2, %v2920
        %v2922 = vrot.slane %v2546, %v2921
        %v2923 = vlaneseq
        %v2924 = vshrl.u32 %v2923, 7
        %v2925 = vsub.s32 3, %v2924
        %v2926 = vrot.slane %v2546, %v2925
        %v2927 = vlaneseq
        %v2928 = vshrl.u32 %v2927, 7
        %v2929 = vsub.s32 4, %v2928
        %v2930 = vrot.slane %v2546, %v2929
        %v2931 = vlaneseq
        %v2932 = vshrl.u32 %v2931, 7
        %v2933 = vsub.s32 5, %v2932
        %v2934 = vrot.slane %v2546, %v2933
        %v2935 = vlaneseq
        %v2936 = vshrl.u32 %v2935, 7
        %v2937 = vsub.s32 6, %v2936
        %v2938 = vrot.slane %v2546, %v2937
        %v2939 = vlaneseq
        %v2940 = vshrl.u32 %v2939, 7
        %v2941 = vsub.s32 7, %v2940
        %v2942 = vrot.slane %v2546, %v2941
        %v2943 = vlaneseq
        %v2944 = vshrl.u32 %v2943, 7
        %v2945 = vsub.s32 0, %v2944
        %v2946 = vrot.slane %v2548, %v2945
        %v2947 = vlaneseq
        %v2948 = vshrl.u32 %v2947, 7
        %v2949 = vsub.s32 1, %v2948
        %v2950 = vrot.slane %v2548, %v2949
        %v2951 = vlaneseq
        %v2952 = vshrl.u32 %v2951, 7
        %v2953 = vsub.s32 2, %v2952
        %v2954 = vrot.slane %v2548, %v2953
        %v2955 = vlaneseq
        %v2956 = vshrl.u32 %v2955, 7
        %v2957 = vsub.s32 3, %v2956
        %v2958 = vrot.slane %v2548, %v2957
        %v2959 = vlaneseq
        %v2960 = vshrl.u32 %v2959, 7
        %v2961 = vsub.s32 4, %v2960
        %v2962 = vrot.slane %v2548, %v2961
        %v2963 = vlaneseq
        %v2964 = vshrl.u32 %v2963, 7
        %v2965 = vsub.s32 5, %v2964
        %v2966 = vrot.slane %v2548, %v2965
        %v2967 = vlaneseq
        %v2968 = vshrl.u32 %v2967, 7
        %v2969 = vsub.s32 6, %v2968
        %v2970 = vrot.slane %v2548, %v2969
        %v2971 = vlaneseq
        %v2972 = vshrl.u32 %v2971, 7
        %v2973 = vsub.s32 7, %v2972
        %v2974 = vrot.slane %v2548, %v2973
        %v2975 = vlaneseq
        %v2976 = vshrl.u32 %v2975, 7
        %v2977 = vsub.s32 0, %v2976
        %v2978 = vrot.slane %v2550, %v2977
        %v2979 = vlaneseq
        %v2980 = vshrl.u32 %v2979, 7
        %v2981 = vsub.s32 1, %v2980
        %v2982 = vrot.slane %v2550, %v2981
        %v2983 = vlaneseq
        %v2984 = vshrl.u32 %v2983, 7
        %v2985 = vsub.s32 2, %v2984
        %v2986 = vrot.slane %v2550, %v2985
        %v2987 = vlaneseq
        %v2988 = vshrl.u32 %v2987, 7
        %v2989 = vsub.s32 3, %v2988
        %v2990 = vrot.slane %v2550, %v2989
        %v2991 = vlaneseq
        %v2992 = vshrl.u32 %v2991, 7
        %v2993 = vsub.s32 4, %v2992
        %v2994 = vrot.slane %v2550, %v2993
        %v2995 = vlaneseq
        %v2996 = vshrl.u32 %v2995, 7
        %v2997 = vsub.s32 5, %v2996
        %v2998 = vrot.slane %v2550, %v2997
        %v2999 = vlaneseq
        %v3000 = vshrl.u32 %v2999, 7
        %v3001 = vsub.s32 6, %v3000
        %v3002 = vrot.slane %v2550, %v3001
        %v3003 = vlaneseq
        %v3004 = vshrl.u32 %v3003, 7
        %v3005 = vsub.s32 7, %v3004
        %v3006 = vrot.slane %v2550, %v3005
        %v3007 = vlaneseq
        %v3008 = vshrl.u32 %v3007, 7
        %v3009 = vsub.s32 0, %v3008
        %v3010 = vrot.slane %v2552, %v3009
        %v3011 = vlaneseq
        %v3012 = vshrl.u32 %v3011, 7
        %v3013 = vsub.s32 1, %v3012
        %v3014 = vrot.slane %v2552, %v3013
        %v3015 = vlaneseq
        %v3016 = vshrl.u32 %v3015, 7
        %v3017 = vsub.s32 2, %v3016
        %v3018 = vrot.slane %v2552, %v3017
        %v3019 = vlaneseq
        %v3020 = vshrl.u32 %v3019, 7
        %v3021 = vsub.s32 3, %v3020
        %v3022 = vrot.slane %v2552, %v3021
        %v3023 = vlaneseq
        %v3024 = vshrl.u32 %v3023, 7
        %v3025 = vsub.s32 4, %v3024
        %v3026 = vrot.slane %v2552, %v3025
        %v3027 = vlaneseq
        %v3028 = vshrl.u32 %v3027, 7
        %v3029 = vsub.s32 5, %v3028
        %v3030 = vrot.slane %v2552, %v3029
        %v3031 = vlaneseq
        %v3032 = vshrl.u32 %v3031, 7
        %v3033 = vsub.s32 6, %v3032
        %v3034 = vrot.slane %v2552, %v3033
        %v3035 = vlaneseq
        %v3036 = vshrl.u32 %v3035, 7
        %v3037 = vsub.s32 7, %v3036
        %v3038 = vrot.slane %v2552, %v3037
        %v3039 = vlaneseq
        %v3040 = vshrl.u32 %v3039, 7
        %v3041 = vsub.s32 0, %v3040
        %v3042 = vrot.slane %v2554, %v3041
        %v3043 = vlaneseq
        %v3044 = vshrl.u32 %v3043, 7
        %v3045 = vsub.s32 1, %v3044
        %v3046 = vrot.slane %v2554, %v3045
        %v3047 = vlaneseq
        %v3048 = vshrl.u32 %v3047, 7
        %v3049 = vsub.s32 2, %v3048
        %v3050 = vrot.slane %v2554, %v3049
        %v3051 = vlaneseq
        %v3052 = vshrl.u32 %v3051, 7
        %v3053 = vsub.s32 3, %v3052
        %v3054 = vrot.slane %v2554, %v3053
        %v3055 = vlaneseq
        %v3056 = vshrl.u32 %v3055, 7
        %v3057 = vsub.s32 4, %v3056
        %v3058 = vrot.slane %v2554, %v3057
        %v3059 = vlaneseq
        %v3060 = vshrl.u32 %v3059, 7
        %v3061 = vsub.s32 5, %v3060
        %v3062 = vrot.slane %v2554, %v3061
        %v3063 = vlaneseq
        %v3064 = vshrl.u32 %v3063, 7
        %v3065 = vsub.s32 6, %v3064
        %v3066 = vrot.slane %v2554, %v3065
        %v3067 = vlaneseq
        %v3068 = vshrl.u32 %v3067, 7
        %v3069 = vsub.s32 7, %v3068
        %v3070 = vrot.slane %v2554, %v3069
        %v3071 = vlaneseq
        %v3072 = vshrl.u32 %v3071, 7
        %v3073 = vsub.s32 0, %v3072
        %v3074 = vrot.slane %v2556, %v3073
        %v3075 = vlaneseq
        %v3076 = vshrl.u32 %v3075, 7
        %v3077 = vsub.s32 1, %v3076
        %v3078 = vrot.slane %v2556, %v3077
        %v3079 = vlaneseq
        %v3080 = vshrl.u32 %v3079, 7
        %v3081 = vsub.s32 2, %v3080
        %v3082 = vrot.slane %v2556, %v3081
        %v3083 = vlaneseq
        %v3084 = vshrl.u32 %v3083, 7
        %v3085 = vsub.s32 3, %v3084
        %v3086 = vrot.slane %v2556, %v3085
        %v3087 = vlaneseq
        %v3088 = vshrl.u32 %v3087, 7
        %v3089 = vsub.s32 4, %v3088
        %v3090 = vrot.slane %v2556, %v3089
        %v3091 = vlaneseq
        %v3092 = vshrl.u32 %v3091, 7
        %v3093 = vsub.s32 5, %v3092
        %v3094 = vrot.slane %v2556, %v3093
        %v3095 = vlaneseq
        %v3096 = vshrl.u32 %v3095, 7
        %v3097 = vsub.s32 6, %v3096
        %v3098 = vrot.slane %v2556, %v3097
        %v3099 = vlaneseq
        %v3100 = vshrl.u32 %v3099, 7
        %v3101 = vsub.s32 7, %v3100
        %v3102 = vrot.slane %v2556, %v3101
        %v3103 = vlaneseq
        %v3104 = vshrl.u32 %v3103, 7
        %v3105 = vsub.s32 0, %v3104
        %v3106 = vrot.slane %v2558, %v3105
        %v3107 = vlaneseq
        %v3108 = vshrl.u32 %v3107, 7
        %v3109 = vsub.s32 1, %v3108
        %v3110 = vrot.slane %v2558, %v3109
        %v3111 = vlaneseq
        %v3112 = vshrl.u32 %v3111, 7
        %v3113 = vsub.s32 2, %v3112
        %v3114 = vrot.slane %v2558, %v3113
        %v3115 = vlaneseq
        %v3116 = vshrl.u32 %v3115, 7
        %v3117 = vsub.s32 3, %v3116
        %v3118 = vrot.slane %v2558, %v3117
        %v3119 = vlaneseq
        %v3120 = vshrl.u32 %v3119, 7
        %v3121 = vsub.s32 4, %v3120
        %v3122 = vrot.slane %v2558, %v3121
        %v3123 = vlaneseq
        %v3124 = vshrl.u32 %v3123, 7
        %v3125 = vsub.s32 5, %v3124
        %v3126 = vrot.slane %v2558, %v3125
        %v3127 = vlaneseq
        %v3128 = vshrl.u32 %v3127, 7
        %v3129 = vsub.s32 6, %v3128
        %v3130 = vrot.slane %v2558, %v3129
        %v3131 = vlaneseq
        %v3132 = vshrl.u32 %v3131, 7
        %v3133 = vsub.s32 7, %v3132
        %v3134 = vrot.slane %v2558, %v3133
        %v3135 = vlaneseq
        %v3136 = vshrl.u32 %v3135, 7
        %v3137 = vsub.s32 0, %v3136
        %v3138 = vrot.slane %v2560, %v3137
        %v3139 = vlaneseq
        %v3140 = vshrl.u32 %v3139, 7
        %v3141 = vsub.s32 1, %v3140
        %v3142 = vrot.slane %v2560, %v3141
        %v3143 = vlaneseq
        %v3144 = vshrl.u32 %v3143, 7
        %v3145 = vsub.s32 2, %v3144
        %v3146 = vrot.slane %v2560, %v3145
        %v3147 = vlaneseq
        %v3148 = vshrl.u32 %v3147, 7
        %v3149 = vsub.s32 3, %v3148
        %v3150 = vrot.slane %v2560, %v3149
        %v3151 = vlaneseq
        %v3152 = vshrl.u32 %v3151, 7
        %v3153 = vsub.s32 4, %v3152
        %v3154 = vrot.slane %v2560, %v3153
        %v3155 = vlaneseq
        %v3156 = vshrl.u32 %v3155, 7
        %v3157 = vsub.s32 5, %v3156
        %v3158 = vrot.slane %v2560, %v3157
        %v3159 = vlaneseq
        %v3160 = vshrl.u32 %v3159, 7
        %v3161 = vsub.s32 6, %v3160
        %v3162 = vrot.slane %v2560, %v3161
        %v3163 = vlaneseq
        %v3164 = vshrl.u32 %v3163, 7
        %v3165 = vsub.s32 7, %v3164
        %v3166 = vrot.slane %v2560, %v3165
        %v3167 = vlaneseq
        %v3168 = vshrl.u32 %v3167, 7
        %v3169 = vsub.s32 0, %v3168
        %v3170 = vrot.slane %v2562, %v3169
        %v3171 = vlaneseq
        %v3172 = vshrl.u32 %v3171, 7
        %v3173 = vsub.s32 1, %v3172
        %v3174 = vrot.slane %v2562, %v3173
        %v3175 = vlaneseq
        %v3176 = vshrl.u32 %v3175, 7
        %v3177 = vsub.s32 2, %v3176
        %v3178 = vrot.slane %v2562, %v3177
        %v3179 = vlaneseq
        %v3180 = vshrl.u32 %v3179, 7
        %v3181 = vsub.s32 3, %v3180
        %v3182 = vrot.slane %v2562, %v3181
        %v3183 = vlaneseq
        %v3184 = vshrl.u32 %v3183, 7
        %v3185 = vsub.s32 4, %v3184
        %v3186 = vrot.slane %v2562, %v3185
        %v3187 = vlaneseq
        %v3188 = vshrl.u32 %v3187, 7
        %v3189 = vsub.s32 5, %v3188
        %v3190 = vrot.slane %v2562, %v3189
        %v3191 = vlaneseq
        %v3192 = vshrl.u32 %v3191, 7
        %v3193 = vsub.s32 6, %v3192
        %v3194 = vrot.slane %v2562, %v3193
        %v3195 = vlaneseq
        %v3196 = vshrl.u32 %v3195, 7
        %v3197 = vsub.s32 7, %v3196
        %v3198 = vrot.slane %v2562, %v3197
        %v3199 = vlaneseq
        %v3200 = vshrl.u32 %v3199, 7
        %v3201 = vsub.s32 0, %v3200
        %v3202 = vrot.slane %v2564, %v3201
        %v3203 = vlaneseq
        %v3204 = vshrl.u32 %v3203, 7
        %v3205 = vsub.s32 1, %v3204
        %v3206 = vrot.slane %v2564, %v3205
        %v3207 = vlaneseq
        %v3208 = vshrl.u32 %v3207, 7
        %v3209 = vsub.s32 2, %v3208
        %v3210 = vrot.slane %v2564, %v3209
        %v3211 = vlaneseq
        %v3212 = vshrl.u32 %v3211, 7
        %v3213 = vsub.s32 3, %v3212
        %v3214 = vrot.slane %v2564, %v3213
        %v3215 = vlaneseq
        %v3216 = vshrl.u32 %v3215, 7
        %v3217 = vsub.s32 4, %v3216
        %v3218 = vrot.slane %v2564, %v3217
        %v3219 = vlaneseq
        %v3220 = vshrl.u32 %v3219, 7
        %v3221 = vsub.s32 5, %v3220
        %v3222 = vrot.slane %v2564, %v3221
        %v3223 = vlaneseq
        %v3224 = vshrl.u32 %v3223, 7
        %v3225 = vsub.s32 6, %v3224
        %v3226 = vrot.slane %v2564, %v3225
        %v3227 = vlaneseq
        %v3228 = vshrl.u32 %v3227, 7
        %v3229 = vsub.s32 7, %v3228
        %v3230 = vrot.slane %v2564, %v3229
        %v3231 = vlaneseq
        %v3232 = vshrl.u32 %v3231, 7
        %v3233 = vsub.s32 0, %v3232
        %v3234 = vrot.slane %v2566, %v3233
        %v3235 = vlaneseq
        %v3236 = vshrl.u32 %v3235, 7
        %v3237 = vsub.s32 1, %v3236
        %v3238 = vrot.slane %v2566, %v3237
        %v3239 = vlaneseq
        %v3240 = vshrl.u32 %v3239, 7
        %v3241 = vsub.s32 2, %v3240
        %v3242 = vrot.slane %v2566, %v3241
        %v3243 = vlaneseq
        %v3244 = vshrl.u32 %v3243, 7
        %v3245 = vsub.s32 3, %v3244
        %v3246 = vrot.slane %v2566, %v3245
        %v3247 = vlaneseq
        %v3248 = vshrl.u32 %v3247, 7
        %v3249 = vsub.s32 4, %v3248
        %v3250 = vrot.slane %v2566, %v3249
        %v3251 = vlaneseq
        %v3252 = vshrl.u32 %v3251, 7
        %v3253 = vsub.s32 5, %v3252
        %v3254 = vrot.slane %v2566, %v3253
        %v3255 = vlaneseq
        %v3256 = vshrl.u32 %v3255, 7
        %v3257 = vsub.s32 6, %v3256
        %v3258 = vrot.slane %v2566, %v3257
        %v3259 = vlaneseq
        %v3260 = vshrl.u32 %v3259, 7
        %v3261 = vsub.s32 7, %v3260
        %v3262 = vrot.slane %v2566, %v3261
        %v3263 = vlaneseq
        %v3264 = vshrl.u32 %v3263, 7
        %v3265 = vsub.s32 0, %v3264
        %v3266 = vrot.slane %v2568, %v3265
        %v3267 = vlaneseq
        %v3268 = vshrl.u32 %v3267, 7
        %v3269 = vsub.s32 1, %v3268
        %v3270 = vrot.slane %v2568, %v3269
        %v3271 = vlaneseq
        %v3272 = vshrl.u32 %v3271, 7
        %v3273 = vsub.s32 2, %v3272
        %v3274 = vrot.slane %v2568, %v3273
        %v3275 = vlaneseq
        %v3276 = vshrl.u32 %v3275, 7
        %v3277 = vsub.s32 3, %v3276
        %v3278 = vrot.slane %v2568, %v3277
        %v3279 = vlaneseq
        %v3280 = vshrl.u32 %v3279, 7
        %v3281 = vsub.s32 4, %v3280
        %v3282 = vrot.slane %v2568, %v3281
        %v3283 = vlaneseq
        %v3284 = vshrl.u32 %v3283, 7
        %v3285 = vsub.s32 5, %v3284
        %v3286 = vrot.slane %v2568, %v3285
        %v3287 = vlaneseq
        %v3288 = vshrl.u32 %v3287, 7
        %v3289 = vsub.s32 6, %v3288
        %v3290 = vrot.slane %v2568, %v3289
        %v3291 = vlaneseq
        %v3292 = vshrl.u32 %v3291, 7
        %v3293 = vsub.s32 7, %v3292
        %v3294 = vrot.slane %v2568, %v3293
        %v3295 = vlaneseq
        %v3296 = vshrl.u32 %v3295, 7
        %v3297 = vsub.s32 0, %v3296
        %v3298 = vrot.slane %v2570, %v3297
        %v3299 = vlaneseq
        %v3300 = vshrl.u32 %v3299, 7
        %v3301 = vsub.s32 1, %v3300
        %v3302 = vrot.slane %v2570, %v3301
        %v3303 = vlaneseq
        %v3304 = vshrl.u32 %v3303, 7
        %v3305 = vsub.s32 2, %v3304
        %v3306 = vrot.slane %v2570, %v3305
        %v3307 = vlaneseq
        %v3308 = vshrl.u32 %v3307, 7
        %v3309 = vsub.s32 3, %v3308
        %v3310 = vrot.slane %v2570, %v3309
        %v3311 = vlaneseq
        %v3312 = vshrl.u32 %v3311, 7
        %v3313 = vsub.s32 4, %v3312
        %v3314 = vrot.slane %v2570, %v3313
        %v3315 = vlaneseq
        %v3316 = vshrl.u32 %v3315, 7
        %v3317 = vsub.s32 5, %v3316
        %v3318 = vrot.slane %v2570, %v3317
        %v3319 = vlaneseq
        %v3320 = vshrl.u32 %v3319, 7
        %v3321 = vsub.s32 6, %v3320
        %v3322 = vrot.slane %v2570, %v3321
        %v3323 = vlaneseq
        %v3324 = vshrl.u32 %v3323, 7
        %v3325 = vsub.s32 7, %v3324
        %v3326 = vrot.slane %v2570, %v3325
        %v3327 = vlaneseq
        %v3328 = vshrl.u32 %v3327, 7
        %v3329 = vsub.s32 0, %v3328
        %v3330 = vrot.slane %v2572, %v3329
        %v3331 = vlaneseq
        %v3332 = vshrl.u32 %v3331, 7
        %v3333 = vsub.s32 1, %v3332
        %v3334 = vrot.slane %v2572, %v3333
        %v3335 = vlaneseq
        %v3336 = vshrl.u32 %v3335, 7
        %v3337 = vsub.s32 2, %v3336
        %v3338 = vrot.slane %v2572, %v3337
        %v3339 = vlaneseq
        %v3340 = vshrl.u32 %v3339, 7
        %v3341 = vsub.s32 3, %v3340
        %v3342 = vrot.slane %v2572, %v3341
        %v3343 = vlaneseq
        %v3344 = vshrl.u32 %v3343, 7
        %v3345 = vsub.s32 4, %v3344
        %v3346 = vrot.slane %v2572, %v3345
        %v3347 = vlaneseq
        %v3348 = vshrl.u32 %v3347, 7
        %v3349 = vsub.s32 5, %v3348
        %v3350 = vrot.slane %v2572, %v3349
        %v3351 = vlaneseq
        %v3352 = vshrl.u32 %v3351, 7
        %v3353 = vsub.s32 6, %v3352
        %v3354 = vrot.slane %v2572, %v3353
        %v3355 = vlaneseq
        %v3356 = vshrl.u32 %v3355, 7
        %v3357 = vsub.s32 7, %v3356
        %v3358 = vrot.slane %v2572, %v3357
        %v3359 = vlaneseq
        %v3360 = vshrl.u32 %v3359, 7
        %v3361 = vsub.s32 0, %v3360
        %v3362 = vrot.slane %v2574, %v3361
        %v3363 = vlaneseq
        %v3364 = vshrl.u32 %v3363, 7
        %v3365 = vsub.s32 1, %v3364
        %v3366 = vrot.slane %v2574, %v3365
        %v3367 = vlaneseq
        %v3368 = vshrl.u32 %v3367, 7
        %v3369 = vsub.s32 2, %v3368
        %v3370 = vrot.slane %v2574, %v3369
        %v3371 = vlaneseq
        %v3372 = vshrl.u32 %v3371, 7
        %v3373 = vsub.s32 3, %v3372
        %v3374 = vrot.slane %v2574, %v3373
        %v3375 = vlaneseq
        %v3376 = vshrl.u32 %v3375, 7
        %v3377 = vsub.s32 4, %v3376
        %v3378 = vrot.slane %v2574, %v3377
        %v3379 = vlaneseq
        %v3380 = vshrl.u32 %v3379, 7
        %v3381 = vsub.s32 5, %v3380
        %v3382 = vrot.slane %v2574, %v3381
        %v3383 = vlaneseq
        %v3384 = vshrl.u32 %v3383, 7
        %v3385 = vsub.s32 6, %v3384
        %v3386 = vrot.slane %v2574, %v3385
        %v3387 = vlaneseq
        %v3388 = vshrl.u32 %v3387, 7
        %v3389 = vsub.s32 7, %v3388
        %v3390 = vrot.slane %v2574, %v3389
        %v3391 = vlaneseq
        %v3392 = vshrl.u32 %v3391, 7
        %v3393 = vsub.s32 0, %v3392
        %v3394 = vrot.slane %v2576, %v3393
        %v3395 = vlaneseq
        %v3396 = vshrl.u32 %v3395, 7
        %v3397 = vsub.s32 1, %v3396
        %v3398 = vrot.slane %v2576, %v3397
        %v3399 = vlaneseq
        %v3400 = vshrl.u32 %v3399, 7
        %v3401 = vsub.s32 2, %v3400
        %v3402 = vrot.slane %v2576, %v3401
        %v3403 = vlaneseq
        %v3404 = vshrl.u32 %v3403, 7
        %v3405 = vsub.s32 3, %v3404
        %v3406 = vrot.slane %v2576, %v3405
        %v3407 = vlaneseq
        %v3408 = vshrl.u32 %v3407, 7
        %v3409 = vsub.s32 4, %v3408
        %v3410 = vrot.slane %v2576, %v3409
        %v3411 = vlaneseq
        %v3412 = vshrl.u32 %v3411, 7
        %v3413 = vsub.s32 5, %v3412
        %v3414 = vrot.slane %v2576, %v3413
        %v3415 = vlaneseq
        %v3416 = vshrl.u32 %v3415, 7
        %v3417 = vsub.s32 6, %v3416
        %v3418 = vrot.slane %v2576, %v3417
        %v3419 = vlaneseq
        %v3420 = vshrl.u32 %v3419, 7
        %v3421 = vsub.s32 7, %v3420
        %v3422 = vrot.slane %v2576, %v3421
        %v3423 = vlaneseq
        %v3424 = vshrl.u32 %v3423, 7
        %v3425 = vsub.s32 0, %v3424
        %v3426 = vrot.slane %v2578, %v3425
        %v3427 = vlaneseq
        %v3428 = vshrl.u32 %v3427, 7
        %v3429 = vsub.s32 1, %v3428
        %v3430 = vrot.slane %v2578, %v3429
        %v3431 = vlaneseq
        %v3432 = vshrl.u32 %v3431, 7
        %v3433 = vsub.s32 2, %v3432
        %v3434 = vrot.slane %v2578, %v3433
        %v3435 = vlaneseq
        %v3436 = vshrl.u32 %v3435, 7
        %v3437 = vsub.s32 3, %v3436
        %v3438 = vrot.slane %v2578, %v3437
        %v3439 = vlaneseq
        %v3440 = vshrl.u32 %v3439, 7
        %v3441 = vsub.s32 4, %v3440
        %v3442 = vrot.slane %v2578, %v3441
        %v3443 = vlaneseq
        %v3444 = vshrl.u32 %v3443, 7
        %v3445 = vsub.s32 5, %v3444
        %v3446 = vrot.slane %v2578, %v3445
        %v3447 = vlaneseq
        %v3448 = vshrl.u32 %v3447, 7
        %v3449 = vsub.s32 6, %v3448
        %v3450 = vrot.slane %v2578, %v3449
        %v3451 = vlaneseq
        %v3452 = vshrl.u32 %v3451, 7
        %v3453 = vsub.s32 7, %v3452
        %v3454 = vrot.slane %v2578, %v3453
        %v3455 = vlaneseq
        %v3456 = vshrl.u32 %v3455, 7
        %v3457 = vsub.s32 0, %v3456
        %v3458 = vrot.slane %v2580, %v3457
        %v3459 = vlaneseq
        %v3460 = vshrl.u32 %v3459, 7
        %v3461 = vsub.s32 1, %v3460
        %v3462 = vrot.slane %v2580, %v3461
        %v3463 = vlaneseq
        %v3464 = vshrl.u32 %v3463, 7
        %v3465 = vsub.s32 2, %v3464
        %v3466 = vrot.slane %v2580, %v3465
        %v3467 = vlaneseq
        %v3468 = vshrl.u32 %v3467, 7
        %v3469 = vsub.s32 3, %v3468
        %v3470 = vrot.slane %v2580, %v3469
        %v3471 = vlaneseq
        %v3472 = vshrl.u32 %v3471, 7
        %v3473 = vsub.s32 4, %v3472
        %v3474 = vrot.slane %v2580, %v3473
        %v3475 = vlaneseq
        %v3476 = vshrl.u32 %v3475, 7
        %v3477 = vsub.s32 5, %v3476
        %v3478 = vrot.slane %v2580, %v3477
        %v3479 = vlaneseq
        %v3480 = vshrl.u32 %v3479, 7
        %v3481 = vsub.s32 6, %v3480
        %v3482 = vrot.slane %v2580, %v3481
        %v3483 = vlaneseq
        %v3484 = vshrl.u32 %v3483, 7
        %v3485 = vsub.s32 7, %v3484
        %v3486 = vrot.slane %v2580, %v3485
        %v3487 = vlaneseq
        %v3488 = vshrl.u32 %v3487, 7
        %v3489 = vsub.s32 0, %v3488
        %v3490 = vrot.slane %v2582, %v3489
        %v3491 = vlaneseq
        %v3492 = vshrl.u32 %v3491, 7
        %v3493 = vsub.s32 1, %v3492
        %v3494 = vrot.slane %v2582, %v3493
        %v3495 = vlaneseq
        %v3496 = vshrl.u32 %v3495, 7
        %v3497 = vsub.s32 2, %v3496
        %v3498 = vrot.slane %v2582, %v3497
        %v3499 = vlaneseq
        %v3500 = vshrl.u32 %v3499, 7
        %v3501 = vsub.s32 3, %v3500
        %v3502 = vrot.slane %v2582, %v3501
        %v3503 = vlaneseq
        %v3504 = vshrl.u32 %v3503, 7
        %v3505 = vsub.s32 4, %v3504
        %v3506 = vrot.slane %v2582, %v3505
        %v3507 = vlaneseq
        %v3508 = vshrl.u32 %v3507, 7
        %v3509 = vsub.s32 5, %v3508
        %v3510 = vrot.slane %v2582, %v3509
        %v3511 = vlaneseq
        %v3512 = vshrl.u32 %v3511, 7
        %v3513 = vsub.s32 6, %v3512
        %v3514 = vrot.slane %v2582, %v3513
        %v3515 = vlaneseq
        %v3516 = vshrl.u32 %v3515, 7
        %v3517 = vsub.s32 7, %v3516
        %v3518 = vrot.slane %v2582, %v3517
        %v3519 = vlaneseq
        %v3520 = vshrl.u32 %v3519, 7
        %v3521 = vsub.s32 0, %v3520
        %v3522 = vrot.slane %v2584, %v3521
        %v3523 = vlaneseq
        %v3524 = vshrl.u32 %v3523, 7
        %v3525 = vsub.s32 1, %v3524
        %v3526 = vrot.slane %v2584, %v3525
        %v3527 = vlaneseq
        %v3528 = vshrl.u32 %v3527, 7
        %v3529 = vsub.s32 2, %v3528
        %v3530 = vrot.slane %v2584, %v3529
        %v3531 = vlaneseq
        %v3532 = vshrl.u32 %v3531, 7
        %v3533 = vsub.s32 3, %v3532
        %v3534 = vrot.slane %v2584, %v3533
        %v3535 = vlaneseq
        %v3536 = vshrl.u32 %v3535, 7
        %v3537 = vsub.s32 4, %v3536
        %v3538 = vrot.slane %v2584, %v3537
        %v3539 = vlaneseq
        %v3540 = vshrl.u32 %v3539, 7
        %v3541 = vsub.s32 5, %v3540
        %v3542 = vrot.slane %v2584, %v3541
        %v3543 = vlaneseq
        %v3544 = vshrl.u32 %v3543, 7
        %v3545 = vsub.s32 6, %v3544
        %v3546 = vrot.slane %v2584, %v3545
        %v3547 = vlaneseq
        %v3548 = vshrl.u32 %v3547, 7
        %v3549 = vsub.s32 7, %v3548
        %v3550 = vrot.slane %v2584, %v3549
        %v3551 = vlaneseq
        %v3552 = vshrl.u32 %v3551, 7
        %v3553 = vsub.s32 0, %v3552
        %v3554 = vrot.slane %v2586, %v3553
        %v3555 = vlaneseq
        %v3556 = vshrl.u32 %v3555, 7
        %v3557 = vsub.s32 1, %v3556
        %v3558 = vrot.slane %v2586, %v3557
        %v3559 = vlaneseq
        %v3560 = vshrl.u32 %v3559, 7
        %v3561 = vsub.s32 2, %v3560
        %v3562 = vrot.slane %v2586, %v3561
        %v3563 = vlaneseq
        %v3564 = vshrl.u32 %v3563, 7
        %v3565 = vsub.s32 3, %v3564
        %v3566 = vrot.slane %v2586, %v3565
        %v3567 = vlaneseq
        %v3568 = vshrl.u32 %v3567, 7
        %v3569 = vsub.s32 4, %v3568
        %v3570 = vrot.slane %v2586, %v3569
        %v3571 = vlaneseq
        %v3572 = vshrl.u32 %v3571, 7
        %v3573 = vsub.s32 5, %v3572
        %v3574 = vrot.slane %v2586, %v3573
        %v3575 = vlaneseq
        %v3576 = vshrl.u32 %v3575, 7
        %v3577 = vsub.s32 6, %v3576
        %v3578 = vrot.slane %v2586, %v3577
        %v3579 = vlaneseq
        %v3580 = vshrl.u32 %v3579, 7
        %v3581 = vsub.s32 7, %v3580
        %v3582 = vrot.slane %v2586, %v3581
        %v3583 = vlaneseq
        %v3584 = vshrl.u32 %v3583, 7
        %v3585 = vsub.s32 0, %v3584
        %v3586 = vrot.slane %v2588, %v3585
        %v3587 = vlaneseq
        %v3588 = vshrl.u32 %v3587, 7
        %v3589 = vsub.s32 1, %v3588
        %v3590 = vrot.slane %v2588, %v3589
        %v3591 = vlaneseq
        %v3592 = vshrl.u32 %v3591, 7
        %v3593 = vsub.s32 2, %v3592
        %v3594 = vrot.slane %v2588, %v3593
        %v3595 = vlaneseq
        %v3596 = vshrl.u32 %v3595, 7
        %v3597 = vsub.s32 3, %v3596
        %v3598 = vrot.slane %v2588, %v3597
        %v3599 = vlaneseq
        %v3600 = vshrl.u32 %v3599, 7
        %v3601 = vsub.s32 4, %v3600
        %v3602 = vrot.slane %v2588, %v3601
        %v3603 = vlaneseq
        %v3604 = vshrl.u32 %v3603, 7
        %v3605 = vsub.s32 5, %v3604
        %v3606 = vrot.slane %v2588, %v3605
        %v3607 = vlaneseq
        %v3608 = vshrl.u32 %v3607, 7
        %v3609 = vsub.s32 6, %v3608
        %v3610 = vrot.slane %v2588, %v3609
        %v3611 = vlaneseq
        %v3612 = vshrl.u32 %v3611, 7
        %v3613 = vsub.s32 7, %v3612
        %v3614 = vrot.slane %v2588, %v3613
        %v3615 = vlaneseq
        %v3616 = vshrl.u32 %v3615, 7
        %v3617 = vsub.s32 0, %v3616
        %v3618 = vrot.slane %v2590, %v3617
        %v3619 = vlaneseq
        %v3620 = vshrl.u32 %v3619, 7
        %v3621 = vsub.s32 1, %v3620
        %v3622 = vrot.slane %v2590, %v3621
        %v3623 = vlaneseq
        %v3624 = vshrl.u32 %v3623, 7
        %v3625 = vsub.s32 2, %v3624
        %v3626 = vrot.slane %v2590, %v3625
        %v3627 = vlaneseq
        %v3628 = vshrl.u32 %v3627, 7
        %v3629 = vsub.s32 3, %v3628
        %v3630 = vrot.slane %v2590, %v3629
        %v3631 = vlaneseq
        %v3632 = vshrl.u32 %v3631, 7
        %v3633 = vsub.s32 4, %v3632
        %v3634 = vrot.slane %v2590, %v3633
        %v3635 = vlaneseq
        %v3636 = vshrl.u32 %v3635, 7
        %v3637 = vsub.s32 5, %v3636
        %v3638 = vrot.slane %v2590, %v3637
        %v3639 = vlaneseq
        %v3640 = vshrl.u32 %v3639, 7
        %v3641 = vsub.s32 6, %v3640
        %v3642 = vrot.slane %v2590, %v3641
        %v3643 = vlaneseq
        %v3644 = vshrl.u32 %v3643, 7
        %v3645 = vsub.s32 7, %v3644
        %v3646 = vrot.slane %v2590, %v3645
        %v3647 = vcombine.low %v2626, %v2630
        %v3648 = vcombine.low %v2634, %v2638
        %v3649 = vcombine.low %v2642, %v2646
        %v3650 = vcombine.low %v2650, %v2654
        %v3652 = vunpack.c.l.s4 1966171168
        %v3653 = vunpack.c.0.s8 %v3652
        %v3654 = vlaneseq
        %v3655 = vshrl.u32 %v3654, 7
        %v3656 = vsub.s32 %v3653, %v3655
        %v3657 = vrot.slane %v3647, %v3656
        %v3659 = vunpack.c.l.s4 1966171168
        %v3660 = vunpack.c.0.s8 %v3659
        %v3661 = vlaneseq
        %v3662 = vshrl.u32 %v3661, 7
        %v3663 = vsub.s32 %v3660, %v3662
        %v3664 = vrot.slane %v3648, %v3663
        %v3666 = vunpack.c.l.s4 1966171168
        %v3667 = vunpack.c.0.s8 %v3666
        %v3668 = vlaneseq
        %v3669 = vshrl.u32 %v3668, 7
        %v3670 = vsub.s32 %v3667, %v3669
        %v3671 = vrot.slane %v3649, %v3670
        %v3673 = vunpack.c.l.s4 1966171168
        %v3674 = vunpack.c.0.s8 %v3673
        %v3675 = vlaneseq
        %v3676 = vshrl.u32 %v3675, 7
        %v3677 = vsub.s32 %v3674, %v3676
        %v3678 = vrot.slane %v3650, %v3677
        %v3679 = vcombine.low %v3657, %v3664
        %v3680 = vcombine.low %v3671, %v3678
        %v3682 = vunpack.c.l.s4 1966171168
        %v3683 = vunpack.c.0.s8 %v3682
        %v3684 = vlaneseq
        %v3685 = vshrl.u32 %v3684, 7
        %v3686 = vsub.s32 %v3683, %v3685
        %v3687 = vrot.slane %v3679, %v3686
        %v3689 = vunpack.c.l.s4 1966171168
        %v3690 = vunpack.c.0.s8 %v3689
        %v3691 = vlaneseq
        %v3692 = vshrl.u32 %v3691, 7
        %v3693 = vsub.s32 %v3690, %v3692
        %v3694 = vrot.slane %v3680, %v3693
        %v3695 = vcombine.low %v3687, %v3694
        %v3696 = vcombine.low %v2658, %v2662
        %v3697 = vcombine.low %v2666, %v2670
        %v3698 = vcombine.low %v2674, %v2678
        %v3699 = vcombine.low %v2682, %v2686
        %v3701 = vunpack.c.l.s4 1966171168
        %v3702 = vunpack.c.0.s8 %v3701
        %v3703 = vlaneseq
        %v3704 = vshrl.u32 %v3703, 7
        %v3705 = vsub.s32 %v3702, %v3704
        %v3706 = vrot.slane %v3696, %v3705
        %v3708 = vunpack.c.l.s4 1966171168
        %v3709 = vunpack.c.0.s8 %v3708
        %v3710 = vlaneseq
        %v3711 = vshrl.u32 %v3710, 7
        %v3712 = vsub.s32 %v3709, %v3711
        %v3713 = vrot.slane %v3697, %v3712
        %v3715 = vunpack.c.l.s4 1966171168
        %v3716 = vunpack.c.0.s8 %v3715
        %v3717 = vlaneseq
        %v3718 = vshrl.u32 %v3717, 7
        %v3719 = vsub.s32 %v3716, %v3718
        %v3720 = vrot.slane %v3698, %v3719
        %v3722 = vunpack.c.l.s4 1966171168
        %v3723 = vunpack.c.0.s8 %v3722
        %v3724 = vlaneseq
        %v3725 = vshrl.u32 %v3724, 7
        %v3726 = vsub.s32 %v3723, %v3725
        %v3727 = vrot.slane %v3699, %v3726
        %v3728 = vcombine.low %v3706, %v3713
        %v3729 = vcombine.low %v3720, %v3727
        %v3731 = vunpack.c.l.s4 1966171168
        %v3732 = vunpack.c.0.s8 %v3731
        %v3733 = vlaneseq
        %v3734 = vshrl.u32 %v3733, 7
        %v3735 = vsub.s32 %v3732, %v3734
        %v3736 = vrot.slane %v3728, %v3735
        %v3738 = vunpack.c.l.s4 1966171168
        %v3739 = vunpack.c.0.s8 %v3738
        %v3740 = vlaneseq
        %v3741 = vshrl.u32 %v3740, 7
        %v3742 = vsub.s32 %v3739, %v3741
        %v3743 = vrot.slane %v3729, %v3742
        %v3744 = vcombine.low %v3736, %v3743
        %v3745 = vcombine.low %v2690, %v2694
        %v3746 = vcombine.low %v2698, %v2702
        %v3747 = vcombine.low %v2706, %v2710
        %v3748 = vcombine.low %v2714, %v2718
        %v3750 = vunpack.c.l.s4 1966171168
        %v3751 = vunpack.c.0.s8 %v3750
        %v3752 = vlaneseq
        %v3753 = vshrl.u32 %v3752, 7
        %v3754 = vsub.s32 %v3751, %v3753
        %v3755 = vrot.slane %v3745, %v3754
        %v3757 = vunpack.c.l.s4 1966171168
        %v3758 = vunpack.c.0.s8 %v3757
        %v3759 = vlaneseq
        %v3760 = vshrl.u32 %v3759, 7
        %v3761 = vsub.s32 %v3758, %v3760
        %v3762 = vrot.slane %v3746, %v3761
        %v3764 = vunpack.c.l.s4 1966171168
        %v3765 = vunpack.c.0.s8 %v3764
        %v3766 = vlaneseq
        %v3767 = vshrl.u32 %v3766, 7
        %v3768 = vsub.s32 %v3765, %v3767
        %v3769 = vrot.slane %v3747, %v3768
        %v3771 = vunpack.c.l.s4 1966171168
        %v3772 = vunpack.c.0.s8 %v3771
        %v3773 = vlaneseq
        %v3774 = vshrl.u32 %v3773, 7
        %v3775 = vsub.s32 %v3772, %v3774
        %v3776 = vrot.slane %v3748, %v3775
        %v3777 = vcombine.low %v3755, %v3762
        %v3778 = vcombine.low %v3769, %v3776
        %v3780 = vunpack.c.l.s4 1966171168
        %v3781 = vunpack.c.0.s8 %v3780
        %v3782 = vlaneseq
        %v3783 = vshrl.u32 %v3782, 7
        %v3784 = vsub.s32 %v3781, %v3783
        %v3785 = vrot.slane %v3777, %v3784
        %v3787 = vunpack.c.l.s4 1966171168
        %v3788 = vunpack.c.0.s8 %v3787
        %v3789 = vlaneseq
        %v3790 = vshrl.u32 %v3789, 7
        %v3791 = vsub.s32 %v3788, %v3790
        %v3792 = vrot.slane %v3778, %v3791
        %v3793 = vcombine.low %v3785, %v3792
        %v3794 = vcombine.low %v2722, %v2726
        %v3795 = vcombine.low %v2730, %v2734
        %v3796 = vcombine.low %v2738, %v2742
        %v3797 = vcombine.low %v2746, %v2750
        %v3799 = vunpack.c.l.s4 1966171168
        %v3800 = vunpack.c.0.s8 %v3799
        %v3801 = vlaneseq
        %v3802 = vshrl.u32 %v3801, 7
        %v3803 = vsub.s32 %v3800, %v3802
        %v3804 = vrot.slane %v3794, %v3803
        %v3806 = vunpack.c.l.s4 1966171168
        %v3807 = vunpack.c.0.s8 %v3806
        %v3808 = vlaneseq
        %v3809 = vshrl.u32 %v3808, 7
        %v3810 = vsub.s32 %v3807, %v3809
        %v3811 = vrot.slane %v3795, %v3810
        %v3813 = vunpack.c.l.s4 1966171168
        %v3814 = vunpack.c.0.s8 %v3813
        %v3815 = vlaneseq
        %v3816 = vshrl.u32 %v3815, 7
        %v3817 = vsub.s32 %v3814, %v3816
        %v3818 = vrot.slane %v3796, %v3817
        %v3820 = vunpack.c.l.s4 1966171168
        %v3821 = vunpack.c.0.s8 %v3820
        %v3822 = vlaneseq
        %v3823 = vshrl.u32 %v3822, 7
        %v3824 = vsub.s32 %v3821, %v3823
        %v3825 = vrot.slane %v3797, %v3824
        %v3826 = vcombine.low %v3804, %v3811
        %v3827 = vcombine.low %v3818, %v3825
        %v3829 = vunpack.c.l.s4 1966171168
        %v3830 = vunpack.c.0.s8 %v3829
        %v3831 = vlaneseq
        %v3832 = vshrl.u32 %v3831, 7
        %v3833 = vsub.s32 %v3830, %v3832
        %v3834 = vrot.slane %v3826, %v3833
        %v3836 = vunpack.c.l.s4 1966171168
        %v3837 = vunpack.c.0.s8 %v3836
        %v3838 = vlaneseq
        %v3839 = vshrl.u32 %v3838, 7
        %v3840 = vsub.s32 %v3837, %v3839
        %v3841 = vrot.slane %v3827, %v3840
        %v3842 = vcombine.low %v3834, %v3841
        %v3843 = vcombine.low %v2754, %v2758
        %v3844 = vcombine.low %v2762, %v2766
        %v3845 = vcombine.low %v2770, %v2774
        %v3846 = vcombine.low %v2778, %v2782
        %v3848 = vunpack.c.l.s4 1966171168
        %v3849 = vunpack.c.0.s8 %v3848
        %v3850 = vlaneseq
        %v3851 = vshrl.u32 %v3850, 7
        %v3852 = vsub.s32 %v3849, %v3851
        %v3853 = vrot.slane %v3843, %v3852
        %v3855 = vunpack.c.l.s4 1966171168
        %v3856 = vunpack.c.0.s8 %v3855
        %v3857 = vlaneseq
        %v3858 = vshrl.u32 %v3857, 7
        %v3859 = vsub.s32 %v3856, %v3858
        %v3860 = vrot.slane %v3844, %v3859
        %v3862 = vunpack.c.l.s4 1966171168
        %v3863 = vunpack.c.0.s8 %v3862
        %v3864 = vlaneseq
        %v3865 = vshrl.u32 %v3864, 7
        %v3866 = vsub.s32 %v3863, %v3865
        %v3867 = vrot.slane %v3845, %v3866
        %v3869 = vunpack.c.l.s4 1966171168
        %v3870 = vunpack.c.0.s8 %v3869
        %v3871 = vlaneseq
        %v3872 = vshrl.u32 %v3871, 7
        %v3873 = vsub.s32 %v3870, %v3872
        %v3874 = vrot.slane %v3846, %v3873
        %v3875 = vcombine.low %v3853, %v3860
        %v3876 = vcombine.low %v3867, %v3874
        %v3878 = vunpack.c.l.s4 1966171168
        %v3879 = vunpack.c.0.s8 %v3878
        %v3880 = vlaneseq
        %v3881 = vshrl.u32 %v3880, 7
        %v3882 = vsub.s32 %v3879, %v3881
        %v3883 = vrot.slane %v3875, %v3882
        %v3885 = vunpack.c.l.s4 1966171168
        %v3886 = vunpack.c.0.s8 %v3885
        %v3887 = vlaneseq
        %v3888 = vshrl.u32 %v3887, 7
        %v3889 = vsub.s32 %v3886, %v3888
        %v3890 = vrot.slane %v3876, %v3889
        %v3891 = vcombine.low %v3883, %v3890
        %v3892 = vcombine.low %v2786, %v2790
        %v3893 = vcombine.low %v2794, %v2798
        %v3894 = vcombine.low %v2802, %v2806
        %v3895 = vcombine.low %v2810, %v2814
        %v3897 = vunpack.c.l.s4 1966171168
        %v3898 = vunpack.c.0.s8 %v3897
        %v3899 = vlaneseq
        %v3900 = vshrl.u32 %v3899, 7
        %v3901 = vsub.s32 %v3898, %v3900
        %v3902 = vrot.slane %v3892, %v3901
        %v3904 = vunpack.c.l.s4 1966171168
        %v3905 = vunpack.c.0.s8 %v3904
        %v3906 = vlaneseq
        %v3907 = vshrl.u32 %v3906, 7
        %v3908 = vsub.s32 %v3905, %v3907
        %v3909 = vrot.slane %v3893, %v3908
        %v3911 = vunpack.c.l.s4 1966171168
        %v3912 = vunpack.c.0.s8 %v3911
        %v3913 = vlaneseq
        %v3914 = vshrl.u32 %v3913, 7
        %v3915 = vsub.s32 %v3912, %v3914
        %v3916 = vrot.slane %v3894, %v3915
        %v3918 = vunpack.c.l.s4 1966171168
        %v3919 = vunpack.c.0.s8 %v3918
        %v3920 = vlaneseq
        %v3921 = vshrl.u32 %v3920, 7
        %v3922 = vsub.s32 %v3919, %v3921
        %v3923 = vrot.slane %v3895, %v3922
        %v3924 = vcombine.low %v3902, %v3909
        %v3925 = vcombine.low %v3916, %v3923
        %v3927 = vunpack.c.l.s4 1966171168
        %v3928 = vunpack.c.0.s8 %v3927
        %v3929 = vlaneseq
        %v3930 = vshrl.u32 %v3929, 7
        %v3931 = vsub.s32 %v3928, %v3930
        %v3932 = vrot.slane %v3924, %v3931
        %v3934 = vunpack.c.l.s4 1966171168
        %v3935 = vunpack.c.0.s8 %v3934
        %v3936 = vlaneseq
        %v3937 = vshrl.u32 %v3936, 7
        %v3938 = vsub.s32 %v3935, %v3937
        %v3939 = vrot.slane %v3925, %v3938
        %v3940 = vcombine.low %v3932, %v3939
        %v3941 = vcombine.low %v2818, %v2822
        %v3942 = vcombine.low %v2826, %v2830
        %v3943 = vcombine.low %v2834, %v2838
        %v3944 = vcombine.low %v2842, %v2846
        %v3946 = vunpack.c.l.s4 1966171168
        %v3947 = vunpack.c.0.s8 %v3946
        %v3948 = vlaneseq
        %v3949 = vshrl.u32 %v3948, 7
        %v3950 = vsub.s32 %v3947, %v3949
        %v3951 = vrot.slane %v3941, %v3950
        %v3953 = vunpack.c.l.s4 1966171168
        %v3954 = vunpack.c.0.s8 %v3953
        %v3955 = vlaneseq
        %v3956 = vshrl.u32 %v3955, 7
        %v3957 = vsub.s32 %v3954, %v3956
        %v3958 = vrot.slane %v3942, %v3957
        %v3960 = vunpack.c.l.s4 1966171168
        %v3961 = vunpack.c.0.s8 %v3960
        %v3962 = vlaneseq
        %v3963 = vshrl.u32 %v3962, 7
        %v3964 = vsub.s32 %v3961, %v3963
        %v3965 = vrot.slane %v3943, %v3964
        %v3967 = vunpack.c.l.s4 1966171168
        %v3968 = vunpack.c.0.s8 %v3967
        %v3969 = vlaneseq
        %v3970 = vshrl.u32 %v3969, 7
        %v3971 = vsub.s32 %v3968, %v3970
        %v3972 = vrot.slane %v3944, %v3971
        %v3973 = vcombine.low %v3951, %v3958
        %v3974 = vcombine.low %v3965, %v3972
        %v3976 = vunpack.c.l.s4 1966171168
        %v3977 = vunpack.c.0.s8 %v3976
        %v3978 = vlaneseq
        %v3979 = vshrl.u32 %v3978, 7
        %v3980 = vsub.s32 %v3977, %v3979
        %v3981 = vrot.slane %v3973, %v3980
        %v3983 = vunpack.c.l.s4 1966171168
        %v3984 = vunpack.c.0.s8 %v3983
        %v3985 = vlaneseq
        %v3986 = vshrl.u32 %v3985, 7
        %v3987 = vsub.s32 %v3984, %v3986
        %v3988 = vrot.slane %v3974, %v3987
        %v3989 = vcombine.low %v3981, %v3988
        %v3990 = vcombine.low %v2850, %v2854
        %v3991 = vcombine.low %v2858, %v2862
        %v3992 = vcombine.low %v2866, %v2870
        %v3993 = vcombine.low %v2874, %v2878
        %v3995 = vunpack.c.l.s4 1966171168
        %v3996 = vunpack.c.0.s8 %v3995
        %v3997 = vlaneseq
        %v3998 = vshrl.u32 %v3997, 7
        %v3999 = vsub.s32 %v3996, %v3998
        %v4000 = vrot.slane %v3990, %v3999
        %v4002 = vunpack.c.l.s4 1966171168
        %v4003 = vunpack.c.0.s8 %v4002
        %v4004 = vlaneseq
        %v4005 = vshrl.u32 %v4004, 7
        %v4006 = vsub.s32 %v4003, %v4005
        %v4007 = vrot.slane %v3991, %v4006
        %v4009 = vunpack.c.l.s4 1966171168
        %v4010 = vunpack.c.0.s8 %v4009
        %v4011 = vlaneseq
        %v4012 = vshrl.u32 %v4011, 7
        %v4013 = vsub.s32 %v4010, %v4012
        %v4014 = vrot.slane %v3992, %v4013
        %v4016 = vunpack.c.l.s4 1966171168
        %v4017 = vunpack.c.0.s8 %v4016
        %v4018 = vlaneseq
        %v4019 = vshrl.u32 %v4018, 7
        %v4020 = vsub.s32 %v4017, %v4019
        %v4021 = vrot.slane %v3993, %v4020
        %v4022 = vcombine.low %v4000, %v4007
        %v4023 = vcombine.low %v4014, %v4021
        %v4025 = vunpack.c.l.s4 1966171168
        %v4026 = vunpack.c.0.s8 %v4025
        %v4027 = vlaneseq
        %v4028 = vshrl.u32 %v4027, 7
        %v4029 = vsub.s32 %v4026, %v4028
        %v4030 = vrot.slane %v4022, %v4029
        %v4032 = vunpack.c.l.s4 1966171168
        %v4033 = vunpack.c.0.s8 %v4032
        %v4034 = vlaneseq
        %v4035 = vshrl.u32 %v4034, 7
        %v4036 = vsub.s32 %v4033, %v4035
        %v4037 = vrot.slane %v4023, %v4036
        %v4038 = vcombine.low %v4030, %v4037
        %v4039 = vcombine.low %v2882, %v2886
        %v4040 = vcombine.low %v2890, %v2894
        %v4041 = vcombine.low %v2898, %v2902
        %v4042 = vcombine.low %v2906, %v2910
        %v4044 = vunpack.c.l.s4 1966171168
        %v4045 = vunpack.c.0.s8 %v4044
        %v4046 = vlaneseq
        %v4047 = vshrl.u32 %v4046, 7
        %v4048 = vsub.s32 %v4045, %v4047
        %v4049 = vrot.slane %v4039, %v4048
        %v4051 = vunpack.c.l.s4 1966171168
        %v4052 = vunpack.c.0.s8 %v4051
        %v4053 = vlaneseq
        %v4054 = vshrl.u32 %v4053, 7
        %v4055 = vsub.s32 %v4052, %v4054
        %v4056 = vrot.slane %v4040, %v4055
        %v4058 = vunpack.c.l.s4 1966171168
        %v4059 = vunpack.c.0.s8 %v4058
        %v4060 = vlaneseq
        %v4061 = vshrl.u32 %v4060, 7
        %v4062 = vsub.s32 %v4059, %v4061
        %v4063 = vrot.slane %v4041, %v4062
        %v4065 = vunpack.c.l.s4 1966171168
        %v4066 = vunpack.c.0.s8 %v4065
        %v4067 = vlaneseq
        %v4068 = vshrl.u32 %v4067, 7
        %v4069 = vsub.s32 %v4066, %v4068
        %v4070 = vrot.slane %v4042, %v4069
        %v4071 = vcombine.low %v4049, %v4056
        %v4072 = vcombine.low %v4063, %v4070
        %v4074 = vunpack.c.l.s4 1966171168
        %v4075 = vunpack.c.0.s8 %v4074
        %v4076 = vlaneseq
        %v4077 = vshrl.u32 %v4076, 7
        %v4078 = vsub.s32 %v4075, %v4077
        %v4079 = vrot.slane %v4071, %v4078
        %v4081 = vunpack.c.l.s4 1966171168
        %v4082 = vunpack.c.0.s8 %v4081
        %v4083 = vlaneseq
        %v4084 = vshrl.u32 %v4083, 7
        %v4085 = vsub.s32 %v4082, %v4084
        %v4086 = vrot.slane %v4072, %v4085
        %v4087 = vcombine.low %v4079, %v4086
        %v4088 = vcombine.low %v2914, %v2918
        %v4089 = vcombine.low %v2922, %v2926
        %v4090 = vcombine.low %v2930, %v2934
        %v4091 = vcombine.low %v2938, %v2942
        %v4093 = vunpack.c.l.s4 1966171168
        %v4094 = vunpack.c.0.s8 %v4093
        %v4095 = vlaneseq
        %v4096 = vshrl.u32 %v4095, 7
        %v4097 = vsub.s32 %v4094, %v4096
        %v4098 = vrot.slane %v4088, %v4097
        %v4100 = vunpack.c.l.s4 1966171168
        %v4101 = vunpack.c.0.s8 %v4100
        %v4102 = vlaneseq
        %v4103 = vshrl.u32 %v4102, 7
        %v4104 = vsub.s32 %v4101, %v4103
        %v4105 = vrot.slane %v4089, %v4104
        %v4107 = vunpack.c.l.s4 1966171168
        %v4108 = vunpack.c.0.s8 %v4107
        %v4109 = vlaneseq
        %v4110 = vshrl.u32 %v4109, 7
        %v4111 = vsub.s32 %v4108, %v4110
        %v4112 = vrot.slane %v4090, %v4111
        %v4114 = vunpack.c.l.s4 1966171168
        %v4115 = vunpack.c.0.s8 %v4114
        %v4116 = vlaneseq
        %v4117 = vshrl.u32 %v4116, 7
        %v4118 = vsub.s32 %v4115, %v4117
        %v4119 = vrot.slane %v4091, %v4118
        %v4120 = vcombine.low %v4098, %v4105
        %v4121 = vcombine.low %v4112, %v4119
        %v4123 = vunpack.c.l.s4 1966171168
        %v4124 = vunpack.c.0.s8 %v4123
        %v4125 = vlaneseq
        %v4126 = vshrl.u32 %v4125, 7
        %v4127 = vsub.s32 %v4124, %v4126
        %v4128 = vrot.slane %v4120, %v4127
        %v4130 = vunpack.c.l.s4 1966171168
        %v4131 = vunpack.c.0.s8 %v4130
        %v4132 = vlaneseq
        %v4133 = vshrl.u32 %v4132, 7
        %v4134 = vsub.s32 %v4131, %v4133
        %v4135 = vrot.slane %v4121, %v4134
        %v4136 = vcombine.low %v4128, %v4135
        %v4137 = vcombine.low %v2946, %v2950
        %v4138 = vcombine.low %v2954, %v2958
        %v4139 = vcombine.low %v2962, %v2966
        %v4140 = vcombine.low %v2970, %v2974
        %v4142 = vunpack.c.l.s4 1966171168
        %v4143 = vunpack.c.0.s8 %v4142
        %v4144 = vlaneseq
        %v4145 = vshrl.u32 %v4144, 7
        %v4146 = vsub.s32 %v4143, %v4145
        %v4147 = vrot.slane %v4137, %v4146
        %v4149 = vunpack.c.l.s4 1966171168
        %v4150 = vunpack.c.0.s8 %v4149
        %v4151 = vlaneseq
        %v4152 = vshrl.u32 %v4151, 7
        %v4153 = vsub.s32 %v4150, %v4152
        %v4154 = vrot.slane %v4138, %v4153
        %v4156 = vunpack.c.l.s4 1966171168
        %v4157 = vunpack.c.0.s8 %v4156
        %v4158 = vlaneseq
        %v4159 = vshrl.u32 %v4158, 7
        %v4160 = vsub.s32 %v4157, %v4159
        %v4161 = vrot.slane %v4139, %v4160
        %v4163 = vunpack.c.l.s4 1966171168
        %v4164 = vunpack.c.0.s8 %v4163
        %v4165 = vlaneseq
        %v4166 = vshrl.u32 %v4165, 7
        %v4167 = vsub.s32 %v4164, %v4166
        %v4168 = vrot.slane %v4140, %v4167
        %v4169 = vcombine.low %v4147, %v4154
        %v4170 = vcombine.low %v4161, %v4168
        %v4172 = vunpack.c.l.s4 1966171168
        %v4173 = vunpack.c.0.s8 %v4172
        %v4174 = vlaneseq
        %v4175 = vshrl.u32 %v4174, 7
        %v4176 = vsub.s32 %v4173, %v4175
        %v4177 = vrot.slane %v4169, %v4176
        %v4179 = vunpack.c.l.s4 1966171168
        %v4180 = vunpack.c.0.s8 %v4179
        %v4181 = vlaneseq
        %v4182 = vshrl.u32 %v4181, 7
        %v4183 = vsub.s32 %v4180, %v4182
        %v4184 = vrot.slane %v4170, %v4183
        %v4185 = vcombine.low %v4177, %v4184
        %v4186 = vcombine.low %v2978, %v2982
        %v4187 = vcombine.low %v2986, %v2990
        %v4188 = vcombine.low %v2994, %v2998
        %v4189 = vcombine.low %v3002, %v3006
        %v4191 = vunpack.c.l.s4 1966171168
        %v4192 = vunpack.c.0.s8 %v4191
        %v4193 = vlaneseq
        %v4194 = vshrl.u32 %v4193, 7
        %v4195 = vsub.s32 %v4192, %v4194
        %v4196 = vrot.slane %v4186, %v4195
        %v4198 = vunpack.c.l.s4 1966171168
        %v4199 = vunpack.c.0.s8 %v4198
        %v4200 = vlaneseq
        %v4201 = vshrl.u32 %v4200, 7
        %v4202 = vsub.s32 %v4199, %v4201
        %v4203 = vrot.slane %v4187, %v4202
        %v4205 = vunpack.c.l.s4 1966171168
        %v4206 = vunpack.c.0.s8 %v4205
        %v4207 = vlaneseq
        %v4208 = vshrl.u32 %v4207, 7
        %v4209 = vsub.s32 %v4206, %v4208
        %v4210 = vrot.slane %v4188, %v4209
        %v4212 = vunpack.c.l.s4 1966171168
        %v4213 = vunpack.c.0.s8 %v4212
        %v4214 = vlaneseq
        %v4215 = vshrl.u32 %v4214, 7
        %v4216 = vsub.s32 %v4213, %v4215
        %v4217 = vrot.slane %v4189, %v4216
        %v4218 = vcombine.low %v4196, %v4203
        %v4219 = vcombine.low %v4210, %v4217
        %v4221 = vunpack.c.l.s4 1966171168
        %v4222 = vunpack.c.0.s8 %v4221
        %v4223 = vlaneseq
        %v4224 = vshrl.u32 %v4223, 7
        %v4225 = vsub.s32 %v4222, %v4224
        %v4226 = vrot.slane %v4218, %v4225
        %v4228 = vunpack.c.l.s4 1966171168
        %v4229 = vunpack.c.0.s8 %v4228
        %v4230 = vlaneseq
        %v4231 = vshrl.u32 %v4230, 7
        %v4232 = vsub.s32 %v4229, %v4231
        %v4233 = vrot.slane %v4219, %v4232
        %v4234 = vcombine.low %v4226, %v4233
        %v4235 = vcombine.low %v3010, %v3014
        %v4236 = vcombine.low %v3018, %v3022
        %v4237 = vcombine.low %v3026, %v3030
        %v4238 = vcombine.low %v3034, %v3038
        %v4240 = vunpack.c.l.s4 1966171168
        %v4241 = vunpack.c.0.s8 %v4240
        %v4242 = vlaneseq
        %v4243 = vshrl.u32 %v4242, 7
        %v4244 = vsub.s32 %v4241, %v4243
        %v4245 = vrot.slane %v4235, %v4244
        %v4247 = vunpack.c.l.s4 1966171168
        %v4248 = vunpack.c.0.s8 %v4247
        %v4249 = vlaneseq
        %v4250 = vshrl.u32 %v4249, 7
        %v4251 = vsub.s32 %v4248, %v4250
        %v4252 = vrot.slane %v4236, %v4251
        %v4254 = vunpack.c.l.s4 1966171168
        %v4255 = vunpack.c.0.s8 %v4254
        %v4256 = vlaneseq
        %v4257 = vshrl.u32 %v4256, 7
        %v4258 = vsub.s32 %v4255, %v4257
        %v4259 = vrot.slane %v4237, %v4258
        %v4261 = vunpack.c.l.s4 1966171168
        %v4262 = vunpack.c.0.s8 %v4261
        %v4263 = vlaneseq
        %v4264 = vshrl.u32 %v4263, 7
        %v4265 = vsub.s32 %v4262, %v4264
        %v4266 = vrot.slane %v4238, %v4265
        %v4267 = vcombine.low %v4245, %v4252
        %v4268 = vcombine.low %v4259, %v4266
        %v4270 = vunpack.c.l.s4 1966171168
        %v4271 = vunpack.c.0.s8 %v4270
        %v4272 = vlaneseq
        %v4273 = vshrl.u32 %v4272, 7
        %v4274 = vsub.s32 %v4271, %v4273
        %v4275 = vrot.slane %v4267, %v4274
        %v4277 = vunpack.c.l.s4 1966171168
        %v4278 = vunpack.c.0.s8 %v4277
        %v4279 = vlaneseq
        %v4280 = vshrl.u32 %v4279, 7
        %v4281 = vsub.s32 %v4278, %v4280
        %v4282 = vrot.slane %v4268, %v4281
        %v4283 = vcombine.low %v4275, %v4282
        %v4284 = vcombine.low %v3042, %v3046
        %v4285 = vcombine.low %v3050, %v3054
        %v4286 = vcombine.low %v3058, %v3062
        %v4287 = vcombine.low %v3066, %v3070
        %v4289 = vunpack.c.l.s4 1966171168
        %v4290 = vunpack.c.0.s8 %v4289
        %v4291 = vlaneseq
        %v4292 = vshrl.u32 %v4291, 7
        %v4293 = vsub.s32 %v4290, %v4292
        %v4294 = vrot.slane %v4284, %v4293
        %v4296 = vunpack.c.l.s4 1966171168
        %v4297 = vunpack.c.0.s8 %v4296
        %v4298 = vlaneseq
        %v4299 = vshrl.u32 %v4298, 7
        %v4300 = vsub.s32 %v4297, %v4299
        %v4301 = vrot.slane %v4285, %v4300
        %v4303 = vunpack.c.l.s4 1966171168
        %v4304 = vunpack.c.0.s8 %v4303
        %v4305 = vlaneseq
        %v4306 = vshrl.u32 %v4305, 7
        %v4307 = vsub.s32 %v4304, %v4306
        %v4308 = vrot.slane %v4286, %v4307
        %v4310 = vunpack.c.l.s4 1966171168
        %v4311 = vunpack.c.0.s8 %v4310
        %v4312 = vlaneseq
        %v4313 = vshrl.u32 %v4312, 7
        %v4314 = vsub.s32 %v4311, %v4313
        %v4315 = vrot.slane %v4287, %v4314
        %v4316 = vcombine.low %v4294, %v4301
        %v4317 = vcombine.low %v4308, %v4315
        %v4319 = vunpack.c.l.s4 1966171168
        %v4320 = vunpack.c.0.s8 %v4319
        %v4321 = vlaneseq
        %v4322 = vshrl.u32 %v4321, 7
        %v4323 = vsub.s32 %v4320, %v4322
        %v4324 = vrot.slane %v4316, %v4323
        %v4326 = vunpack.c.l.s4 1966171168
        %v4327 = vunpack.c.0.s8 %v4326
        %v4328 = vlaneseq
        %v4329 = vshrl.u32 %v4328, 7
        %v4330 = vsub.s32 %v4327, %v4329
        %v4331 = vrot.slane %v4317, %v4330
        %v4332 = vcombine.low %v4324, %v4331
        %v4333 = vcombine.low %v3074, %v3078
        %v4334 = vcombine.low %v3082, %v3086
        %v4335 = vcombine.low %v3090, %v3094
        %v4336 = vcombine.low %v3098, %v3102
        %v4338 = vunpack.c.l.s4 1966171168
        %v4339 = vunpack.c.0.s8 %v4338
        %v4340 = vlaneseq
        %v4341 = vshrl.u32 %v4340, 7
        %v4342 = vsub.s32 %v4339, %v4341
        %v4343 = vrot.slane %v4333, %v4342
        %v4345 = vunpack.c.l.s4 1966171168
        %v4346 = vunpack.c.0.s8 %v4345
        %v4347 = vlaneseq
        %v4348 = vshrl.u32 %v4347, 7
        %v4349 = vsub.s32 %v4346, %v4348
        %v4350 = vrot.slane %v4334, %v4349
        %v4352 = vunpack.c.l.s4 1966171168
        %v4353 = vunpack.c.0.s8 %v4352
        %v4354 = vlaneseq
        %v4355 = vshrl.u32 %v4354, 7
        %v4356 = vsub.s32 %v4353, %v4355
        %v4357 = vrot.slane %v4335, %v4356
        %v4359 = vunpack.c.l.s4 1966171168
        %v4360 = vunpack.c.0.s8 %v4359
        %v4361 = vlaneseq
        %v4362 = vshrl.u32 %v4361, 7
        %v4363 = vsub.s32 %v4360, %v4362
        %v4364 = vrot.slane %v4336, %v4363
        %v4365 = vcombine.low %v4343, %v4350
        %v4366 = vcombine.low %v4357, %v4364
        %v4368 = vunpack.c.l.s4 1966171168
        %v4369 = vunpack.c.0.s8 %v4368
        %v4370 = vlaneseq
        %v4371 = vshrl.u32 %v4370, 7
        %v4372 = vsub.s32 %v4369, %v4371
        %v4373 = vrot.slane %v4365, %v4372
        %v4375 = vunpack.c.l.s4 1966171168
        %v4376 = vunpack.c.0.s8 %v4375
        %v4377 = vlaneseq
        %v4378 = vshrl.u32 %v4377, 7
        %v4379 = vsub.s32 %v4376, %v4378
        %v4380 = vrot.slane %v4366, %v4379
        %v4381 = vcombine.low %v4373, %v4380
        %v4382 = vcombine.low %v3106, %v3110
        %v4383 = vcombine.low %v3114, %v3118
        %v4384 = vcombine.low %v3122, %v3126
        %v4385 = vcombine.low %v3130, %v3134
        %v4387 = vunpack.c.l.s4 1966171168
        %v4388 = vunpack.c.0.s8 %v4387
        %v4389 = vlaneseq
        %v4390 = vshrl.u32 %v4389, 7
        %v4391 = vsub.s32 %v4388, %v4390
        %v4392 = vrot.slane %v4382, %v4391
        %v4394 = vunpack.c.l.s4 1966171168
        %v4395 = vunpack.c.0.s8 %v4394
        %v4396 = vlaneseq
        %v4397 = vshrl.u32 %v4396, 7
        %v4398 = vsub.s32 %v4395, %v4397
        %v4399 = vrot.slane %v4383, %v4398
        %v4401 = vunpack.c.l.s4 1966171168
        %v4402 = vunpack.c.0.s8 %v4401
        %v4403 = vlaneseq
        %v4404 = vshrl.u32 %v4403, 7
        %v4405 = vsub.s32 %v4402, %v4404
        %v4406 = vrot.slane %v4384, %v4405
        %v4408 = vunpack.c.l.s4 1966171168
        %v4409 = vunpack.c.0.s8 %v4408
        %v4410 = vlaneseq
        %v4411 = vshrl.u32 %v4410, 7
        %v4412 = vsub.s32 %v4409, %v4411
        %v4413 = vrot.slane %v4385, %v4412
        %v4414 = vcombine.low %v4392, %v4399
        %v4415 = vcombine.low %v4406, %v4413
        %v4417 = vunpack.c.l.s4 1966171168
        %v4418 = vunpack.c.0.s8 %v4417
        %v4419 = vlaneseq
        %v4420 = vshrl.u32 %v4419, 7
        %v4421 = vsub.s32 %v4418, %v4420
        %v4422 = vrot.slane %v4414, %v4421
        %v4424 = vunpack.c.l.s4 1966171168
        %v4425 = vunpack.c.0.s8 %v4424
        %v4426 = vlaneseq
        %v4427 = vshrl.u32 %v4426, 7
        %v4428 = vsub.s32 %v4425, %v4427
        %v4429 = vrot.slane %v4415, %v4428
        %v4430 = vcombine.low %v4422, %v4429
        %v4431 = vcombine.low %v3138, %v3142
        %v4432 = vcombine.low %v3146, %v3150
        %v4433 = vcombine.low %v3154, %v3158
        %v4434 = vcombine.low %v3162, %v3166
        %v4436 = vunpack.c.l.s4 1966171168
        %v4437 = vunpack.c.0.s8 %v4436
        %v4438 = vlaneseq
        %v4439 = vshrl.u32 %v4438, 7
        %v4440 = vsub.s32 %v4437, %v4439
        %v4441 = vrot.slane %v4431, %v4440
        %v4443 = vunpack.c.l.s4 1966171168
        %v4444 = vunpack.c.0.s8 %v4443
        %v4445 = vlaneseq
        %v4446 = vshrl.u32 %v4445, 7
        %v4447 = vsub.s32 %v4444, %v4446
        %v4448 = vrot.slane %v4432, %v4447
        %v4450 = vunpack.c.l.s4 1966171168
        %v4451 = vunpack.c.0.s8 %v4450
        %v4452 = vlaneseq
        %v4453 = vshrl.u32 %v4452, 7
        %v4454 = vsub.s32 %v4451, %v4453
        %v4455 = vrot.slane %v4433, %v4454
        %v4457 = vunpack.c.l.s4 1966171168
        %v4458 = vunpack.c.0.s8 %v4457
        %v4459 = vlaneseq
        %v4460 = vshrl.u32 %v4459, 7
        %v4461 = vsub.s32 %v4458, %v4460
        %v4462 = vrot.slane %v4434, %v4461
        %v4463 = vcombine.low %v4441, %v4448
        %v4464 = vcombine.low %v4455, %v4462
        %v4466 = vunpack.c.l.s4 1966171168
        %v4467 = vunpack.c.0.s8 %v4466
        %v4468 = vlaneseq
        %v4469 = vshrl.u32 %v4468, 7
        %v4470 = vsub.s32 %v4467, %v4469
        %v4471 = vrot.slane %v4463, %v4470
        %v4473 = vunpack.c.l.s4 1966171168
        %v4474 = vunpack.c.0.s8 %v4473
        %v4475 = vlaneseq
        %v4476 = vshrl.u32 %v4475, 7
        %v4477 = vsub.s32 %v4474, %v4476
        %v4478 = vrot.slane %v4464, %v4477
        %v4479 = vcombine.low %v4471, %v4478
        %v4480 = vcombine.low %v3170, %v3174
        %v4481 = vcombine.low %v3178, %v3182
        %v4482 = vcombine.low %v3186, %v3190
        %v4483 = vcombine.low %v3194, %v3198
        %v4485 = vunpack.c.l.s4 1966171168
        %v4486 = vunpack.c.0.s8 %v4485
        %v4487 = vlaneseq
        %v4488 = vshrl.u32 %v4487, 7
        %v4489 = vsub.s32 %v4486, %v4488
        %v4490 = vrot.slane %v4480, %v4489
        %v4492 = vunpack.c.l.s4 1966171168
        %v4493 = vunpack.c.0.s8 %v4492
        %v4494 = vlaneseq
        %v4495 = vshrl.u32 %v4494, 7
        %v4496 = vsub.s32 %v4493, %v4495
        %v4497 = vrot.slane %v4481, %v4496
        %v4499 = vunpack.c.l.s4 1966171168
        %v4500 = vunpack.c.0.s8 %v4499
        %v4501 = vlaneseq
        %v4502 = vshrl.u32 %v4501, 7
        %v4503 = vsub.s32 %v4500, %v4502
        %v4504 = vrot.slane %v4482, %v4503
        %v4506 = vunpack.c.l.s4 1966171168
        %v4507 = vunpack.c.0.s8 %v4506
        %v4508 = vlaneseq
        %v4509 = vshrl.u32 %v4508, 7
        %v4510 = vsub.s32 %v4507, %v4509
        %v4511 = vrot.slane %v4483, %v4510
        %v4512 = vcombine.low %v4490, %v4497
        %v4513 = vcombine.low %v4504, %v4511
        %v4515 = vunpack.c.l.s4 1966171168
        %v4516 = vunpack.c.0.s8 %v4515
        %v4517 = vlaneseq
        %v4518 = vshrl.u32 %v4517, 7
        %v4519 = vsub.s32 %v4516, %v4518
        %v4520 = vrot.slane %v4512, %v4519
        %v4522 = vunpack.c.l.s4 1966171168
        %v4523 = vunpack.c.0.s8 %v4522
        %v4524 = vlaneseq
        %v4525 = vshrl.u32 %v4524, 7
        %v4526 = vsub.s32 %v4523, %v4525
        %v4527 = vrot.slane %v4513, %v4526
        %v4528 = vcombine.low %v4520, %v4527
        %v4529 = vcombine.low %v3202, %v3206
        %v4530 = vcombine.low %v3210, %v3214
        %v4531 = vcombine.low %v3218, %v3222
        %v4532 = vcombine.low %v3226, %v3230
        %v4534 = vunpack.c.l.s4 1966171168
        %v4535 = vunpack.c.0.s8 %v4534
        %v4536 = vlaneseq
        %v4537 = vshrl.u32 %v4536, 7
        %v4538 = vsub.s32 %v4535, %v4537
        %v4539 = vrot.slane %v4529, %v4538
        %v4541 = vunpack.c.l.s4 1966171168
        %v4542 = vunpack.c.0.s8 %v4541
        %v4543 = vlaneseq
        %v4544 = vshrl.u32 %v4543, 7
        %v4545 = vsub.s32 %v4542, %v4544
        %v4546 = vrot.slane %v4530, %v4545
        %v4548 = vunpack.c.l.s4 1966171168
        %v4549 = vunpack.c.0.s8 %v4548
        %v4550 = vlaneseq
        %v4551 = vshrl.u32 %v4550, 7
        %v4552 = vsub.s32 %v4549, %v4551
        %v4553 = vrot.slane %v4531, %v4552
        %v4555 = vunpack.c.l.s4 1966171168
        %v4556 = vunpack.c.0.s8 %v4555
        %v4557 = vlaneseq
        %v4558 = vshrl.u32 %v4557, 7
        %v4559 = vsub.s32 %v4556, %v4558
        %v4560 = vrot.slane %v4532, %v4559
        %v4561 = vcombine.low %v4539, %v4546
        %v4562 = vcombine.low %v4553, %v4560
        %v4564 = vunpack.c.l.s4 1966171168
        %v4565 = vunpack.c.0.s8 %v4564
        %v4566 = vlaneseq
        %v4567 = vshrl.u32 %v4566, 7
        %v4568 = vsub.s32 %v4565, %v4567
        %v4569 = vrot.slane %v4561, %v4568
        %v4571 = vunpack.c.l.s4 1966171168
        %v4572 = vunpack.c.0.s8 %v4571
        %v4573 = vlaneseq
        %v4574 = vshrl.u32 %v4573, 7
        %v4575 = vsub.s32 %v4572, %v4574
        %v4576 = vrot.slane %v4562, %v4575
        %v4577 = vcombine.low %v4569, %v4576
        %v4578 = vcombine.low %v3234, %v3238
        %v4579 = vcombine.low %v3242, %v3246
        %v4580 = vcombine.low %v3250, %v3254
        %v4581 = vcombine.low %v3258, %v3262
        %v4583 = vunpack.c.l.s4 1966171168
        %v4584 = vunpack.c.0.s8 %v4583
        %v4585 = vlaneseq
        %v4586 = vshrl.u32 %v4585, 7
        %v4587 = vsub.s32 %v4584, %v4586
        %v4588 = vrot.slane %v4578, %v4587
        %v4590 = vunpack.c.l.s4 1966171168
        %v4591 = vunpack.c.0.s8 %v4590
        %v4592 = vlaneseq
        %v4593 = vshrl.u32 %v4592, 7
        %v4594 = vsub.s32 %v4591, %v4593
        %v4595 = vrot.slane %v4579, %v4594
        %v4597 = vunpack.c.l.s4 1966171168
        %v4598 = vunpack.c.0.s8 %v4597
        %v4599 = vlaneseq
        %v4600 = vshrl.u32 %v4599, 7
        %v4601 = vsub.s32 %v4598, %v4600
        %v4602 = vrot.slane %v4580, %v4601
        %v4604 = vunpack.c.l.s4 1966171168
        %v4605 = vunpack.c.0.s8 %v4604
        %v4606 = vlaneseq
        %v4607 = vshrl.u32 %v4606, 7
        %v4608 = vsub.s32 %v4605, %v4607
        %v4609 = vrot.slane %v4581, %v4608
        %v4610 = vcombine.low %v4588, %v4595
        %v4611 = vcombine.low %v4602, %v4609
        %v4613 = vunpack.c.l.s4 1966171168
        %v4614 = vunpack.c.0.s8 %v4613
        %v4615 = vlaneseq
        %v4616 = vshrl.u32 %v4615, 7
        %v4617 = vsub.s32 %v4614, %v4616
        %v4618 = vrot.slane %v4610, %v4617
        %v4620 = vunpack.c.l.s4 1966171168
        %v4621 = vunpack.c.0.s8 %v4620
        %v4622 = vlaneseq
        %v4623 = vshrl.u32 %v4622, 7
        %v4624 = vsub.s32 %v4621, %v4623
        %v4625 = vrot.slane %v4611, %v4624
        %v4626 = vcombine.low %v4618, %v4625
        %v4627 = vcombine.low %v3266, %v3270
        %v4628 = vcombine.low %v3274, %v3278
        %v4629 = vcombine.low %v3282, %v3286
        %v4630 = vcombine.low %v3290, %v3294
        %v4632 = vunpack.c.l.s4 1966171168
        %v4633 = vunpack.c.0.s8 %v4632
        %v4634 = vlaneseq
        %v4635 = vshrl.u32 %v4634, 7
        %v4636 = vsub.s32 %v4633, %v4635
        %v4637 = vrot.slane %v4627, %v4636
        %v4639 = vunpack.c.l.s4 1966171168
        %v4640 = vunpack.c.0.s8 %v4639
        %v4641 = vlaneseq
        %v4642 = vshrl.u32 %v4641, 7
        %v4643 = vsub.s32 %v4640, %v4642
        %v4644 = vrot.slane %v4628, %v4643
        %v4646 = vunpack.c.l.s4 1966171168
        %v4647 = vunpack.c.0.s8 %v4646
        %v4648 = vlaneseq
        %v4649 = vshrl.u32 %v4648, 7
        %v4650 = vsub.s32 %v4647, %v4649
        %v4651 = vrot.slane %v4629, %v4650
        %v4653 = vunpack.c.l.s4 1966171168
        %v4654 = vunpack.c.0.s8 %v4653
        %v4655 = vlaneseq
        %v4656 = vshrl.u32 %v4655, 7
        %v4657 = vsub.s32 %v4654, %v4656
        %v4658 = vrot.slane %v4630, %v4657
        %v4659 = vcombine.low %v4637, %v4644
        %v4660 = vcombine.low %v4651, %v4658
        %v4662 = vunpack.c.l.s4 1966171168
        %v4663 = vunpack.c.0.s8 %v4662
        %v4664 = vlaneseq
        %v4665 = vshrl.u32 %v4664, 7
        %v4666 = vsub.s32 %v4663, %v4665
        %v4667 = vrot.slane %v4659, %v4666
        %v4669 = vunpack.c.l.s4 1966171168
        %v4670 = vunpack.c.0.s8 %v4669
        %v4671 = vlaneseq
        %v4672 = vshrl.u32 %v4671, 7
        %v4673 = vsub.s32 %v4670, %v4672
        %v4674 = vrot.slane %v4660, %v4673
        %v4675 = vcombine.low %v4667, %v4674
        %v4676 = vcombine.low %v3298, %v3302
        %v4677 = vcombine.low %v3306, %v3310
        %v4678 = vcombine.low %v3314, %v3318
        %v4679 = vcombine.low %v3322, %v3326
        %v4681 = vunpack.c.l.s4 1966171168
        %v4682 = vunpack.c.0.s8 %v4681
        %v4683 = vlaneseq
        %v4684 = vshrl.u32 %v4683, 7
        %v4685 = vsub.s32 %v4682, %v4684
        %v4686 = vrot.slane %v4676, %v4685
        %v4688 = vunpack.c.l.s4 1966171168
        %v4689 = vunpack.c.0.s8 %v4688
        %v4690 = vlaneseq
        %v4691 = vshrl.u32 %v4690, 7
        %v4692 = vsub.s32 %v4689, %v4691
        %v4693 = vrot.slane %v4677, %v4692
        %v4695 = vunpack.c.l.s4 1966171168
        %v4696 = vunpack.c.0.s8 %v4695
        %v4697 = vlaneseq
        %v4698 = vshrl.u32 %v4697, 7
        %v4699 = vsub.s32 %v4696, %v4698
        %v4700 = vrot.slane %v4678, %v4699
        %v4702 = vunpack.c.l.s4 1966171168
        %v4703 = vunpack.c.0.s8 %v4702
        %v4704 = vlaneseq
        %v4705 = vshrl.u32 %v4704, 7
        %v4706 = vsub.s32 %v4703, %v4705
        %v4707 = vrot.slane %v4679, %v4706
        %v4708 = vcombine.low %v4686, %v4693
        %v4709 = vcombine.low %v4700, %v4707
        %v4711 = vunpack.c.l.s4 1966171168
        %v4712 = vunpack.c.0.s8 %v4711
        %v4713 = vlaneseq
        %v4714 = vshrl.u32 %v4713, 7
        %v4715 = vsub.s32 %v4712, %v4714
        %v4716 = vrot.slane %v4708, %v4715
        %v4718 = vunpack.c.l.s4 1966171168
        %v4719 = vunpack.c.0.s8 %v4718
        %v4720 = vlaneseq
        %v4721 = vshrl.u32 %v4720, 7
        %v4722 = vsub.s32 %v4719, %v4721
        %v4723 = vrot.slane %v4709, %v4722
        %v4724 = vcombine.low %v4716, %v4723
        %v4725 = vcombine.low %v3330, %v3334
        %v4726 = vcombine.low %v3338, %v3342
        %v4727 = vcombine.low %v3346, %v3350
        %v4728 = vcombine.low %v3354, %v3358
        %v4730 = vunpack.c.l.s4 1966171168
        %v4731 = vunpack.c.0.s8 %v4730
        %v4732 = vlaneseq
        %v4733 = vshrl.u32 %v4732, 7
        %v4734 = vsub.s32 %v4731, %v4733
        %v4735 = vrot.slane %v4725, %v4734
        %v4737 = vunpack.c.l.s4 1966171168
        %v4738 = vunpack.c.0.s8 %v4737
        %v4739 = vlaneseq
        %v4740 = vshrl.u32 %v4739, 7
        %v4741 = vsub.s32 %v4738, %v4740
        %v4742 = vrot.slane %v4726, %v4741
        %v4744 = vunpack.c.l.s4 1966171168
        %v4745 = vunpack.c.0.s8 %v4744
        %v4746 = vlaneseq
        %v4747 = vshrl.u32 %v4746, 7
        %v4748 = vsub.s32 %v4745, %v4747
        %v4749 = vrot.slane %v4727, %v4748
        %v4751 = vunpack.c.l.s4 1966171168
        %v4752 = vunpack.c.0.s8 %v4751
        %v4753 = vlaneseq
        %v4754 = vshrl.u32 %v4753, 7
        %v4755 = vsub.s32 %v4752, %v4754
        %v4756 = vrot.slane %v4728, %v4755
        %v4757 = vcombine.low %v4735, %v4742
        %v4758 = vcombine.low %v4749, %v4756
        %v4760 = vunpack.c.l.s4 1966171168
        %v4761 = vunpack.c.0.s8 %v4760
        %v4762 = vlaneseq
        %v4763 = vshrl.u32 %v4762, 7
        %v4764 = vsub.s32 %v4761, %v4763
        %v4765 = vrot.slane %v4757, %v4764
        %v4767 = vunpack.c.l.s4 1966171168
        %v4768 = vunpack.c.0.s8 %v4767
        %v4769 = vlaneseq
        %v4770 = vshrl.u32 %v4769, 7
        %v4771 = vsub.s32 %v4768, %v4770
        %v4772 = vrot.slane %v4758, %v4771
        %v4773 = vcombine.low %v4765, %v4772
        %v4774 = vcombine.low %v3362, %v3366
        %v4775 = vcombine.low %v3370, %v3374
        %v4776 = vcombine.low %v3378, %v3382
        %v4777 = vcombine.low %v3386, %v3390
        %v4779 = vunpack.c.l.s4 1966171168
        %v4780 = vunpack.c.0.s8 %v4779
        %v4781 = vlaneseq
        %v4782 = vshrl.u32 %v4781, 7
        %v4783 = vsub.s32 %v4780, %v4782
        %v4784 = vrot.slane %v4774, %v4783
        %v4786 = vunpack.c.l.s4 1966171168
        %v4787 = vunpack.c.0.s8 %v4786
        %v4788 = vlaneseq
        %v4789 = vshrl.u32 %v4788, 7
        %v4790 = vsub.s32 %v4787, %v4789
        %v4791 = vrot.slane %v4775, %v4790
        %v4793 = vunpack.c.l.s4 1966171168
        %v4794 = vunpack.c.0.s8 %v4793
        %v4795 = vlaneseq
        %v4796 = vshrl.u32 %v4795, 7
        %v4797 = vsub.s32 %v4794, %v4796
        %v4798 = vrot.slane %v4776, %v4797
        %v4800 = vunpack.c.l.s4 1966171168
        %v4801 = vunpack.c.0.s8 %v4800
        %v4802 = vlaneseq
        %v4803 = vshrl.u32 %v4802, 7
        %v4804 = vsub.s32 %v4801, %v4803
        %v4805 = vrot.slane %v4777, %v4804
        %v4806 = vcombine.low %v4784, %v4791
        %v4807 = vcombine.low %v4798, %v4805
        %v4809 = vunpack.c.l.s4 1966171168
        %v4810 = vunpack.c.0.s8 %v4809
        %v4811 = vlaneseq
        %v4812 = vshrl.u32 %v4811, 7
        %v4813 = vsub.s32 %v4810, %v4812
        %v4814 = vrot.slane %v4806, %v4813
        %v4816 = vunpack.c.l.s4 1966171168
        %v4817 = vunpack.c.0.s8 %v4816
        %v4818 = vlaneseq
        %v4819 = vshrl.u32 %v4818, 7
        %v4820 = vsub.s32 %v4817, %v4819
        %v4821 = vrot.slane %v4807, %v4820
        %v4822 = vcombine.low %v4814, %v4821
        %v4823 = vcombine.low %v3394, %v3398
        %v4824 = vcombine.low %v3402, %v3406
        %v4825 = vcombine.low %v3410, %v3414
        %v4826 = vcombine.low %v3418, %v3422
        %v4828 = vunpack.c.l.s4 1966171168
        %v4829 = vunpack.c.0.s8 %v4828
        %v4830 = vlaneseq
        %v4831 = vshrl.u32 %v4830, 7
        %v4832 = vsub.s32 %v4829, %v4831
        %v4833 = vrot.slane %v4823, %v4832
        %v4835 = vunpack.c.l.s4 1966171168
        %v4836 = vunpack.c.0.s8 %v4835
        %v4837 = vlaneseq
        %v4838 = vshrl.u32 %v4837, 7
        %v4839 = vsub.s32 %v4836, %v4838
        %v4840 = vrot.slane %v4824, %v4839
        %v4842 = vunpack.c.l.s4 1966171168
        %v4843 = vunpack.c.0.s8 %v4842
        %v4844 = vlaneseq
        %v4845 = vshrl.u32 %v4844, 7
        %v4846 = vsub.s32 %v4843, %v4845
        %v4847 = vrot.slane %v4825, %v4846
        %v4849 = vunpack.c.l.s4 1966171168
        %v4850 = vunpack.c.0.s8 %v4849
        %v4851 = vlaneseq
        %v4852 = vshrl.u32 %v4851, 7
        %v4853 = vsub.s32 %v4850, %v4852
        %v4854 = vrot.slane %v4826, %v4853
        %v4855 = vcombine.low %v4833, %v4840
        %v4856 = vcombine.low %v4847, %v4854
        %v4858 = vunpack.c.l.s4 1966171168
        %v4859 = vunpack.c.0.s8 %v4858
        %v4860 = vlaneseq
        %v4861 = vshrl.u32 %v4860, 7
        %v4862 = vsub.s32 %v4859, %v4861
        %v4863 = vrot.slane %v4855, %v4862
        %v4865 = vunpack.c.l.s4 1966171168
        %v4866 = vunpack.c.0.s8 %v4865
        %v4867 = vlaneseq
        %v4868 = vshrl.u32 %v4867, 7
        %v4869 = vsub.s32 %v4866, %v4868
        %v4870 = vrot.slane %v4856, %v4869
        %v4871 = vcombine.low %v4863, %v4870
        %v4872 = vcombine.low %v3426, %v3430
        %v4873 = vcombine.low %v3434, %v3438
        %v4874 = vcombine.low %v3442, %v3446
        %v4875 = vcombine.low %v3450, %v3454
        %v4877 = vunpack.c.l.s4 1966171168
        %v4878 = vunpack.c.0.s8 %v4877
        %v4879 = vlaneseq
        %v4880 = vshrl.u32 %v4879, 7
        %v4881 = vsub.s32 %v4878, %v4880
        %v4882 = vrot.slane %v4872, %v4881
        %v4884 = vunpack.c.l.s4 1966171168
        %v4885 = vunpack.c.0.s8 %v4884
        %v4886 = vlaneseq
        %v4887 = vshrl.u32 %v4886, 7
        %v4888 = vsub.s32 %v4885, %v4887
        %v4889 = vrot.slane %v4873, %v4888
        %v4891 = vunpack.c.l.s4 1966171168
        %v4892 = vunpack.c.0.s8 %v4891
        %v4893 = vlaneseq
        %v4894 = vshrl.u32 %v4893, 7
        %v4895 = vsub.s32 %v4892, %v4894
        %v4896 = vrot.slane %v4874, %v4895
        %v4898 = vunpack.c.l.s4 1966171168
        %v4899 = vunpack.c.0.s8 %v4898
        %v4900 = vlaneseq
        %v4901 = vshrl.u32 %v4900, 7
        %v4902 = vsub.s32 %v4899, %v4901
        %v4903 = vrot.slane %v4875, %v4902
        %v4904 = vcombine.low %v4882, %v4889
        %v4905 = vcombine.low %v4896, %v4903
        %v4907 = vunpack.c.l.s4 1966171168
        %v4908 = vunpack.c.0.s8 %v4907
        %v4909 = vlaneseq
        %v4910 = vshrl.u32 %v4909, 7
        %v4911 = vsub.s32 %v4908, %v4910
        %v4912 = vrot.slane %v4904, %v4911
        %v4914 = vunpack.c.l.s4 1966171168
        %v4915 = vunpack.c.0.s8 %v4914
        %v4916 = vlaneseq
        %v4917 = vshrl.u32 %v4916, 7
        %v4918 = vsub.s32 %v4915, %v4917
        %v4919 = vrot.slane %v4905, %v4918
        %v4920 = vcombine.low %v4912, %v4919
        %v4921 = vcombine.low %v3458, %v3462
        %v4922 = vcombine.low %v3466, %v3470
        %v4923 = vcombine.low %v3474, %v3478
        %v4924 = vcombine.low %v3482, %v3486
        %v4926 = vunpack.c.l.s4 1966171168
        %v4927 = vunpack.c.0.s8 %v4926
        %v4928 = vlaneseq
        %v4929 = vshrl.u32 %v4928, 7
        %v4930 = vsub.s32 %v4927, %v4929
        %v4931 = vrot.slane %v4921, %v4930
        %v4933 = vunpack.c.l.s4 1966171168
        %v4934 = vunpack.c.0.s8 %v4933
        %v4935 = vlaneseq
        %v4936 = vshrl.u32 %v4935, 7
        %v4937 = vsub.s32 %v4934, %v4936
        %v4938 = vrot.slane %v4922, %v4937
        %v4940 = vunpack.c.l.s4 1966171168
        %v4941 = vunpack.c.0.s8 %v4940
        %v4942 = vlaneseq
        %v4943 = vshrl.u32 %v4942, 7
        %v4944 = vsub.s32 %v4941, %v4943
        %v4945 = vrot.slane %v4923, %v4944
        %v4947 = vunpack.c.l.s4 1966171168
        %v4948 = vunpack.c.0.s8 %v4947
        %v4949 = vlaneseq
        %v4950 = vshrl.u32 %v4949, 7
        %v4951 = vsub.s32 %v4948, %v4950
        %v4952 = vrot.slane %v4924, %v4951
        %v4953 = vcombine.low %v4931, %v4938
        %v4954 = vcombine.low %v4945, %v4952
        %v4956 = vunpack.c.l.s4 1966171168
        %v4957 = vunpack.c.0.s8 %v4956
        %v4958 = vlaneseq
        %v4959 = vshrl.u32 %v4958, 7
        %v4960 = vsub.s32 %v4957, %v4959
        %v4961 = vrot.slane %v4953, %v4960
        %v4963 = vunpack.c.l.s4 1966171168
        %v4964 = vunpack.c.0.s8 %v4963
        %v4965 = vlaneseq
        %v4966 = vshrl.u32 %v4965, 7
        %v4967 = vsub.s32 %v4964, %v4966
        %v4968 = vrot.slane %v4954, %v4967
        %v4969 = vcombine.low %v4961, %v4968
        %v4970 = vcombine.low %v3490, %v3494
        %v4971 = vcombine.low %v3498, %v3502
        %v4972 = vcombine.low %v3506, %v3510
        %v4973 = vcombine.low %v3514, %v3518
        %v4975 = vunpack.c.l.s4 1966171168
        %v4976 = vunpack.c.0.s8 %v4975
        %v4977 = vlaneseq
        %v4978 = vshrl.u32 %v4977, 7
        %v4979 = vsub.s32 %v4976, %v4978
        %v4980 = vrot.slane %v4970, %v4979
        %v4982 = vunpack.c.l.s4 1966171168
        %v4983 = vunpack.c.0.s8 %v4982
        %v4984 = vlaneseq
        %v4985 = vshrl.u32 %v4984, 7
        %v4986 = vsub.s32 %v4983, %v4985
        %v4987 = vrot.slane %v4971, %v4986
        %v4989 = vunpack.c.l.s4 1966171168
        %v4990 = vunpack.c.0.s8 %v4989
        %v4991 = vlaneseq
        %v4992 = vshrl.u32 %v4991, 7
        %v4993 = vsub.s32 %v4990, %v4992
        %v4994 = vrot.slane %v4972, %v4993
        %v4996 = vunpack.c.l.s4 1966171168
        %v4997 = vunpack.c.0.s8 %v4996
        %v4998 = vlaneseq
        %v4999 = vshrl.u32 %v4998, 7
        %v5000 = vsub.s32 %v4997, %v4999
        %v5001 = vrot.slane %v4973, %v5000
        %v5002 = vcombine.low %v4980, %v4987
        %v5003 = vcombine.low %v4994, %v5001
        %v5005 = vunpack.c.l.s4 1966171168
        %v5006 = vunpack.c.0.s8 %v5005
        %v5007 = vlaneseq
        %v5008 = vshrl.u32 %v5007, 7
        %v5009 = vsub.s32 %v5006, %v5008
        %v5010 = vrot.slane %v5002, %v5009
        %v5012 = vunpack.c.l.s4 1966171168
        %v5013 = vunpack.c.0.s8 %v5012
        %v5014 = vlaneseq
        %v5015 = vshrl.u32 %v5014, 7
        %v5016 = vsub.s32 %v5013, %v5015
        %v5017 = vrot.slane %v5003, %v5016
        %v5018 = vcombine.low %v5010, %v5017
        %v5019 = vcombine.low %v3522, %v3526
        %v5020 = vcombine.low %v3530, %v3534
        %v5021 = vcombine.low %v3538, %v3542
        %v5022 = vcombine.low %v3546, %v3550
        %v5024 = vunpack.c.l.s4 1966171168
        %v5025 = vunpack.c.0.s8 %v5024
        %v5026 = vlaneseq
        %v5027 = vshrl.u32 %v5026, 7
        %v5028 = vsub.s32 %v5025, %v5027
        %v5029 = vrot.slane %v5019, %v5028
        %v5031 = vunpack.c.l.s4 1966171168
        %v5032 = vunpack.c.0.s8 %v5031
        %v5033 = vlaneseq
        %v5034 = vshrl.u32 %v5033, 7
        %v5035 = vsub.s32 %v5032, %v5034
        %v5036 = vrot.slane %v5020, %v5035
        %v5038 = vunpack.c.l.s4 1966171168
        %v5039 = vunpack.c.0.s8 %v5038
        %v5040 = vlaneseq
        %v5041 = vshrl.u32 %v5040, 7
        %v5042 = vsub.s32 %v5039, %v5041
        %v5043 = vrot.slane %v5021, %v5042
        %v5045 = vunpack.c.l.s4 1966171168
        %v5046 = vunpack.c.0.s8 %v5045
        %v5047 = vlaneseq
        %v5048 = vshrl.u32 %v5047, 7
        %v5049 = vsub.s32 %v5046, %v5048
        %v5050 = vrot.slane %v5022, %v5049
        %v5051 = vcombine.low %v5029, %v5036
        %v5052 = vcombine.low %v5043, %v5050
        %v5054 = vunpack.c.l.s4 1966171168
        %v5055 = vunpack.c.0.s8 %v5054
        %v5056 = vlaneseq
        %v5057 = vshrl.u32 %v5056, 7
        %v5058 = vsub.s32 %v5055, %v5057
        %v5059 = vrot.slane %v5051, %v5058
        %v5061 = vunpack.c.l.s4 1966171168
        %v5062 = vunpack.c.0.s8 %v5061
        %v5063 = vlaneseq
        %v5064 = vshrl.u32 %v5063, 7
        %v5065 = vsub.s32 %v5062, %v5064
        %v5066 = vrot.slane %v5052, %v5065
        %v5067 = vcombine.low %v5059, %v5066
        %v5068 = vcombine.low %v3554, %v3558
        %v5069 = vcombine.low %v3562, %v3566
        %v5070 = vcombine.low %v3570, %v3574
        %v5071 = vcombine.low %v3578, %v3582
        %v5073 = vunpack.c.l.s4 1966171168
        %v5074 = vunpack.c.0.s8 %v5073
        %v5075 = vlaneseq
        %v5076 = vshrl.u32 %v5075, 7
        %v5077 = vsub.s32 %v5074, %v5076
        %v5078 = vrot.slane %v5068, %v5077
        %v5080 = vunpack.c.l.s4 1966171168
        %v5081 = vunpack.c.0.s8 %v5080
        %v5082 = vlaneseq
        %v5083 = vshrl.u32 %v5082, 7
        %v5084 = vsub.s32 %v5081, %v5083
        %v5085 = vrot.slane %v5069, %v5084
        %v5087 = vunpack.c.l.s4 1966171168
        %v5088 = vunpack.c.0.s8 %v5087
        %v5089 = vlaneseq
        %v5090 = vshrl.u32 %v5089, 7
        %v5091 = vsub.s32 %v5088, %v5090
        %v5092 = vrot.slane %v5070, %v5091
        %v5094 = vunpack.c.l.s4 1966171168
        %v5095 = vunpack.c.0.s8 %v5094
        %v5096 = vlaneseq
        %v5097 = vshrl.u32 %v5096, 7
        %v5098 = vsub.s32 %v5095, %v5097
        %v5099 = vrot.slane %v5071, %v5098
        %v5100 = vcombine.low %v5078, %v5085
        %v5101 = vcombine.low %v5092, %v5099
        %v5103 = vunpack.c.l.s4 1966171168
        %v5104 = vunpack.c.0.s8 %v5103
        %v5105 = vlaneseq
        %v5106 = vshrl.u32 %v5105, 7
        %v5107 = vsub.s32 %v5104, %v5106
        %v5108 = vrot.slane %v5100, %v5107
        %v5110 = vunpack.c.l.s4 1966171168
        %v5111 = vunpack.c.0.s8 %v5110
        %v5112 = vlaneseq
        %v5113 = vshrl.u32 %v5112, 7
        %v5114 = vsub.s32 %v5111, %v5113
        %v5115 = vrot.slane %v5101, %v5114
        %v5116 = vcombine.low %v5108, %v5115
        %v5117 = vcombine.low %v3586, %v3590
        %v5118 = vcombine.low %v3594, %v3598
        %v5119 = vcombine.low %v3602, %v3606
        %v5120 = vcombine.low %v3610, %v3614
        %v5122 = vunpack.c.l.s4 1966171168
        %v5123 = vunpack.c.0.s8 %v5122
        %v5124 = vlaneseq
        %v5125 = vshrl.u32 %v5124, 7
        %v5126 = vsub.s32 %v5123, %v5125
        %v5127 = vrot.slane %v5117, %v5126
        %v5129 = vunpack.c.l.s4 1966171168
        %v5130 = vunpack.c.0.s8 %v5129
        %v5131 = vlaneseq
        %v5132 = vshrl.u32 %v5131, 7
        %v5133 = vsub.s32 %v5130, %v5132
        %v5134 = vrot.slane %v5118, %v5133
        %v5136 = vunpack.c.l.s4 1966171168
        %v5137 = vunpack.c.0.s8 %v5136
        %v5138 = vlaneseq
        %v5139 = vshrl.u32 %v5138, 7
        %v5140 = vsub.s32 %v5137, %v5139
        %v5141 = vrot.slane %v5119, %v5140
        %v5143 = vunpack.c.l.s4 1966171168
        %v5144 = vunpack.c.0.s8 %v5143
        %v5145 = vlaneseq
        %v5146 = vshrl.u32 %v5145, 7
        %v5147 = vsub.s32 %v5144, %v5146
        %v5148 = vrot.slane %v5120, %v5147
        %v5149 = vcombine.low %v5127, %v5134
        %v5150 = vcombine.low %v5141, %v5148
        %v5152 = vunpack.c.l.s4 1966171168
        %v5153 = vunpack.c.0.s8 %v5152
        %v5154 = vlaneseq
        %v5155 = vshrl.u32 %v5154, 7
        %v5156 = vsub.s32 %v5153, %v5155
        %v5157 = vrot.slane %v5149, %v5156
        %v5159 = vunpack.c.l.s4 1966171168
        %v5160 = vunpack.c.0.s8 %v5159
        %v5161 = vlaneseq
        %v5162 = vshrl.u32 %v5161, 7
        %v5163 = vsub.s32 %v5160, %v5162
        %v5164 = vrot.slane %v5150, %v5163
        %v5165 = vcombine.low %v5157, %v5164
        %v5166 = vcombine.low %v3618, %v3622
        %v5167 = vcombine.low %v3626, %v3630
        %v5168 = vcombine.low %v3634, %v3638
        %v5169 = vcombine.low %v3642, %v3646
        %v5171 = vunpack.c.l.s4 1966171168
        %v5172 = vunpack.c.0.s8 %v5171
        %v5173 = vlaneseq
        %v5174 = vshrl.u32 %v5173, 7
        %v5175 = vsub.s32 %v5172, %v5174
        %v5176 = vrot.slane %v5166, %v5175
        %v5178 = vunpack.c.l.s4 1966171168
        %v5179 = vunpack.c.0.s8 %v5178
        %v5180 = vlaneseq
        %v5181 = vshrl.u32 %v5180, 7
        %v5182 = vsub.s32 %v5179, %v5181
        %v5183 = vrot.slane %v5167, %v5182
        %v5185 = vunpack.c.l.s4 1966171168
        %v5186 = vunpack.c.0.s8 %v5185
        %v5187 = vlaneseq
        %v5188 = vshrl.u32 %v5187, 7
        %v5189 = vsub.s32 %v5186, %v5188
        %v5190 = vrot.slane %v5168, %v5189
        %v5192 = vunpack.c.l.s4 1966171168
        %v5193 = vunpack.c.0.s8 %v5192
        %v5194 = vlaneseq
        %v5195 = vshrl.u32 %v5194, 7
        %v5196 = vsub.s32 %v5193, %v5195
        %v5197 = vrot.slane %v5169, %v5196
        %v5198 = vcombine.low %v5176, %v5183
        %v5199 = vcombine.low %v5190, %v5197
        %v5201 = vunpack.c.l.s4 1966171168
        %v5202 = vunpack.c.0.s8 %v5201
        %v5203 = vlaneseq
        %v5204 = vshrl.u32 %v5203, 7
        %v5205 = vsub.s32 %v5202, %v5204
        %v5206 = vrot.slane %v5198, %v5205
        %v5208 = vunpack.c.l.s4 1966171168
        %v5209 = vunpack.c.0.s8 %v5208
        %v5210 = vlaneseq
        %v5211 = vshrl.u32 %v5210, 7
        %v5212 = vsub.s32 %v5209, %v5211
        %v5213 = vrot.slane %v5199, %v5212
        %v5214 = vcombine.low %v5206, %v5213
        %5215 = vset.pattern.permute.xlu0 0
        %5216 = vperm.xlu0 %5215, %v3695
        %v5217 = vpop.permute.xlu0 %5216
        %5218 = vset.pattern.permute.xlu0 0
        %5219 = vperm.xlu0 %5218, %v3744
        %v5220 = vpop.permute.xlu0 %5219
        %5221 = vset.pattern.permute.xlu0 0
        %5222 = vperm.xlu0 %5221, %v3793
        %v5223 = vpop.permute.xlu0 %5222
        %5224 = vset.pattern.permute.xlu0 0
        %5225 = vperm.xlu0 %5224, %v3842
        %v5226 = vpop.permute.xlu0 %5225
        %5227 = vset.pattern.permute.xlu0 0
        %5228 = vperm.xlu0 %5227, %v3891
        %v5229 = vpop.permute.xlu0 %5228
        %5230 = vset.pattern.permute.xlu0 0
        %5231 = vperm.xlu0 %5230, %v3940
        %v5232 = vpop.permute.xlu0 %5231
        %5233 = vset.pattern.permute.xlu0 0
        %5234 = vperm.xlu0 %5233, %v3989
        %v5235 = vpop.permute.xlu0 %5234
        %5236 = vset.pattern.permute.xlu0 0
        %5237 = vperm.xlu0 %5236, %v4038
        %v5238 = vpop.permute.xlu0 %5237
        %5239 = vset.pattern.permute.xlu0 0
        %5240 = vperm.xlu0 %5239, %v4087
        %v5241 = vpop.permute.xlu0 %5240
        %5242 = vset.pattern.permute.xlu0 0
        %5243 = vperm.xlu0 %5242, %v4136
        %v5244 = vpop.permute.xlu0 %5243
        %5245 = vset.pattern.permute.xlu0 0
        %5246 = vperm.xlu0 %5245, %v4185
        %v5247 = vpop.permute.xlu0 %5246
        %5248 = vset.pattern.permute.xlu0 0
        %5249 = vperm.xlu0 %5248, %v4234
        %v5250 = vpop.permute.xlu0 %5249
        %5251 = vset.pattern.permute.xlu0 0
        %5252 = vperm.xlu0 %5251, %v4283
        %v5253 = vpop.permute.xlu0 %5252
        %5254 = vset.pattern.permute.xlu0 0
        %5255 = vperm.xlu0 %5254, %v4332
        %v5256 = vpop.permute.xlu0 %5255
        %5257 = vset.pattern.permute.xlu0 0
        %5258 = vperm.xlu0 %5257, %v4381
        %v5259 = vpop.permute.xlu0 %5258
        %5260 = vset.pattern.permute.xlu0 0
        %5261 = vperm.xlu0 %5260, %v4430
        %v5262 = vpop.permute.xlu0 %5261
        %5263 = vset.pattern.permute.xlu0 0
        %5264 = vperm.xlu0 %5263, %v4479
        %v5265 = vpop.permute.xlu0 %5264
        %5266 = vset.pattern.permute.xlu0 0
        %5267 = vperm.xlu0 %5266, %v4528
        %v5268 = vpop.permute.xlu0 %5267
        %5269 = vset.pattern.permute.xlu0 0
        %5270 = vperm.xlu0 %5269, %v4577
        %v5271 = vpop.permute.xlu0 %5270
        %5272 = vset.pattern.permute.xlu0 0
        %5273 = vperm.xlu0 %5272, %v4626
        %v5274 = vpop.permute.xlu0 %5273
        %5275 = vset.pattern.permute.xlu0 0
        %5276 = vperm.xlu0 %5275, %v4675
        %v5277 = vpop.permute.xlu0 %5276
        %5278 = vset.pattern.permute.xlu0 0
        %5279 = vperm.xlu0 %5278, %v4724
        %v5280 = vpop.permute.xlu0 %5279
        %5281 = vset.pattern.permute.xlu0 0
        %5282 = vperm.xlu0 %5281, %v4773
        %v5283 = vpop.permute.xlu0 %5282
        %5284 = vset.pattern.permute.xlu0 0
        %5285 = vperm.xlu0 %5284, %v4822
        %v5286 = vpop.permute.xlu0 %5285
        %5287 = vset.pattern.permute.xlu0 0
        %5288 = vperm.xlu0 %5287, %v4871
        %v5289 = vpop.permute.xlu0 %5288
        %5290 = vset.pattern.permute.xlu0 0
        %5291 = vperm.xlu0 %5290, %v4920
        %v5292 = vpop.permute.xlu0 %5291
        %5293 = vset.pattern.permute.xlu0 0
        %5294 = vperm.xlu0 %5293, %v4969
        %v5295 = vpop.permute.xlu0 %5294
        %5296 = vset.pattern.permute.xlu0 0
        %5297 = vperm.xlu0 %5296, %v5018
        %v5298 = vpop.permute.xlu0 %5297
        %5299 = vset.pattern.permute.xlu0 0
        %5300 = vperm.xlu0 %5299, %v5067
        %v5301 = vpop.permute.xlu0 %5300
        %5302 = vset.pattern.permute.xlu0 0
        %5303 = vperm.xlu0 %5302, %v5116
        %v5304 = vpop.permute.xlu0 %5303
        %5305 = vset.pattern.permute.xlu0 0
        %5306 = vperm.xlu0 %5305, %v5165
        %v5307 = vpop.permute.xlu0 %5306
        %5308 = vset.pattern.permute.xlu0 0
        %5309 = vperm.xlu0 %5308, %v5214
        %v5310 = vpop.permute.xlu0 %5309
        %v5311 = vlaneseq
        %v5312 = vand.u32 %v5311, 127
        %v5313 = vlaneseq
        %v5314 = vshrl.u32 %v5313, 7
        %v5315 = vsub.s32 %v5312, %v5314
        %v5316 = vrot.slane %v5217, %v5315
        %v5317 = vadd.s32 %v5312, 4294967288
        %v5318 = vlaneseq
        %v5319 = vshrl.u32 %v5318, 7
        %v5320 = vsub.s32 %v5317, %v5319
        %v5321 = vrot.slane %v5220, %v5320
        %vm5322 = vcmask 130112
        %v5323 = vsel %vm5322, %v5321, %v5316
        %v5324 = vadd.s32 %v5312, 4294967280
        %v5325 = vlaneseq
        %v5326 = vshrl.u32 %v5325, 7
        %v5327 = vsub.s32 %v5324, %v5326
        %v5328 = vrot.slane %v5223, %v5327
        %vm5329 = vcmask 195712
        %v5330 = vsel %vm5329, %v5328, %v5323
        %v5331 = vadd.s32 %v5312, 4294967272
        %v5332 = vlaneseq
        %v5333 = vshrl.u32 %v5332, 7
        %v5334 = vsub.s32 %v5331, %v5333
        %v5335 = vrot.slane %v5226, %v5334
        %vm5336 = vcmask 261312
        %v5337 = vsel %vm5336, %v5335, %v5330
        %v5338 = vadd.s32 %v5312, 4294967264
        %v5339 = vlaneseq
        %v5340 = vshrl.u32 %v5339, 7
        %v5341 = vsub.s32 %v5338, %v5340
        %v5342 = vrot.slane %v5229, %v5341
        %vm5343 = vcmask 326912
        %v5344 = vsel %vm5343, %v5342, %v5337
        %v5345 = vadd.s32 %v5312, 4294967256
        %v5346 = vlaneseq
        %v5347 = vshrl.u32 %v5346, 7
        %v5348 = vsub.s32 %v5345, %v5347
        %v5349 = vrot.slane %v5232, %v5348
        %vm5350 = vcmask 392512
        %v5351 = vsel %vm5350, %v5349, %v5344
        %v5352 = vadd.s32 %v5312, 4294967248
        %v5353 = vlaneseq
        %v5354 = vshrl.u32 %v5353, 7
        %v5355 = vsub.s32 %v5352, %v5354
        %v5356 = vrot.slane %v5235, %v5355
        %vm5357 = vcmask 458112
        %v5358 = vsel %vm5357, %v5356, %v5351
        %v5359 = vadd.s32 %v5312, 4294967240
        %v5360 = vlaneseq
        %v5361 = vshrl.u32 %v5360, 7
        %v5362 = vsub.s32 %v5359, %v5361
        %v5363 = vrot.slane %v5238, %v5362
        %vm5364 = vcmask 523712
        %v5365 = vsel %vm5364, %v5363, %v5358
        %v5366 = vadd.s32 %v5312, 4294967232
        %v5367 = vlaneseq
        %v5368 = vshrl.u32 %v5367, 7
        %v5369 = vsub.s32 %v5366, %v5368
        %v5370 = vrot.slane %v5241, %v5369
        %vm5371 = vcmask 589312
        %v5372 = vsel %vm5371, %v5370, %v5365
        %v5373 = vadd.s32 %v5312, 4294967224
        %v5374 = vlaneseq
        %v5375 = vshrl.u32 %v5374, 7
        %v5376 = vsub.s32 %v5373, %v5375
        %v5377 = vrot.slane %v5244, %v5376
        %vm5378 = vcmask 654912
        %v5379 = vsel %vm5378, %v5377, %v5372
        %v5380 = vadd.s32 %v5312, 4294967216
        %v5381 = vlaneseq
        %v5382 = vshrl.u32 %v5381, 7
        %v5383 = vsub.s32 %v5380, %v5382
        %v5384 = vrot.slane %v5247, %v5383
        %vm5385 = vcmask 720512
        %v5386 = vsel %vm5385, %v5384, %v5379
        %v5387 = vadd.s32 %v5312, 4294967208
        %v5388 = vlaneseq
        %v5389 = vshrl.u32 %v5388, 7
        %v5390 = vsub.s32 %v5387, %v5389
        %v5391 = vrot.slane %v5250, %v5390
        %vm5392 = vcmask 786112
        %v5393 = vsel %vm5392, %v5391, %v5386
        %v5394 = vadd.s32 %v5312, 4294967200
        %v5395 = vlaneseq
        %v5396 = vshrl.u32 %v5395, 7
        %v5397 = vsub.s32 %v5394, %v5396
        %v5398 = vrot.slane %v5253, %v5397
        %vm5399 = vcmask 851712
        %v5400 = vsel %vm5399, %v5398, %v5393
        %v5401 = vadd.s32 %v5312, 4294967192
        %v5402 = vlaneseq
        %v5403 = vshrl.u32 %v5402, 7
        %v5404 = vsub.s32 %v5401, %v5403
        %v5405 = vrot.slane %v5256, %v5404
        %vm5406 = vcmask 917312
        %v5407 = vsel %vm5406, %v5405, %v5400
        %v5408 = vadd.s32 %v5312, 4294967184
        %v5409 = vlaneseq
        %v5410 = vshrl.u32 %v5409, 7
        %v5411 = vsub.s32 %v5408, %v5410
        %v5412 = vrot.slane %v5259, %v5411
        %vm5413 = vcmask 982912
        %v5414 = vsel %vm5413, %v5412, %v5407
        %v5415 = vadd.s32 %v5312, 4294967176
        %v5416 = vlaneseq
        %v5417 = vshrl.u32 %v5416, 7
        %v5418 = vsub.s32 %v5415, %v5417
        %v5419 = vrot.slane %v5262, %v5418
        %vm5420 = vcmask 1048512
        %v5421 = vsel %vm5420, %v5419, %v5414
        %v5422 = vlaneseq
        %v5423 = vshrl.u32 %v5422, 7
        %v5424 = vsub.s32 %v5312, %v5423
        %v5425 = vrot.slane %v5265, %v5424
        %v5426 = vlaneseq
        %v5427 = vshrl.u32 %v5426, 7
        %v5428 = vsub.s32 %v5317, %v5427
        %v5429 = vrot.slane %v5268, %v5428
        %v5430 = vsel %vm5322, %v5429, %v5425
        %v5431 = vlaneseq
        %v5432 = vshrl.u32 %v5431, 7
        %v5433 = vsub.s32 %v5324, %v5432
        %v5434 = vrot.slane %v5271, %v5433
        %v5435 = vsel %vm5329, %v5434, %v5430
        %v5436 = vlaneseq
        %v5437 = vshrl.u32 %v5436, 7
        %v5438 = vsub.s32 %v5331, %v5437
        %v5439 = vrot.slane %v5274, %v5438
        %v5440 = vsel %vm5336, %v5439, %v5435
        %v5441 = vlaneseq
        %v5442 = vshrl.u32 %v5441, 7
        %v5443 = vsub.s32 %v5338, %v5442
        %v5444 = vrot.slane %v5277, %v5443
        %v5445 = vsel %vm5343, %v5444, %v5440
        %v5446 = vlaneseq
        %v5447 = vshrl.u32 %v5446, 7
        %v5448 = vsub.s32 %v5345, %v5447
        %v5449 = vrot.slane %v5280, %v5448
        %v5450 = vsel %vm5350, %v5449, %v5445
        %v5451 = vlaneseq
        %v5452 = vshrl.u32 %v5451, 7
        %v5453 = vsub.s32 %v5352, %v5452
        %v5454 = vrot.slane %v5283, %v5453
        %v5455 = vsel %vm5357, %v5454, %v5450
        %v5456 = vlaneseq
        %v5457 = vshrl.u32 %v5456, 7
        %v5458 = vsub.s32 %v5359, %v5457
        %v5459 = vrot.slane %v5286, %v5458
        %v5460 = vsel %vm5364, %v5459, %v5455
        %v5461 = vlaneseq
        %v5462 = vshrl.u32 %v5461, 7
        %v5463 = vsub.s32 %v5366, %v5462
        %v5464 = vrot.slane %v5289, %v5463
        %v5465 = vsel %vm5371, %v5464, %v5460
        %v5466 = vlaneseq
        %v5467 = vshrl.u32 %v5466, 7
        %v5468 = vsub.s32 %v5373, %v5467
        %v5469 = vrot.slane %v5292, %v5468
        %v5470 = vsel %vm5378, %v5469, %v5465
        %v5471 = vlaneseq
        %v5472 = vshrl.u32 %v5471, 7
        %v5473 = vsub.s32 %v5380, %v5472
        %v5474 = vrot.slane %v5295, %v5473
        %v5475 = vsel %vm5385, %v5474, %v5470
        %v5476 = vlaneseq
        %v5477 = vshrl.u32 %v5476, 7
        %v5478 = vsub.s32 %v5387, %v5477
        %v5479 = vrot.slane %v5298, %v5478
        %v5480 = vsel %vm5392, %v5479, %v5475
        %v5481 = vlaneseq
        %v5482 = vshrl.u32 %v5481, 7
        %v5483 = vsub.s32 %v5394, %v5482
        %v5484 = vrot.slane %v5301, %v5483
        %v5485 = vsel %vm5399, %v5484, %v5480
        %v5486 = vlaneseq
        %v5487 = vshrl.u32 %v5486, 7
        %v5488 = vsub.s32 %v5401, %v5487
        %v5489 = vrot.slane %v5304, %v5488
        %v5490 = vsel %vm5406, %v5489, %v5485
        %v5491 = vlaneseq
        %v5492 = vshrl.u32 %v5491, 7
        %v5493 = vsub.s32 %v5408, %v5492
        %v5494 = vrot.slane %v5307, %v5493
        %v5495 = vsel %vm5413, %v5494, %v5490
        %v5496 = vlaneseq
        %v5497 = vshrl.u32 %v5496, 7
        %v5498 = vsub.s32 %v5415, %v5497
        %v5499 = vrot.slane %v5310, %v5498
        %v5500 = vsel %vm5420, %v5499, %v5495
        %v5501 = vcombine.low %v5421, %v5500
        %v5503 = vunpack.c.l.s4 1966171168
        %v5504 = vunpack.c.0.s8 %v5503
        %v5505 = vlaneseq
        %v5506 = vshrl.u32 %v5505, 7
        %v5507 = vsub.s32 %v5504, %v5506
        %v5508 = vrot.slane %v5501, %v5507
        %v5510 = vunpack.c.l.s4 1966171168
        %v5511 = vunpack.c.0.s8 %v5510
        %v5512 = vlaneseq
        %v5513 = vshrl.u32 %v5512, 7
        %v5514 = vsub.s32 %v5511, %v5513
        %v5515 = vrot.slane %v5508, %v5514
        %v5517 = vlaneseq
        %vm5518 = vcmp.ge.s32.totalorder %v5517, 0
        %vm5519 = vcmp.lt.s32.totalorder %v5517, 256
        %vm5520 = vmand %vm5518, %vm5519
        %5521 = vst.msk [vmem:[%s219] sm:$0x3] %vm5520, %v5515
        %s5522 = sand.u32 %s138, 1
        %s5523 = scalar_lea.sflag [#allocation4], %s5522
        %s5524 = sand.u32 %s138, 1
        %s5525 = smul.addr %s5524, 2
        %s5526 = scalar_lea.vmem [#allocation3], %s5525
        // Predicated region
        $region41: #{tpu_custom_call.1} parent=39 // pred_check
          %p5527 = pneg %p148
        $region42: #{tpu_custom_call.1} parent=39 // pred_check_branch
          %5529 = sbr.rel (%p5527) target = $region44
        $region43: #{tpu_custom_call.1} parent=39 // pred_region
          %s5530 = smul.u32 2, %s20
          %s5532 = ssub.s32 32, 32
          %5533 = vsyncadd %s5523, %s5532
          %s5534 = smul.addr %s5530, 16
          %s5535 = scalar_lea.hbm %s5, %s5534
          %s5537 = sshll.u32 %s5526, 4
          %s5538 = int_to_ptr.vmem [resolvable:$true] %s5537
          %5540 = dma.vmem_to_hbm [thread:$0]  %s5538, 32, %s5535, %s5523
        $region44: #{tpu_custom_call.1} parent=39 // pred_fallthru
          _
      $region40: #{tpu_custom_call.1} parent=5 // pred_fallthru
        _
      %p5541 = scmp.le.s32.totalorder 2, %s15
      // Predicated region
      $region45: #{tpu_custom_call.1} parent=5 // pred_check
        %p5542 = pneg %p5541
      $region46: #{tpu_custom_call.1} parent=5 // pred_check_branch
        %5544 = sbr.rel (%p5542) target = $region48
      $region47: #{tpu_custom_call.1} parent=5 // pred_region
        %s5545 = ssub.s32 %s15, 2
        // Predicated region
        $region49: #{tpu_custom_call.1} parent=47 // pred_check
          %p5546 = pneg %p154
        $region50: #{tpu_custom_call.1} parent=47 // pred_check_branch
          %5548 = sbr.rel (%p5546) target = $region52
        $region51: #{tpu_custom_call.1} parent=47 // pred_region
          %s5549 = sand.u32 %s139, 1
          %s5550 = scalar_lea.sflag [#allocation4], %s5549
          %s5551 = sand.u32 %s139, 1
          %s5552 = smul.addr %s5551, 2
          %s5553 = scalar_lea.vmem [#allocation3], %s5552
          %5554 = dma.done %s5550, 32
        $region52: #{tpu_custom_call.1} parent=47 // pred_fallthru
          _
      $region48: #{tpu_custom_call.1} parent=5 // pred_fallthru
        _
    $region6: #{tpu_custom_call.1} parent=1 // loop_footer
      %s19 = sadd.s32 1, %s15
    $region7: #{tpu_custom_call.1} parent=1 // loop_footer_branch
      %14 = sbr.rel target = $region3
    $region8: #{tpu_custom_call.1} parent=1 // loop_exit
      _
    %5555 = vsyncpa [#allocation4], 1
    %s5556 = scalar_lea.sflag [#allocation4], 1
    %5557 = vsyncpa %s5556, 1

</llo_original>
